<compile_context>
chip_gen: v5e
topology: v5e:2x2
jax: 0.10.0
libtpu: 0.0.40
codegen_flags: <defaults>
</compile_context>

<pallas_src>
import functools

import numpy as np
import jax
import jax.numpy as jnp
from jax import lax
from jax.experimental import pallas as pl
from jax.experimental.pallas import tpu as pltpu

# bf16 MXU operands + f32 accumulate is the recommended setting on v6e/v7x
# (and fine on v5e's MXU); set to jnp.float32 for bit-exactness.
MXU_DTYPE = jnp.bfloat16
NEG_SLOPE = 0.2


# ----------------------------------------------------------------------------
# Fused Pallas kernel: full discriminator, everything resident in VMEM
# ----------------------------------------------------------------------------
def _fused_patchgan_kernel(*refs, acts, negative_slope, mxu_dtype):
    """refs = (p1, w1, b1, [g, w_all, b] * (L-1), out).

    p1    : (M1, Cin*16)        im2col patches of the network input
    w1    : (Cin*16, C1)        layer-1 weight matrix,   b1 : (1, C1)
    g     : (16, M_out, M_in)   0/1 row-gather matrix per 4x4 kernel tap (f32)
    w_all : (C_in, 16*C_out)    all 16 tap weight slices, concatenated on cols
    b     : (1, C_out)
    out   : (M_last, C_last)
    """
    out_ref = refs[-1]

    def lrelu(a):
        return jnp.where(a >= 0.0, a, negative_slope * a)

    def mxu(a, b):  # bf16 MXU operands, f32 accumulation
        return jnp.dot(a.astype(mxu_dtype), b.astype(mxu_dtype),
                       preferred_element_type=jnp.float32)

    # ---- layer 1: plain (M, K) @ (K, C) matmul on precomputed patches -------
    p1_ref, w1_ref, b1_ref = refs[0], refs[1], refs[2]
    y = mxu(p1_ref[...], w1_ref[...]) + b1_ref[...]
    if acts[0]:
        y = lrelu(y)

    # ---- layers 2..L --------------------------------------------------------
    # conv = ONE weight matmul over all 16 taps, then 16 exact f32 gathers:
    #   z = y @ [W_0 | ... | W_15]                    (M_in, 16*C_out)
    #   out = sum_t G_t @ z[:, t*C_out:(t+1)*C_out]   (M_out, C_out)
    idx = 3
    for li in range(1, len(acts)):
        g_ref, w_ref, b_ref = refs[idx], refs[idx + 1], refs[idx + 2]
        idx += 3
        n_taps = g_ref.shape[0]
        co = w_ref.shape[1] // n_taps

        z = mxu(y, w_ref[...])                       # one bf16 MXU matmul
        acc = None
        for t in range(n_taps):                      # exact 0/1 gathers, f32
            part = jnp.dot(g_ref[t], z[:, t * co:(t + 1) * co],
                           preferred_element_type=jnp.float32)
            acc = part if acc is None else acc + part

        y = acc + b_ref[...]                         # f32 VPU epilogue
        if acts[li]:
            y = lrelu(y)

    out_ref[...] = y.astype(out_ref.dtype)


# ----------------------------------------------------------------------------
# Host-side (trace-time) helpers
# ----------------------------------------------------------------------------
def _im2col(x, kh, kw, stride, pad):
    """x: (N, C, H, W) -> patches (N*Ho*Wo, C*kh*kw), K ordered as (c, i, j)."""
    x = jnp.pad(x, ((0, 0), (0, 0), (pad, pad), (pad, pad)))
    N, C, H, W = x.shape
    Ho = (H - kh) // stride + 1
    Wo = (W - kw) // stride + 1
    cols = []
    for i in range(kh):
        for j in range(kw):
            cols.append(x[:, :, i:i + stride * Ho:stride,
                          j:j + stride * Wo:stride])       # (N, C, Ho, Wo)
    patches = jnp.stack(cols, axis=0)                       # (kh*kw, N, C, Ho, Wo)
    patches = jnp.transpose(patches, (1, 3, 4, 2, 0))       # (N, Ho, Wo, C, kh*kw)
    return patches.reshape(N * Ho * Wo, C * kh * kw), Ho, Wo


def _gather_mats(n, h_in, w_in, h_out, w_out, stride, pad, kh, kw):
    """0/1 matrices G[t]: G[t][(n,ho,wo),(n,hi,wi)] = 1 iff kernel tap t=(i,j)
    of output pixel (ho,wo) reads input pixel (hi,wi); zero rows encode padding."""
    g = np.zeros((kh * kw, n * h_out * w_out, n * h_in * w_in), np.float32)
    for i in range(kh):
        for j in range(kw):
            t = i * kw + j
            for nn in range(n):
                for ho in range(h_out):
                    hi = stride * ho + i - pad
                    if not (0 <= hi < h_in):
                        continue
                    for wo in range(w_out):
                        wi = stride * wo + j - pad
                        if 0 <= wi < w_in:
                            g[t, (nn * h_out + ho) * w_out + wo,
                              (nn * h_in + hi) * w_in + wi] = 1.0
    return g


# ----------------------------------------------------------------------------
# PatchGAN discriminator + WrappedModel forward
# ----------------------------------------------------------------------------
def init_patchgan_params(key, in_channels=2, ndf=8):
    """Deterministic DCGAN-style init (normal, std=0.02); PyTorch (Cout,Cin,kh,kw)."""
    specs = [
        # (Cout, Cin, kh, kw, stride, pad, act)
        (ndf,     2 * in_channels, 4, 4, 2, 1, True),   # 16 -> 8
        (ndf * 2, ndf,             4, 4, 2, 1, True),   # 8  -> 4
        (ndf * 4, ndf * 2,         4, 4, 1, 1, True),   # 4  -> 3
        (1,       ndf * 4,         4, 4, 1, 1, False),  # 3  -> 2
    ]
    params = []
    for idx, (co, ci, kh, kw, st, pd, act) in enumerate(specs):
        w_key, _ = jax.random.split(jax.random.fold_in(key, idx))
        w = 0.02 * jax.random.normal(w_key, (co, ci, kh, kw), jnp.float32)
        b = jnp.zeros((co,), jnp.float32)
        params.append(dict(w=w, b=b, stride=st, pad=pd, act=act))
    return params


def patchgan_forward(x, params):
    """Fused PatchGAN discriminator forward. x: (N, C, H, W) float32, NCHW."""
    N = x.shape[0]

    # Layer-1 im2col at the model boundary (cheap XLA gather on the raw input).
    l1 = params[0]
    co1, ci1, kh, kw = l1["w"].shape
    p1, h_in, w_in = _im2col(x, kh, kw, l1["stride"], l1["pad"])
    operands = [p1,
                jnp.transpose(l1["w"].reshape(co1, ci1 * kh * kw)),   # (K, C1)
                l1["b"].reshape(1, co1)]

    for layer in params[1:]:
        co, ci, kh, kw = layer["w"].shape
        s, p = layer["stride"], layer["pad"]
        h_out = (h_in + 2 * p - kh) // s + 1
        w_out = (w_in + 2 * p - kw) // s + 1
        g = _gather_mats(N, h_in, w_in, h_out, w_out, s, p, kh, kw)
        # w_all[:, t*co:(t+1)*co] = W[:, :, i, j].T  with t = i*kw + j
        wt = jnp.transpose(layer["w"], (2, 3, 1, 0)).reshape(kh * kw, ci, co)
        w_all = jnp.transpose(wt, (1, 0, 2)).reshape(ci, kh * kw * co)
        operands += [
            jnp.asarray(g, jnp.float32),       # exact 0/1 gathers, f32
            w_all,                             # (C_in, 16*C_out)
            layer["b"].reshape(1, co),
        ]
        h_in, w_in = h_out, w_out

    acts = tuple(layer["act"] for layer in params)
    co_last = params[-1]["w"].shape[0]
    m_last = N * h_in * w_in

    kernel = functools.partial(_fused_patchgan_kernel, acts=acts,
                               negative_slope=NEG_SLOPE, mxu_dtype=MXU_DTYPE)
    vmem = pl.BlockSpec(memory_space=pltpu.MemorySpace.VMEM)
    out = pl.pallas_call(
        kernel,
        out_shape=jax.ShapeDtypeStruct((m_last, co_last), jnp.float32),
        in_specs=[vmem] * len(operands),
        out_specs=vmem,
        # TODO(synk): if N or H*W ever grows, add a "parallel" grid axis over
        # M-tiles so both v7x TensorCores get work, and re-size tiles against
        # v7x's 64 MiB VMEM (set vmem_limit_bytes explicitly if raised).
    )(*operands)

    # Rows are (n, ho, wo); cols are channels -> back to NCHW.
    return jnp.transpose(out.reshape(N, h_in, w_in, co_last), (0, 3, 1, 2))


def wrapped_model_forward(x, params):
    """Matches WrappedModel.forward.  The wrapper splits x channel-wise into
    (input, target) and the pix2pix discriminator immediately re-concatenates
    them along channels — an identity — so x is fed straight into the first
    conv (no slice + concatenate HBM copies)."""
    return patchgan_forward(x, params)


# ----------------------------------------------------------------------------
# Plain-XLA reference (for in-script validation only)
# ----------------------------------------------------------------------------
def reference_forward(x, params):
    y = x
    for layer in params:
        y = lax.conv_general_dilated(
            y, layer["w"], (layer["stride"],) * 2, [(layer["pad"],) * 2] * 2,
            dimension_numbers=("NCHW", "OIHW", "NCHW"))
        y = y + layer["b"].reshape(1, -1, 1, 1)
        if layer["act"]:
            y = jnp.where(y >= 0, y, NEG_SLOPE * y)
    return y


# ----------------------------------------------------------------------------
if __name__ == "__main__":
    key = jax.random.PRNGKey(0)
    x_key, p_key = jax.random.split(key)

    # NCHW input: batch=2, channels=4 (2 "input" + 2 "target"), 16x16 spatial
    x = jax.random.normal(x_key, (2, 4, 16, 16), jnp.float32)
    params = init_patchgan_params(p_key, in_channels=2, ndf=8)

    fwd = jax.jit(functools.partial(wrapped_model_forward, params=params))
    out = fwd(x)
    jax.block_until_ready(out)

    assert out.shape == (2, 1, 2, 2), out.shape
    assert out.dtype == jnp.float32

    # Cross-check the fused Pallas kernel against a plain-XLA conv reference
    # (tolerance covers the bf16 MXU weight matmuls with f32 accumulation).
    ref = reference_forward(x, params)
    np.testing.assert_allclose(np.asarray(out), np.asarray(ref),
                               rtol=0.1, atol=2e-4)
    print("KERNEL_OK")
</pallas_src>

<mosaic_0001>
module attributes {stable_mosaic.version = 11 : i64} {
  func.func @_fused_patchgan_kernel(%arg0: memref<128x64xf32, #tpu.memory_space<vmem>>, %arg1: memref<64x8xf32, #tpu.memory_space<vmem>>, %arg2: memref<1x8xf32, #tpu.memory_space<vmem>>, %arg3: memref<16x32x128xf32, #tpu.memory_space<vmem>>, %arg4: memref<8x256xf32, #tpu.memory_space<vmem>>, %arg5: memref<1x16xf32, #tpu.memory_space<vmem>>, %arg6: memref<16x18x32xf32, #tpu.memory_space<vmem>>, %arg7: memref<16x512xf32, #tpu.memory_space<vmem>>, %arg8: memref<1x32xf32, #tpu.memory_space<vmem>>, %arg9: memref<16x8x18xf32, #tpu.memory_space<vmem>>, %arg10: memref<32x16xf32, #tpu.memory_space<vmem>>, %arg11: memref<1x1xf32, #tpu.memory_space<vmem>>, %arg12: memref<8x1xf32, #tpu.memory_space<vmem>>) attributes {dimension_semantics = [], scalar_prefetch = 0 : i64, scratch_operands = 0 : i64, tpu.core_type = #tpu.core_type<tc>} {
    %c0 = arith.constant 0 : index
    %c0_0 = arith.constant 0 : index
    %0 = vector.load %arg0[%c0, %c0_0] : memref<128x64xf32, #tpu.memory_space<vmem>>, vector<128x64xf32>
    %c0_1 = arith.constant 0 : index
    %c0_2 = arith.constant 0 : index
    %1 = vector.load %arg1[%c0_1, %c0_2] : memref<64x8xf32, #tpu.memory_space<vmem>>, vector<64x8xf32>
    %2 = arith.truncf %0 : vector<128x64xf32> to vector<128x64xbf16>
    %3 = arith.truncf %1 : vector<64x8xf32> to vector<64x8xbf16>
    %cst = arith.constant dense<0.000000e+00> : vector<128x8xf32>
    %4 = tpu.matmul %2, %3, %cst {dimension_numbers = #tpu.dot_dimension_numbers<[1], [0], [0], [1], [0, 0, 1, 1], [], []>} : vector<128x64xbf16>, vector<64x8xbf16>, vector<128x8xf32> -> vector<128x8xf32>
    %c0_3 = arith.constant 0 : index
    %c0_4 = arith.constant 0 : index
    %5 = vector.load %arg2[%c0_3, %c0_4] : memref<1x8xf32, #tpu.memory_space<vmem>>, vector<1x8xf32>
    %6 = vector.broadcast %5 : vector<1x8xf32> to vector<128x8xf32>
    %7 = arith.addf %4, %6 : vector<128x8xf32>
    %cst_5 = arith.constant 0.000000e+00 : f32
    %8 = vector.broadcast %cst_5 : f32 to vector<128x8xf32>
    %9 = arith.cmpf oge, %7, %8 : vector<128x8xf32>
    %cst_6 = arith.constant 2.000000e-01 : f32
    %10 = vector.broadcast %cst_6 : f32 to vector<128x8xf32>
    %11 = arith.mulf %10, %7 : vector<128x8xf32>
    %12 = arith.select %9, %7, %11 : vector<128x8xi1>, vector<128x8xf32>
    %c0_7 = arith.constant 0 : index
    %c0_8 = arith.constant 0 : index
    %13 = vector.load %arg4[%c0_7, %c0_8] : memref<8x256xf32, #tpu.memory_space<vmem>>, vector<8x256xf32>
    %14 = arith.truncf %12 : vector<128x8xf32> to vector<128x8xbf16>
    %15 = arith.truncf %13 : vector<8x256xf32> to vector<8x256xbf16>
    %cst_9 = arith.constant dense<0.000000e+00> : vector<128x256xf32>
    %16 = tpu.matmul %14, %15, %cst_9 {dimension_numbers = #tpu.dot_dimension_numbers<[1], [0], [0], [1], [0, 0, 1, 1], [], []>} : vector<128x8xbf16>, vector<8x256xbf16>, vector<128x256xf32> -> vector<128x256xf32>
    %c0_10 = arith.constant 0 : index
    %c0_11 = arith.constant 0 : index
    %c0_12 = arith.constant 0 : index
    %17 = vector.load %arg3[%c0_10, %c0_11, %c0_12] : memref<16x32x128xf32, #tpu.memory_space<vmem>>, vector<1x32x128xf32>
    %18 = vector.shape_cast %17 : vector<1x32x128xf32> to vector<32x128xf32>
    %19 = vector.extract_strided_slice %16 {offsets = [0, 0], sizes = [128, 16], strides = [1, 1]} : vector<128x256xf32> to vector<128x16xf32>
    %cst_13 = arith.constant dense<0.000000e+00> : vector<32x16xf32>
    %20 = tpu.matmul %18, %19, %cst_13 {dimension_numbers = #tpu.dot_dimension_numbers<[1], [0], [0], [1], [0, 0, 1, 1], [], []>} : vector<32x128xf32>, vector<128x16xf32>, vector<32x16xf32> -> vector<32x16xf32>
    %c1 = arith.constant 1 : index
    %c0_14 = arith.constant 0 : index
    %c0_15 = arith.constant 0 : index
    %21 = vector.load %arg3[%c1, %c0_14, %c0_15] : memref<16x32x128xf32, #tpu.memory_space<vmem>>, vector<1x32x128xf32>
    %22 = vector.shape_cast %21 : vector<1x32x128xf32> to vector<32x128xf32>
    %23 = vector.extract_strided_slice %16 {offsets = [0, 16], sizes = [128, 16], strides = [1, 1]} : vector<128x256xf32> to vector<128x16xf32>
    %cst_16 = arith.constant dense<0.000000e+00> : vector<32x16xf32>
    %24 = tpu.matmul %22, %23, %cst_16 {dimension_numbers = #tpu.dot_dimension_numbers<[1], [0], [0], [1], [0, 0, 1, 1], [], []>} : vector<32x128xf32>, vector<128x16xf32>, vector<32x16xf32> -> vector<32x16xf32>
    %25 = arith.addf %20, %24 : vector<32x16xf32>
    %c2 = arith.constant 2 : index
    %c0_17 = arith.constant 0 : index
    %c0_18 = arith.constant 0 : index
    %26 = vector.load %arg3[%c2, %c0_17, %c0_18] : memref<16x32x128xf32, #tpu.memory_space<vmem>>, vector<1x32x128xf32>
    %27 = vector.shape_cast %26 : vector<1x32x128xf32> to vector<32x128xf32>
    %28 = vector.extract_strided_slice %16 {offsets = [0, 32], sizes = [128, 16], strides = [1, 1]} : vector<128x256xf32> to vector<128x16xf32>
    %cst_19 = arith.constant dense<0.000000e+00> : vector<32x16xf32>
    %29 = tpu.matmul %27, %28, %cst_19 {dimension_numbers = #tpu.dot_dimension_numbers<[1], [0], [0], [1], [0, 0, 1, 1], [], []>} : vector<32x128xf32>, vector<128x16xf32>, vector<32x16xf32> -> vector<32x16xf32>
    %30 = arith.addf %25, %29 : vector<32x16xf32>
    %c3 = arith.constant 3 : index
    %c0_20 = arith.constant 0 : index
    %c0_21 = arith.constant 0 : index
    %31 = vector.load %arg3[%c3, %c0_20, %c0_21] : memref<16x32x128xf32, #tpu.memory_space<vmem>>, vector<1x32x128xf32>
    %32 = vector.shape_cast %31 : vector<1x32x128xf32> to vector<32x128xf32>
    %33 = vector.extract_strided_slice %16 {offsets = [0, 48], sizes = [128, 16], strides = [1, 1]} : vector<128x256xf32> to vector<128x16xf32>
    %cst_22 = arith.constant dense<0.000000e+00> : vector<32x16xf32>
    %34 = tpu.matmul %32, %33, %cst_22 {dimension_numbers = #tpu.dot_dimension_numbers<[1], [0], [0], [1], [0, 0, 1, 1], [], []>} : vector<32x128xf32>, vector<128x16xf32>, vector<32x16xf32> -> vector<32x16xf32>
    %35 = arith.addf %30, %34 : vector<32x16xf32>
    %c4 = arith.constant 4 : index
    %c0_23 = arith.constant 0 : index
    %c0_24 = arith.constant 0 : index
    %36 = vector.load %arg3[%c4, %c0_23, %c0_24] : memref<16x32x128xf32, #tpu.memory_space<vmem>>, vector<1x32x128xf32>
    %37 = vector.shape_cast %36 : vector<1x32x128xf32> to vector<32x128xf32>
    %38 = vector.extract_strided_slice %16 {offsets = [0, 64], sizes = [128, 16], strides = [1, 1]} : vector<128x256xf32> to vector<128x16xf32>
    %cst_25 = arith.constant dense<0.000000e+00> : vector<32x16xf32>
    %39 = tpu.matmul %37, %38, %cst_25 {dimension_numbers = #tpu.dot_dimension_numbers<[1], [0], [0], [1], [0, 0, 1, 1], [], []>} : vector<32x128xf32>, vector<128x16xf32>, vector<32x16xf32> -> vector<32x16xf32>
    %40 = arith.addf %35, %39 : vector<32x16xf32>
    %c5 = arith.constant 5 : index
    %c0_26 = arith.constant 0 : index
    %c0_27 = arith.constant 0 : index
    %41 = vector.load %arg3[%c5, %c0_26, %c0_27] : memref<16x32x128xf32, #tpu.memory_space<vmem>>, vector<1x32x128xf32>
    %42 = vector.shape_cast %41 : vector<1x32x128xf32> to vector<32x128xf32>
    %43 = vector.extract_strided_slice %16 {offsets = [0, 80], sizes = [128, 16], strides = [1, 1]} : vector<128x256xf32> to vector<128x16xf32>
    %cst_28 = arith.constant dense<0.000000e+00> : vector<32x16xf32>
    %44 = tpu.matmul %42, %43, %cst_28 {dimension_numbers = #tpu.dot_dimension_numbers<[1], [0], [0], [1], [0, 0, 1, 1], [], []>} : vector<32x128xf32>, vector<128x16xf32>, vector<32x16xf32> -> vector<32x16xf32>
    %45 = arith.addf %40, %44 : vector<32x16xf32>
    %c6 = arith.constant 6 : index
    %c0_29 = arith.constant 0 : index
    %c0_30 = arith.constant 0 : index
    %46 = vector.load %arg3[%c6, %c0_29, %c0_30] : memref<16x32x128xf32, #tpu.memory_space<vmem>>, vector<1x32x128xf32>
    %47 = vector.shape_cast %46 : vector<1x32x128xf32> to vector<32x128xf32>
    %48 = vector.extract_strided_slice %16 {offsets = [0, 96], sizes = [128, 16], strides = [1, 1]} : vector<128x256xf32> to vector<128x16xf32>
    %cst_31 = arith.constant dense<0.000000e+00> : vector<32x16xf32>
    %49 = tpu.matmul %47, %48, %cst_31 {dimension_numbers = #tpu.dot_dimension_numbers<[1], [0], [0], [1], [0, 0, 1, 1], [], []>} : vector<32x128xf32>, vector<128x16xf32>, vector<32x16xf32> -> vector<32x16xf32>
    %50 = arith.addf %45, %49 : vector<32x16xf32>
    %c7 = arith.constant 7 : index
    %c0_32 = arith.constant 0 : index
    %c0_33 = arith.constant 0 : index
    %51 = vector.load %arg3[%c7, %c0_32, %c0_33] : memref<16x32x128xf32, #tpu.memory_space<vmem>>, vector<1x32x128xf32>
    %52 = vector.shape_cast %51 : vector<1x32x128xf32> to vector<32x128xf32>
    %53 = vector.extract_strided_slice %16 {offsets = [0, 112], sizes = [128, 16], strides = [1, 1]} : vector<128x256xf32> to vector<128x16xf32>
    %cst_34 = arith.constant dense<0.000000e+00> : vector<32x16xf32>
    %54 = tpu.matmul %52, %53, %cst_34 {dimension_numbers = #tpu.dot_dimension_numbers<[1], [0], [0], [1], [0, 0, 1, 1], [], []>} : vector<32x128xf32>, vector<128x16xf32>, vector<32x16xf32> -> vector<32x16xf32>
    %55 = arith.addf %50, %54 : vector<32x16xf32>
    %c8 = arith.constant 8 : index
    %c0_35 = arith.constant 0 : index
    %c0_36 = arith.constant 0 : index
    %56 = vector.load %arg3[%c8, %c0_35, %c0_36] : memref<16x32x128xf32, #tpu.memory_space<vmem>>, vector<1x32x128xf32>
    %57 = vector.shape_cast %56 : vector<1x32x128xf32> to vector<32x128xf32>
    %58 = vector.extract_strided_slice %16 {offsets = [0, 128], sizes = [128, 16], strides = [1, 1]} : vector<128x256xf32> to vector<128x16xf32>
    %cst_37 = arith.constant dense<0.000000e+00> : vector<32x16xf32>
    %59 = tpu.matmul %57, %58, %cst_37 {dimension_numbers = #tpu.dot_dimension_numbers<[1], [0], [0], [1], [0, 0, 1, 1], [], []>} : vector<32x128xf32>, vector<128x16xf32>, vector<32x16xf32> -> vector<32x16xf32>
    %60 = arith.addf %55, %59 : vector<32x16xf32>
    %c9 = arith.constant 9 : index
    %c0_38 = arith.constant 0 : index
    %c0_39 = arith.constant 0 : index
    %61 = vector.load %arg3[%c9, %c0_38, %c0_39] : memref<16x32x128xf32, #tpu.memory_space<vmem>>, vector<1x32x128xf32>
    %62 = vector.shape_cast %61 : vector<1x32x128xf32> to vector<32x128xf32>
    %63 = vector.extract_strided_slice %16 {offsets = [0, 144], sizes = [128, 16], strides = [1, 1]} : vector<128x256xf32> to vector<128x16xf32>
    %cst_40 = arith.constant dense<0.000000e+00> : vector<32x16xf32>
    %64 = tpu.matmul %62, %63, %cst_40 {dimension_numbers = #tpu.dot_dimension_numbers<[1], [0], [0], [1], [0, 0, 1, 1], [], []>} : vector<32x128xf32>, vector<128x16xf32>, vector<32x16xf32> -> vector<32x16xf32>
    %65 = arith.addf %60, %64 : vector<32x16xf32>
    %c10 = arith.constant 10 : index
    %c0_41 = arith.constant 0 : index
    %c0_42 = arith.constant 0 : index
    %66 = vector.load %arg3[%c10, %c0_41, %c0_42] : memref<16x32x128xf32, #tpu.memory_space<vmem>>, vector<1x32x128xf32>
    %67 = vector.shape_cast %66 : vector<1x32x128xf32> to vector<32x128xf32>
    %68 = vector.extract_strided_slice %16 {offsets = [0, 160], sizes = [128, 16], strides = [1, 1]} : vector<128x256xf32> to vector<128x16xf32>
    %cst_43 = arith.constant dense<0.000000e+00> : vector<32x16xf32>
    %69 = tpu.matmul %67, %68, %cst_43 {dimension_numbers = #tpu.dot_dimension_numbers<[1], [0], [0], [1], [0, 0, 1, 1], [], []>} : vector<32x128xf32>, vector<128x16xf32>, vector<32x16xf32> -> vector<32x16xf32>
    %70 = arith.addf %65, %69 : vector<32x16xf32>
    %c11 = arith.constant 11 : index
    %c0_44 = arith.constant 0 : index
    %c0_45 = arith.constant 0 : index
    %71 = vector.load %arg3[%c11, %c0_44, %c0_45] : memref<16x32x128xf32, #tpu.memory_space<vmem>>, vector<1x32x128xf32>
    %72 = vector.shape_cast %71 : vector<1x32x128xf32> to vector<32x128xf32>
    %73 = vector.extract_strided_slice %16 {offsets = [0, 176], sizes = [128, 16], strides = [1, 1]} : vector<128x256xf32> to vector<128x16xf32>
    %cst_46 = arith.constant dense<0.000000e+00> : vector<32x16xf32>
    %74 = tpu.matmul %72, %73, %cst_46 {dimension_numbers = #tpu.dot_dimension_numbers<[1], [0], [0], [1], [0, 0, 1, 1], [], []>} : vector<32x128xf32>, vector<128x16xf32>, vector<32x16xf32> -> vector<32x16xf32>
    %75 = arith.addf %70, %74 : vector<32x16xf32>
    %c12 = arith.constant 12 : index
    %c0_47 = arith.constant 0 : index
    %c0_48 = arith.constant 0 : index
    %76 = vector.load %arg3[%c12, %c0_47, %c0_48] : memref<16x32x128xf32, #tpu.memory_space<vmem>>, vector<1x32x128xf32>
    %77 = vector.shape_cast %76 : vector<1x32x128xf32> to vector<32x128xf32>
    %78 = vector.extract_strided_slice %16 {offsets = [0, 192], sizes = [128, 16], strides = [1, 1]} : vector<128x256xf32> to vector<128x16xf32>
    %cst_49 = arith.constant dense<0.000000e+00> : vector<32x16xf32>
    %79 = tpu.matmul %77, %78, %cst_49 {dimension_numbers = #tpu.dot_dimension_numbers<[1], [0], [0], [1], [0, 0, 1, 1], [], []>} : vector<32x128xf32>, vector<128x16xf32>, vector<32x16xf32> -> vector<32x16xf32>
    %80 = arith.addf %75, %79 : vector<32x16xf32>
    %c13 = arith.constant 13 : index
    %c0_50 = arith.constant 0 : index
    %c0_51 = arith.constant 0 : index
    %81 = vector.load %arg3[%c13, %c0_50, %c0_51] : memref<16x32x128xf32, #tpu.memory_space<vmem>>, vector<1x32x128xf32>
    %82 = vector.shape_cast %81 : vector<1x32x128xf32> to vector<32x128xf32>
    %83 = vector.extract_strided_slice %16 {offsets = [0, 208], sizes = [128, 16], strides = [1, 1]} : vector<128x256xf32> to vector<128x16xf32>
    %cst_52 = arith.constant dense<0.000000e+00> : vector<32x16xf32>
    %84 = tpu.matmul %82, %83, %cst_52 {dimension_numbers = #tpu.dot_dimension_numbers<[1], [0], [0], [1], [0, 0, 1, 1], [], []>} : vector<32x128xf32>, vector<128x16xf32>, vector<32x16xf32> -> vector<32x16xf32>
    %85 = arith.addf %80, %84 : vector<32x16xf32>
    %c14 = arith.constant 14 : index
    %c0_53 = arith.constant 0 : index
    %c0_54 = arith.constant 0 : index
    %86 = vector.load %arg3[%c14, %c0_53, %c0_54] : memref<16x32x128xf32, #tpu.memory_space<vmem>>, vector<1x32x128xf32>
    %87 = vector.shape_cast %86 : vector<1x32x128xf32> to vector<32x128xf32>
    %88 = vector.extract_strided_slice %16 {offsets = [0, 224], sizes = [128, 16], strides = [1, 1]} : vector<128x256xf32> to vector<128x16xf32>
    %cst_55 = arith.constant dense<0.000000e+00> : vector<32x16xf32>
    %89 = tpu.matmul %87, %88, %cst_55 {dimension_numbers = #tpu.dot_dimension_numbers<[1], [0], [0], [1], [0, 0, 1, 1], [], []>} : vector<32x128xf32>, vector<128x16xf32>, vector<32x16xf32> -> vector<32x16xf32>
    %90 = arith.addf %85, %89 : vector<32x16xf32>
    %c15 = arith.constant 15 : index
    %c0_56 = arith.constant 0 : index
    %c0_57 = arith.constant 0 : index
    %91 = vector.load %arg3[%c15, %c0_56, %c0_57] : memref<16x32x128xf32, #tpu.memory_space<vmem>>, vector<1x32x128xf32>
    %92 = vector.shape_cast %91 : vector<1x32x128xf32> to vector<32x128xf32>
    %93 = vector.extract_strided_slice %16 {offsets = [0, 240], sizes = [128, 16], strides = [1, 1]} : vector<128x256xf32> to vector<128x16xf32>
    %cst_58 = arith.constant dense<0.000000e+00> : vector<32x16xf32>
    %94 = tpu.matmul %92, %93, %cst_58 {dimension_numbers = #tpu.dot_dimension_numbers<[1], [0], [0], [1], [0, 0, 1, 1], [], []>} : vector<32x128xf32>, vector<128x16xf32>, vector<32x16xf32> -> vector<32x16xf32>
    %95 = arith.addf %90, %94 : vector<32x16xf32>
    %c0_59 = arith.constant 0 : index
    %c0_60 = arith.constant 0 : index
    %96 = vector.load %arg5[%c0_59, %c0_60] : memref<1x16xf32, #tpu.memory_space<vmem>>, vector<1x16xf32>
    %97 = vector.broadcast %96 : vector<1x16xf32> to vector<32x16xf32>
    %98 = arith.addf %95, %97 : vector<32x16xf32>
    %cst_61 = arith.constant 0.000000e+00 : f32
    %99 = vector.broadcast %cst_61 : f32 to vector<32x16xf32>
    %100 = arith.cmpf oge, %98, %99 : vector<32x16xf32>
    %cst_62 = arith.constant 2.000000e-01 : f32
    %101 = vector.broadcast %cst_62 : f32 to vector<32x16xf32>
    %102 = arith.mulf %101, %98 : vector<32x16xf32>
    %103 = arith.select %100, %98, %102 : vector<32x16xi1>, vector<32x16xf32>
    %c0_63 = arith.constant 0 : index
    %c0_64 = arith.constant 0 : index
    %104 = vector.load %arg7[%c0_63, %c0_64] : memref<16x512xf32, #tpu.memory_space<vmem>>, vector<16x512xf32>
    %105 = arith.truncf %103 : vector<32x16xf32> to vector<32x16xbf16>
    %106 = arith.truncf %104 : vector<16x512xf32> to vector<16x512xbf16>
    %cst_65 = arith.constant dense<0.000000e+00> : vector<32x512xf32>
    %107 = tpu.matmul %105, %106, %cst_65 {dimension_numbers = #tpu.dot_dimension_numbers<[1], [0], [0], [1], [0, 0, 1, 1], [], []>} : vector<32x16xbf16>, vector<16x512xbf16>, vector<32x512xf32> -> vector<32x512xf32>
    %c0_66 = arith.constant 0 : index
    %c0_67 = arith.constant 0 : index
    %c0_68 = arith.constant 0 : index
    %108 = vector.load %arg6[%c0_66, %c0_67, %c0_68] : memref<16x18x32xf32, #tpu.memory_space<vmem>>, vector<1x18x32xf32>
    %109 = vector.shape_cast %108 : vector<1x18x32xf32> to vector<18x32xf32>
    %110 = vector.extract_strided_slice %107 {offsets = [0, 0], sizes = [32, 32], strides = [1, 1]} : vector<32x512xf32> to vector<32x32xf32>
    %cst_69 = arith.constant dense<0.000000e+00> : vector<18x32xf32>
    %111 = tpu.matmul %109, %110, %cst_69 {dimension_numbers = #tpu.dot_dimension_numbers<[1], [0], [0], [1], [0, 0, 1, 1], [], []>} : vector<18x32xf32>, vector<32x32xf32>, vector<18x32xf32> -> vector<18x32xf32>
    %c1_70 = arith.constant 1 : index
    %c0_71 = arith.constant 0 : index
    %c0_72 = arith.constant 0 : index
    %112 = vector.load %arg6[%c1_70, %c0_71, %c0_72] : memref<16x18x32xf32, #tpu.memory_space<vmem>>, vector<1x18x32xf32>
    %113 = vector.shape_cast %112 : vector<1x18x32xf32> to vector<18x32xf32>
    %114 = vector.extract_strided_slice %107 {offsets = [0, 32], sizes = [32, 32], strides = [1, 1]} : vector<32x512xf32> to vector<32x32xf32>
    %cst_73 = arith.constant dense<0.000000e+00> : vector<18x32xf32>
    %115 = tpu.matmul %113, %114, %cst_73 {dimension_numbers = #tpu.dot_dimension_numbers<[1], [0], [0], [1], [0, 0, 1, 1], [], []>} : vector<18x32xf32>, vector<32x32xf32>, vector<18x32xf32> -> vector<18x32xf32>
    %116 = arith.addf %111, %115 : vector<18x32xf32>
    %c2_74 = arith.constant 2 : index
    %c0_75 = arith.constant 0 : index
    %c0_76 = arith.constant 0 : index
    %117 = vector.load %arg6[%c2_74, %c0_75, %c0_76] : memref<16x18x32xf32, #tpu.memory_space<vmem>>, vector<1x18x32xf32>
    %118 = vector.shape_cast %117 : vector<1x18x32xf32> to vector<18x32xf32>
    %119 = vector.extract_strided_slice %107 {offsets = [0, 64], sizes = [32, 32], strides = [1, 1]} : vector<32x512xf32> to vector<32x32xf32>
    %cst_77 = arith.constant dense<0.000000e+00> : vector<18x32xf32>
    %120 = tpu.matmul %118, %119, %cst_77 {dimension_numbers = #tpu.dot_dimension_numbers<[1], [0], [0], [1], [0, 0, 1, 1], [], []>} : vector<18x32xf32>, vector<32x32xf32>, vector<18x32xf32> -> vector<18x32xf32>
    %121 = arith.addf %116, %120 : vector<18x32xf32>
    %c3_78 = arith.constant 3 : index
    %c0_79 = arith.constant 0 : index
    %c0_80 = arith.constant 0 : index
    %122 = vector.load %arg6[%c3_78, %c0_79, %c0_80] : memref<16x18x32xf32, #tpu.memory_space<vmem>>, vector<1x18x32xf32>
    %123 = vector.shape_cast %122 : vector<1x18x32xf32> to vector<18x32xf32>
    %124 = vector.extract_strided_slice %107 {offsets = [0, 96], sizes = [32, 32], strides = [1, 1]} : vector<32x512xf32> to vector<32x32xf32>
    %cst_81 = arith.constant dense<0.000000e+00> : vector<18x32xf32>
    %125 = tpu.matmul %123, %124, %cst_81 {dimension_numbers = #tpu.dot_dimension_numbers<[1], [0], [0], [1], [0, 0, 1, 1], [], []>} : vector<18x32xf32>, vector<32x32xf32>, vector<18x32xf32> -> vector<18x32xf32>
    %126 = arith.addf %121, %125 : vector<18x32xf32>
    %c4_82 = arith.constant 4 : index
    %c0_83 = arith.constant 0 : index
    %c0_84 = arith.constant 0 : index
    %127 = vector.load %arg6[%c4_82, %c0_83, %c0_84] : memref<16x18x32xf32, #tpu.memory_space<vmem>>, vector<1x18x32xf32>
    %128 = vector.shape_cast %127 : vector<1x18x32xf32> to vector<18x32xf32>
    %129 = vector.extract_strided_slice %107 {offsets = [0, 128], sizes = [32, 32], strides = [1, 1]} : vector<32x512xf32> to vector<32x32xf32>
    %cst_85 = arith.constant dense<0.000000e+00> : vector<18x32xf32>
    %130 = tpu.matmul %128, %129, %cst_85 {dimension_numbers = #tpu.dot_dimension_numbers<[1], [0], [0], [1], [0, 0, 1, 1], [], []>} : vector<18x32xf32>, vector<32x32xf32>, vector<18x32xf32> -> vector<18x32xf32>
    %131 = arith.addf %126, %130 : vector<18x32xf32>
    %c5_86 = arith.constant 5 : index
    %c0_87 = arith.constant 0 : index
    %c0_88 = arith.constant 0 : index
    %132 = vector.load %arg6[%c5_86, %c0_87, %c0_88] : memref<16x18x32xf32, #tpu.memory_space<vmem>>, vector<1x18x32xf32>
    %133 = vector.shape_cast %132 : vector<1x18x32xf32> to vector<18x32xf32>
    %134 = vector.extract_strided_slice %107 {offsets = [0, 160], sizes = [32, 32], strides = [1, 1]} : vector<32x512xf32> to vector<32x32xf32>
    %cst_89 = arith.constant dense<0.000000e+00> : vector<18x32xf32>
    %135 = tpu.matmul %133, %134, %cst_89 {dimension_numbers = #tpu.dot_dimension_numbers<[1], [0], [0], [1], [0, 0, 1, 1], [], []>} : vector<18x32xf32>, vector<32x32xf32>, vector<18x32xf32> -> vector<18x32xf32>
    %136 = arith.addf %131, %135 : vector<18x32xf32>
    %c6_90 = arith.constant 6 : index
    %c0_91 = arith.constant 0 : index
    %c0_92 = arith.constant 0 : index
    %137 = vector.load %arg6[%c6_90, %c0_91, %c0_92] : memref<16x18x32xf32, #tpu.memory_space<vmem>>, vector<1x18x32xf32>
    %138 = vector.shape_cast %137 : vector<1x18x32xf32> to vector<18x32xf32>
    %139 = vector.extract_strided_slice %107 {offsets = [0, 192], sizes = [32, 32], strides = [1, 1]} : vector<32x512xf32> to vector<32x32xf32>
    %cst_93 = arith.constant dense<0.000000e+00> : vector<18x32xf32>
    %140 = tpu.matmul %138, %139, %cst_93 {dimension_numbers = #tpu.dot_dimension_numbers<[1], [0], [0], [1], [0, 0, 1, 1], [], []>} : vector<18x32xf32>, vector<32x32xf32>, vector<18x32xf32> -> vector<18x32xf32>
    %141 = arith.addf %136, %140 : vector<18x32xf32>
    %c7_94 = arith.constant 7 : index
    %c0_95 = arith.constant 0 : index
    %c0_96 = arith.constant 0 : index
    %142 = vector.load %arg6[%c7_94, %c0_95, %c0_96] : memref<16x18x32xf32, #tpu.memory_space<vmem>>, vector<1x18x32xf32>
    %143 = vector.shape_cast %142 : vector<1x18x32xf32> to vector<18x32xf32>
    %144 = vector.extract_strided_slice %107 {offsets = [0, 224], sizes = [32, 32], strides = [1, 1]} : vector<32x512xf32> to vector<32x32xf32>
    %cst_97 = arith.constant dense<0.000000e+00> : vector<18x32xf32>
    %145 = tpu.matmul %143, %144, %cst_97 {dimension_numbers = #tpu.dot_dimension_numbers<[1], [0], [0], [1], [0, 0, 1, 1], [], []>} : vector<18x32xf32>, vector<32x32xf32>, vector<18x32xf32> -> vector<18x32xf32>
    %146 = arith.addf %141, %145 : vector<18x32xf32>
    %c8_98 = arith.constant 8 : index
    %c0_99 = arith.constant 0 : index
    %c0_100 = arith.constant 0 : index
    %147 = vector.load %arg6[%c8_98, %c0_99, %c0_100] : memref<16x18x32xf32, #tpu.memory_space<vmem>>, vector<1x18x32xf32>
    %148 = vector.shape_cast %147 : vector<1x18x32xf32> to vector<18x32xf32>
    %149 = vector.extract_strided_slice %107 {offsets = [0, 256], sizes = [32, 32], strides = [1, 1]} : vector<32x512xf32> to vector<32x32xf32>
    %cst_101 = arith.constant dense<0.000000e+00> : vector<18x32xf32>
    %150 = tpu.matmul %148, %149, %cst_101 {dimension_numbers = #tpu.dot_dimension_numbers<[1], [0], [0], [1], [0, 0, 1, 1], [], []>} : vector<18x32xf32>, vector<32x32xf32>, vector<18x32xf32> -> vector<18x32xf32>
    %151 = arith.addf %146, %150 : vector<18x32xf32>
    %c9_102 = arith.constant 9 : index
    %c0_103 = arith.constant 0 : index
    %c0_104 = arith.constant 0 : index
    %152 = vector.load %arg6[%c9_102, %c0_103, %c0_104] : memref<16x18x32xf32, #tpu.memory_space<vmem>>, vector<1x18x32xf32>
    %153 = vector.shape_cast %152 : vector<1x18x32xf32> to vector<18x32xf32>
    %154 = vector.extract_strided_slice %107 {offsets = [0, 288], sizes = [32, 32], strides = [1, 1]} : vector<32x512xf32> to vector<32x32xf32>
    %cst_105 = arith.constant dense<0.000000e+00> : vector<18x32xf32>
    %155 = tpu.matmul %153, %154, %cst_105 {dimension_numbers = #tpu.dot_dimension_numbers<[1], [0], [0], [1], [0, 0, 1, 1], [], []>} : vector<18x32xf32>, vector<32x32xf32>, vector<18x32xf32> -> vector<18x32xf32>
    %156 = arith.addf %151, %155 : vector<18x32xf32>
    %c10_106 = arith.constant 10 : index
    %c0_107 = arith.constant 0 : index
    %c0_108 = arith.constant 0 : index
    %157 = vector.load %arg6[%c10_106, %c0_107, %c0_108] : memref<16x18x32xf32, #tpu.memory_space<vmem>>, vector<1x18x32xf32>
    %158 = vector.shape_cast %157 : vector<1x18x32xf32> to vector<18x32xf32>
    %159 = vector.extract_strided_slice %107 {offsets = [0, 320], sizes = [32, 32], strides = [1, 1]} : vector<32x512xf32> to vector<32x32xf32>
    %cst_109 = arith.constant dense<0.000000e+00> : vector<18x32xf32>
    %160 = tpu.matmul %158, %159, %cst_109 {dimension_numbers = #tpu.dot_dimension_numbers<[1], [0], [0], [1], [0, 0, 1, 1], [], []>} : vector<18x32xf32>, vector<32x32xf32>, vector<18x32xf32> -> vector<18x32xf32>
    %161 = arith.addf %156, %160 : vector<18x32xf32>
    %c11_110 = arith.constant 11 : index
    %c0_111 = arith.constant 0 : index
    %c0_112 = arith.constant 0 : index
    %162 = vector.load %arg6[%c11_110, %c0_111, %c0_112] : memref<16x18x32xf32, #tpu.memory_space<vmem>>, vector<1x18x32xf32>
    %163 = vector.shape_cast %162 : vector<1x18x32xf32> to vector<18x32xf32>
    %164 = vector.extract_strided_slice %107 {offsets = [0, 352], sizes = [32, 32], strides = [1, 1]} : vector<32x512xf32> to vector<32x32xf32>
    %cst_113 = arith.constant dense<0.000000e+00> : vector<18x32xf32>
    %165 = tpu.matmul %163, %164, %cst_113 {dimension_numbers = #tpu.dot_dimension_numbers<[1], [0], [0], [1], [0, 0, 1, 1], [], []>} : vector<18x32xf32>, vector<32x32xf32>, vector<18x32xf32> -> vector<18x32xf32>
    %166 = arith.addf %161, %165 : vector<18x32xf32>
    %c12_114 = arith.constant 12 : index
    %c0_115 = arith.constant 0 : index
    %c0_116 = arith.constant 0 : index
    %167 = vector.load %arg6[%c12_114, %c0_115, %c0_116] : memref<16x18x32xf32, #tpu.memory_space<vmem>>, vector<1x18x32xf32>
    %168 = vector.shape_cast %167 : vector<1x18x32xf32> to vector<18x32xf32>
    %169 = vector.extract_strided_slice %107 {offsets = [0, 384], sizes = [32, 32], strides = [1, 1]} : vector<32x512xf32> to vector<32x32xf32>
    %cst_117 = arith.constant dense<0.000000e+00> : vector<18x32xf32>
    %170 = tpu.matmul %168, %169, %cst_117 {dimension_numbers = #tpu.dot_dimension_numbers<[1], [0], [0], [1], [0, 0, 1, 1], [], []>} : vector<18x32xf32>, vector<32x32xf32>, vector<18x32xf32> -> vector<18x32xf32>
    %171 = arith.addf %166, %170 : vector<18x32xf32>
    %c13_118 = arith.constant 13 : index
    %c0_119 = arith.constant 0 : index
    %c0_120 = arith.constant 0 : index
    %172 = vector.load %arg6[%c13_118, %c0_119, %c0_120] : memref<16x18x32xf32, #tpu.memory_space<vmem>>, vector<1x18x32xf32>
    %173 = vector.shape_cast %172 : vector<1x18x32xf32> to vector<18x32xf32>
    %174 = vector.extract_strided_slice %107 {offsets = [0, 416], sizes = [32, 32], strides = [1, 1]} : vector<32x512xf32> to vector<32x32xf32>
    %cst_121 = arith.constant dense<0.000000e+00> : vector<18x32xf32>
    %175 = tpu.matmul %173, %174, %cst_121 {dimension_numbers = #tpu.dot_dimension_numbers<[1], [0], [0], [1], [0, 0, 1, 1], [], []>} : vector<18x32xf32>, vector<32x32xf32>, vector<18x32xf32> -> vector<18x32xf32>
    %176 = arith.addf %171, %175 : vector<18x32xf32>
    %c14_122 = arith.constant 14 : index
    %c0_123 = arith.constant 0 : index
    %c0_124 = arith.constant 0 : index
    %177 = vector.load %arg6[%c14_122, %c0_123, %c0_124] : memref<16x18x32xf32, #tpu.memory_space<vmem>>, vector<1x18x32xf32>
    %178 = vector.shape_cast %177 : vector<1x18x32xf32> to vector<18x32xf32>
    %179 = vector.extract_strided_slice %107 {offsets = [0, 448], sizes = [32, 32], strides = [1, 1]} : vector<32x512xf32> to vector<32x32xf32>
    %cst_125 = arith.constant dense<0.000000e+00> : vector<18x32xf32>
    %180 = tpu.matmul %178, %179, %cst_125 {dimension_numbers = #tpu.dot_dimension_numbers<[1], [0], [0], [1], [0, 0, 1, 1], [], []>} : vector<18x32xf32>, vector<32x32xf32>, vector<18x32xf32> -> vector<18x32xf32>
    %181 = arith.addf %176, %180 : vector<18x32xf32>
    %c15_126 = arith.constant 15 : index
    %c0_127 = arith.constant 0 : index
    %c0_128 = arith.constant 0 : index
    %182 = vector.load %arg6[%c15_126, %c0_127, %c0_128] : memref<16x18x32xf32, #tpu.memory_space<vmem>>, vector<1x18x32xf32>
    %183 = vector.shape_cast %182 : vector<1x18x32xf32> to vector<18x32xf32>
    %184 = vector.extract_strided_slice %107 {offsets = [0, 480], sizes = [32, 32], strides = [1, 1]} : vector<32x512xf32> to vector<32x32xf32>
    %cst_129 = arith.constant dense<0.000000e+00> : vector<18x32xf32>
    %185 = tpu.matmul %183, %184, %cst_129 {dimension_numbers = #tpu.dot_dimension_numbers<[1], [0], [0], [1], [0, 0, 1, 1], [], []>} : vector<18x32xf32>, vector<32x32xf32>, vector<18x32xf32> -> vector<18x32xf32>
    %186 = arith.addf %181, %185 : vector<18x32xf32>
    %c0_130 = arith.constant 0 : index
    %c0_131 = arith.constant 0 : index
    %187 = vector.load %arg8[%c0_130, %c0_131] : memref<1x32xf32, #tpu.memory_space<vmem>>, vector<1x32xf32>
    %188 = vector.broadcast %187 : vector<1x32xf32> to vector<18x32xf32>
    %189 = arith.addf %186, %188 : vector<18x32xf32>
    %cst_132 = arith.constant 0.000000e+00 : f32
    %190 = vector.broadcast %cst_132 : f32 to vector<18x32xf32>
    %191 = arith.cmpf oge, %189, %190 : vector<18x32xf32>
    %cst_133 = arith.constant 2.000000e-01 : f32
    %192 = vector.broadcast %cst_133 : f32 to vector<18x32xf32>
    %193 = arith.mulf %192, %189 : vector<18x32xf32>
    %194 = arith.select %191, %189, %193 : vector<18x32xi1>, vector<18x32xf32>
    %c0_134 = arith.constant 0 : index
    %c0_135 = arith.constant 0 : index
    %195 = vector.load %arg10[%c0_134, %c0_135] : memref<32x16xf32, #tpu.memory_space<vmem>>, vector<32x16xf32>
    %196 = arith.truncf %194 : vector<18x32xf32> to vector<18x32xbf16>
    %197 = arith.truncf %195 : vector<32x16xf32> to vector<32x16xbf16>
    %cst_136 = arith.constant dense<0.000000e+00> : vector<18x16xf32>
    %198 = tpu.matmul %196, %197, %cst_136 {dimension_numbers = #tpu.dot_dimension_numbers<[1], [0], [0], [1], [0, 0, 1, 1], [], []>} : vector<18x32xbf16>, vector<32x16xbf16>, vector<18x16xf32> -> vector<18x16xf32>
    %c0_137 = arith.constant 0 : index
    %c0_138 = arith.constant 0 : index
    %c0_139 = arith.constant 0 : index
    %199 = vector.load %arg9[%c0_137, %c0_138, %c0_139] : memref<16x8x18xf32, #tpu.memory_space<vmem>>, vector<1x8x18xf32>
    %200 = vector.shape_cast %199 : vector<1x8x18xf32> to vector<8x18xf32>
    %201 = vector.extract_strided_slice %198 {offsets = [0, 0], sizes = [18, 1], strides = [1, 1]} : vector<18x16xf32> to vector<18x1xf32>
    %cst_140 = arith.constant dense<0.000000e+00> : vector<8x1xf32>
    %202 = tpu.matmul %200, %201, %cst_140 {dimension_numbers = #tpu.dot_dimension_numbers<[1], [0], [0], [1], [0, 0, 1, 1], [], []>} : vector<8x18xf32>, vector<18x1xf32>, vector<8x1xf32> -> vector<8x1xf32>
    %c1_141 = arith.constant 1 : index
    %c0_142 = arith.constant 0 : index
    %c0_143 = arith.constant 0 : index
    %203 = vector.load %arg9[%c1_141, %c0_142, %c0_143] : memref<16x8x18xf32, #tpu.memory_space<vmem>>, vector<1x8x18xf32>
    %204 = vector.shape_cast %203 : vector<1x8x18xf32> to vector<8x18xf32>
    %205 = vector.extract_strided_slice %198 {offsets = [0, 1], sizes = [18, 1], strides = [1, 1]} : vector<18x16xf32> to vector<18x1xf32>
    %cst_144 = arith.constant dense<0.000000e+00> : vector<8x1xf32>
    %206 = tpu.matmul %204, %205, %cst_144 {dimension_numbers = #tpu.dot_dimension_numbers<[1], [0], [0], [1], [0, 0, 1, 1], [], []>} : vector<8x18xf32>, vector<18x1xf32>, vector<8x1xf32> -> vector<8x1xf32>
    %207 = arith.addf %202, %206 : vector<8x1xf32>
    %c2_145 = arith.constant 2 : index
    %c0_146 = arith.constant 0 : index
    %c0_147 = arith.constant 0 : index
    %208 = vector.load %arg9[%c2_145, %c0_146, %c0_147] : memref<16x8x18xf32, #tpu.memory_space<vmem>>, vector<1x8x18xf32>
    %209 = vector.shape_cast %208 : vector<1x8x18xf32> to vector<8x18xf32>
    %210 = vector.extract_strided_slice %198 {offsets = [0, 2], sizes = [18, 1], strides = [1, 1]} : vector<18x16xf32> to vector<18x1xf32>
    %cst_148 = arith.constant dense<0.000000e+00> : vector<8x1xf32>
    %211 = tpu.matmul %209, %210, %cst_148 {dimension_numbers = #tpu.dot_dimension_numbers<[1], [0], [0], [1], [0, 0, 1, 1], [], []>} : vector<8x18xf32>, vector<18x1xf32>, vector<8x1xf32> -> vector<8x1xf32>
    %212 = arith.addf %207, %211 : vector<8x1xf32>
    %c3_149 = arith.constant 3 : index
    %c0_150 = arith.constant 0 : index
    %c0_151 = arith.constant 0 : index
    %213 = vector.load %arg9[%c3_149, %c0_150, %c0_151] : memref<16x8x18xf32, #tpu.memory_space<vmem>>, vector<1x8x18xf32>
    %214 = vector.shape_cast %213 : vector<1x8x18xf32> to vector<8x18xf32>
    %215 = vector.extract_strided_slice %198 {offsets = [0, 3], sizes = [18, 1], strides = [1, 1]} : vector<18x16xf32> to vector<18x1xf32>
    %cst_152 = arith.constant dense<0.000000e+00> : vector<8x1xf32>
    %216 = tpu.matmul %214, %215, %cst_152 {dimension_numbers = #tpu.dot_dimension_numbers<[1], [0], [0], [1], [0, 0, 1, 1], [], []>} : vector<8x18xf32>, vector<18x1xf32>, vector<8x1xf32> -> vector<8x1xf32>
    %217 = arith.addf %212, %216 : vector<8x1xf32>
    %c4_153 = arith.constant 4 : index
    %c0_154 = arith.constant 0 : index
    %c0_155 = arith.constant 0 : index
    %218 = vector.load %arg9[%c4_153, %c0_154, %c0_155] : memref<16x8x18xf32, #tpu.memory_space<vmem>>, vector<1x8x18xf32>
    %219 = vector.shape_cast %218 : vector<1x8x18xf32> to vector<8x18xf32>
    %220 = vector.extract_strided_slice %198 {offsets = [0, 4], sizes = [18, 1], strides = [1, 1]} : vector<18x16xf32> to vector<18x1xf32>
    %cst_156 = arith.constant dense<0.000000e+00> : vector<8x1xf32>
    %221 = tpu.matmul %219, %220, %cst_156 {dimension_numbers = #tpu.dot_dimension_numbers<[1], [0], [0], [1], [0, 0, 1, 1], [], []>} : vector<8x18xf32>, vector<18x1xf32>, vector<8x1xf32> -> vector<8x1xf32>
    %222 = arith.addf %217, %221 : vector<8x1xf32>
    %c5_157 = arith.constant 5 : index
    %c0_158 = arith.constant 0 : index
    %c0_159 = arith.constant 0 : index
    %223 = vector.load %arg9[%c5_157, %c0_158, %c0_159] : memref<16x8x18xf32, #tpu.memory_space<vmem>>, vector<1x8x18xf32>
    %224 = vector.shape_cast %223 : vector<1x8x18xf32> to vector<8x18xf32>
    %225 = vector.extract_strided_slice %198 {offsets = [0, 5], sizes = [18, 1], strides = [1, 1]} : vector<18x16xf32> to vector<18x1xf32>
    %cst_160 = arith.constant dense<0.000000e+00> : vector<8x1xf32>
    %226 = tpu.matmul %224, %225, %cst_160 {dimension_numbers = #tpu.dot_dimension_numbers<[1], [0], [0], [1], [0, 0, 1, 1], [], []>} : vector<8x18xf32>, vector<18x1xf32>, vector<8x1xf32> -> vector<8x1xf32>
    %227 = arith.addf %222, %226 : vector<8x1xf32>
    %c6_161 = arith.constant 6 : index
    %c0_162 = arith.constant 0 : index
    %c0_163 = arith.constant 0 : index
    %228 = vector.load %arg9[%c6_161, %c0_162, %c0_163] : memref<16x8x18xf32, #tpu.memory_space<vmem>>, vector<1x8x18xf32>
    %229 = vector.shape_cast %228 : vector<1x8x18xf32> to vector<8x18xf32>
    %230 = vector.extract_strided_slice %198 {offsets = [0, 6], sizes = [18, 1], strides = [1, 1]} : vector<18x16xf32> to vector<18x1xf32>
    %cst_164 = arith.constant dense<0.000000e+00> : vector<8x1xf32>
    %231 = tpu.matmul %229, %230, %cst_164 {dimension_numbers = #tpu.dot_dimension_numbers<[1], [0], [0], [1], [0, 0, 1, 1], [], []>} : vector<8x18xf32>, vector<18x1xf32>, vector<8x1xf32> -> vector<8x1xf32>
    %232 = arith.addf %227, %231 : vector<8x1xf32>
    %c7_165 = arith.constant 7 : index
    %c0_166 = arith.constant 0 : index
    %c0_167 = arith.constant 0 : index
    %233 = vector.load %arg9[%c7_165, %c0_166, %c0_167] : memref<16x8x18xf32, #tpu.memory_space<vmem>>, vector<1x8x18xf32>
    %234 = vector.shape_cast %233 : vector<1x8x18xf32> to vector<8x18xf32>
    %235 = vector.extract_strided_slice %198 {offsets = [0, 7], sizes = [18, 1], strides = [1, 1]} : vector<18x16xf32> to vector<18x1xf32>
    %cst_168 = arith.constant dense<0.000000e+00> : vector<8x1xf32>
    %236 = tpu.matmul %234, %235, %cst_168 {dimension_numbers = #tpu.dot_dimension_numbers<[1], [0], [0], [1], [0, 0, 1, 1], [], []>} : vector<8x18xf32>, vector<18x1xf32>, vector<8x1xf32> -> vector<8x1xf32>
    %237 = arith.addf %232, %236 : vector<8x1xf32>
    %c8_169 = arith.constant 8 : index
    %c0_170 = arith.constant 0 : index
    %c0_171 = arith.constant 0 : index
    %238 = vector.load %arg9[%c8_169, %c0_170, %c0_171] : memref<16x8x18xf32, #tpu.memory_space<vmem>>, vector<1x8x18xf32>
    %239 = vector.shape_cast %238 : vector<1x8x18xf32> to vector<8x18xf32>
    %240 = vector.extract_strided_slice %198 {offsets = [0, 8], sizes = [18, 1], strides = [1, 1]} : vector<18x16xf32> to vector<18x1xf32>
    %cst_172 = arith.constant dense<0.000000e+00> : vector<8x1xf32>
    %241 = tpu.matmul %239, %240, %cst_172 {dimension_numbers = #tpu.dot_dimension_numbers<[1], [0], [0], [1], [0, 0, 1, 1], [], []>} : vector<8x18xf32>, vector<18x1xf32>, vector<8x1xf32> -> vector<8x1xf32>
    %242 = arith.addf %237, %241 : vector<8x1xf32>
    %c9_173 = arith.constant 9 : index
    %c0_174 = arith.constant 0 : index
    %c0_175 = arith.constant 0 : index
    %243 = vector.load %arg9[%c9_173, %c0_174, %c0_175] : memref<16x8x18xf32, #tpu.memory_space<vmem>>, vector<1x8x18xf32>
    %244 = vector.shape_cast %243 : vector<1x8x18xf32> to vector<8x18xf32>
    %245 = vector.extract_strided_slice %198 {offsets = [0, 9], sizes = [18, 1], strides = [1, 1]} : vector<18x16xf32> to vector<18x1xf32>
    %cst_176 = arith.constant dense<0.000000e+00> : vector<8x1xf32>
    %246 = tpu.matmul %244, %245, %cst_176 {dimension_numbers = #tpu.dot_dimension_numbers<[1], [0], [0], [1], [0, 0, 1, 1], [], []>} : vector<8x18xf32>, vector<18x1xf32>, vector<8x1xf32> -> vector<8x1xf32>
    %247 = arith.addf %242, %246 : vector<8x1xf32>
    %c10_177 = arith.constant 10 : index
    %c0_178 = arith.constant 0 : index
    %c0_179 = arith.constant 0 : index
    %248 = vector.load %arg9[%c10_177, %c0_178, %c0_179] : memref<16x8x18xf32, #tpu.memory_space<vmem>>, vector<1x8x18xf32>
    %249 = vector.shape_cast %248 : vector<1x8x18xf32> to vector<8x18xf32>
    %250 = vector.extract_strided_slice %198 {offsets = [0, 10], sizes = [18, 1], strides = [1, 1]} : vector<18x16xf32> to vector<18x1xf32>
    %cst_180 = arith.constant dense<0.000000e+00> : vector<8x1xf32>
    %251 = tpu.matmul %249, %250, %cst_180 {dimension_numbers = #tpu.dot_dimension_numbers<[1], [0], [0], [1], [0, 0, 1, 1], [], []>} : vector<8x18xf32>, vector<18x1xf32>, vector<8x1xf32> -> vector<8x1xf32>
    %252 = arith.addf %247, %251 : vector<8x1xf32>
    %c11_181 = arith.constant 11 : index
    %c0_182 = arith.constant 0 : index
    %c0_183 = arith.constant 0 : index
    %253 = vector.load %arg9[%c11_181, %c0_182, %c0_183] : memref<16x8x18xf32, #tpu.memory_space<vmem>>, vector<1x8x18xf32>
    %254 = vector.shape_cast %253 : vector<1x8x18xf32> to vector<8x18xf32>
    %255 = vector.extract_strided_slice %198 {offsets = [0, 11], sizes = [18, 1], strides = [1, 1]} : vector<18x16xf32> to vector<18x1xf32>
    %cst_184 = arith.constant dense<0.000000e+00> : vector<8x1xf32>
    %256 = tpu.matmul %254, %255, %cst_184 {dimension_numbers = #tpu.dot_dimension_numbers<[1], [0], [0], [1], [0, 0, 1, 1], [], []>} : vector<8x18xf32>, vector<18x1xf32>, vector<8x1xf32> -> vector<8x1xf32>
    %257 = arith.addf %252, %256 : vector<8x1xf32>
    %c12_185 = arith.constant 12 : index
    %c0_186 = arith.constant 0 : index
    %c0_187 = arith.constant 0 : index
    %258 = vector.load %arg9[%c12_185, %c0_186, %c0_187] : memref<16x8x18xf32, #tpu.memory_space<vmem>>, vector<1x8x18xf32>
    %259 = vector.shape_cast %258 : vector<1x8x18xf32> to vector<8x18xf32>
    %260 = vector.extract_strided_slice %198 {offsets = [0, 12], sizes = [18, 1], strides = [1, 1]} : vector<18x16xf32> to vector<18x1xf32>
    %cst_188 = arith.constant dense<0.000000e+00> : vector<8x1xf32>
    %261 = tpu.matmul %259, %260, %cst_188 {dimension_numbers = #tpu.dot_dimension_numbers<[1], [0], [0], [1], [0, 0, 1, 1], [], []>} : vector<8x18xf32>, vector<18x1xf32>, vector<8x1xf32> -> vector<8x1xf32>
    %262 = arith.addf %257, %261 : vector<8x1xf32>
    %c13_189 = arith.constant 13 : index
    %c0_190 = arith.constant 0 : index
    %c0_191 = arith.constant 0 : index
    %263 = vector.load %arg9[%c13_189, %c0_190, %c0_191] : memref<16x8x18xf32, #tpu.memory_space<vmem>>, vector<1x8x18xf32>
    %264 = vector.shape_cast %263 : vector<1x8x18xf32> to vector<8x18xf32>
    %265 = vector.extract_strided_slice %198 {offsets = [0, 13], sizes = [18, 1], strides = [1, 1]} : vector<18x16xf32> to vector<18x1xf32>
    %cst_192 = arith.constant dense<0.000000e+00> : vector<8x1xf32>
    %266 = tpu.matmul %264, %265, %cst_192 {dimension_numbers = #tpu.dot_dimension_numbers<[1], [0], [0], [1], [0, 0, 1, 1], [], []>} : vector<8x18xf32>, vector<18x1xf32>, vector<8x1xf32> -> vector<8x1xf32>
    %267 = arith.addf %262, %266 : vector<8x1xf32>
    %c14_193 = arith.constant 14 : index
    %c0_194 = arith.constant 0 : index
    %c0_195 = arith.constant 0 : index
    %268 = vector.load %arg9[%c14_193, %c0_194, %c0_195] : memref<16x8x18xf32, #tpu.memory_space<vmem>>, vector<1x8x18xf32>
    %269 = vector.shape_cast %268 : vector<1x8x18xf32> to vector<8x18xf32>
    %270 = vector.extract_strided_slice %198 {offsets = [0, 14], sizes = [18, 1], strides = [1, 1]} : vector<18x16xf32> to vector<18x1xf32>
    %cst_196 = arith.constant dense<0.000000e+00> : vector<8x1xf32>
    %271 = tpu.matmul %269, %270, %cst_196 {dimension_numbers = #tpu.dot_dimension_numbers<[1], [0], [0], [1], [0, 0, 1, 1], [], []>} : vector<8x18xf32>, vector<18x1xf32>, vector<8x1xf32> -> vector<8x1xf32>
    %272 = arith.addf %267, %271 : vector<8x1xf32>
    %c15_197 = arith.constant 15 : index
    %c0_198 = arith.constant 0 : index
    %c0_199 = arith.constant 0 : index
    %273 = vector.load %arg9[%c15_197, %c0_198, %c0_199] : memref<16x8x18xf32, #tpu.memory_space<vmem>>, vector<1x8x18xf32>
    %274 = vector.shape_cast %273 : vector<1x8x18xf32> to vector<8x18xf32>
    %275 = vector.extract_strided_slice %198 {offsets = [0, 15], sizes = [18, 1], strides = [1, 1]} : vector<18x16xf32> to vector<18x1xf32>
    %cst_200 = arith.constant dense<0.000000e+00> : vector<8x1xf32>
    %276 = tpu.matmul %274, %275, %cst_200 {dimension_numbers = #tpu.dot_dimension_numbers<[1], [0], [0], [1], [0, 0, 1, 1], [], []>} : vector<8x18xf32>, vector<18x1xf32>, vector<8x1xf32> -> vector<8x1xf32>
    %277 = arith.addf %272, %276 : vector<8x1xf32>
    %c0_201 = arith.constant 0 : index
    %c0_202 = arith.constant 0 : index
    %278 = vector.load %arg11[%c0_201, %c0_202] : memref<1x1xf32, #tpu.memory_space<vmem>>, vector<1x1xf32>
    %279 = vector.broadcast %278 : vector<1x1xf32> to vector<8x1xf32>
    %280 = arith.addf %277, %279 : vector<8x1xf32>
    %c0_203 = arith.constant 0 : index
    %c0_204 = arith.constant 0 : index
    %281 = vector.load %arg12[%c0_203, %c0_204] : memref<8x1xf32, #tpu.memory_space<vmem>>, vector<8x1xf32>
    tpu.vector_store %arg12[%c0_203, %c0_204], %280 {strides = array<i32>} : memref<8x1xf32, #tpu.memory_space<vmem>>, vector<8x1xf32>,
    return
  }
}

</mosaic_0001>

<llo_original>
// kernel: wrapped_model_forward.1
$region0: #{wrapped_model_forward.1}
  #allocation0 [shape = 'u32[]', space=smem, size = 0x4, offset = 0x4, fixed_abs, tag = 'smem constant byte address 0x4 - core index']
  #allocation1 [shape = 'u32[72,128]{1,0:T(1,128)}', space=vmem, size = 0x9000, scoped, tag = 'internal scratch']
  #allocation2 [shape = 'f32[1,1]{1,0:T(1,128)S(1)}', space=vmem, size = 0x200, scoped, tag = 'scoped memory for wrapped_model_forward.1']
  %s0 = inlined_call_operand.vmem [shape: f32[128,64], index: 0, kind: input, shape index: {}]
  %s1 = inlined_call_operand.vmem [shape: f32[64,8], index: 1, kind: input, shape index: {}]
  %s2 = inlined_call_operand.vmem [shape: f32[1,8], index: 2, kind: input, shape index: {}]
  %s3 = inlined_call_operand.vmem [shape: f32[16,32,128], index: 3, kind: input, shape index: {}]
  %s4 = inlined_call_operand.vmem [shape: f32[8,256], index: 4, kind: input, shape index: {}]
  %s5 = inlined_call_operand.vmem [shape: f32[1,16], index: 5, kind: input, shape index: {}]
  %s6 = inlined_call_operand.vmem [shape: f32[16,18,32], index: 6, kind: input, shape index: {}]
  %s7 = inlined_call_operand.vmem [shape: f32[16,512], index: 7, kind: input, shape index: {}]
  %s8 = inlined_call_operand.vmem [shape: f32[1,32], index: 8, kind: input, shape index: {}]
  %s9 = inlined_call_operand.vmem [shape: f32[16,8,18], index: 9, kind: input, shape index: {}]
  %s10 = inlined_call_operand.vmem [shape: f32[32,16], index: 10, kind: input, shape index: {}]
  %s11 = inlined_call_operand.<no memory space> [shape: f32[1,1], index: 11, kind: input, shape index: {}]
  %s12 = inlined_call_operand.vmem [shape: f32[8,1], index: 12, kind: output, shape index: {}]
  %s13 = sld [smem:[#allocation0]]
  $region58: #{wrapped_model_forward.1} parent=0
    _
  %s15 = ssub.s32 1, %s13
  %s16 = scalar_select 0, %s15, %s13
  %v17 = vstv %s11
  %18 = vst [vmem:[#allocation2] sm:$0x1] %v17
  // Predicated region
  $region2: #{wrapped_model_forward.1} parent=0 // pred_check
    _
  $region3: #{wrapped_model_forward.1} parent=0 // pred_check_branch
    %20 = sbr.rel (0) target = $region5
  $region4: #{wrapped_model_forward.1} parent=0 // pred_region
    _
  $region5: #{wrapped_model_forward.1} parent=0 // pred_fallthru
    _
  // Predicated region
  $region6: #{wrapped_model_forward.1} parent=0 // pred_check
    _
  $region7: #{wrapped_model_forward.1} parent=0 // pred_check_branch
    %22 = sbr.rel (0) target = $region9
  $region8: #{wrapped_model_forward.1} parent=0 // pred_region
    _
  $region9: #{wrapped_model_forward.1} parent=0 // pred_fallthru
    _
  // Predicated region
  $region10: #{wrapped_model_forward.1} parent=0 // pred_check
    _
  $region11: #{wrapped_model_forward.1} parent=0 // pred_check_branch
    %24 = sbr.rel (0) target = $region13
  $region12: #{wrapped_model_forward.1} parent=0 // pred_region
    _
  $region13: #{wrapped_model_forward.1} parent=0 // pred_fallthru
    _
  // Predicated region
  $region14: #{wrapped_model_forward.1} parent=0 // pred_check
    _
  $region15: #{wrapped_model_forward.1} parent=0 // pred_check_branch
    %26 = sbr.rel (0) target = $region17
  $region16: #{wrapped_model_forward.1} parent=0 // pred_region
    _
  $region17: #{wrapped_model_forward.1} parent=0 // pred_fallthru
    _
  // Predicated region
  $region18: #{wrapped_model_forward.1} parent=0 // pred_check
    _
  $region19: #{wrapped_model_forward.1} parent=0 // pred_check_branch
    %28 = sbr.rel (0) target = $region21
  $region20: #{wrapped_model_forward.1} parent=0 // pred_region
    _
  $region21: #{wrapped_model_forward.1} parent=0 // pred_fallthru
    _
  // Predicated region
  $region22: #{wrapped_model_forward.1} parent=0 // pred_check
    _
  $region23: #{wrapped_model_forward.1} parent=0 // pred_check_branch
    %30 = sbr.rel (0) target = $region25
  $region24: #{wrapped_model_forward.1} parent=0 // pred_region
    _
  $region25: #{wrapped_model_forward.1} parent=0 // pred_fallthru
    _
  // Predicated region
  $region26: #{wrapped_model_forward.1} parent=0 // pred_check
    _
  $region27: #{wrapped_model_forward.1} parent=0 // pred_check_branch
    %32 = sbr.rel (0) target = $region29
  $region28: #{wrapped_model_forward.1} parent=0 // pred_region
    _
  $region29: #{wrapped_model_forward.1} parent=0 // pred_fallthru
    _
  // Predicated region
  $region30: #{wrapped_model_forward.1} parent=0 // pred_check
    _
  $region31: #{wrapped_model_forward.1} parent=0 // pred_check_branch
    %34 = sbr.rel (0) target = $region33
  $region32: #{wrapped_model_forward.1} parent=0 // pred_region
    _
  $region33: #{wrapped_model_forward.1} parent=0 // pred_fallthru
    _
  // Predicated region
  $region34: #{wrapped_model_forward.1} parent=0 // pred_check
    _
  $region35: #{wrapped_model_forward.1} parent=0 // pred_check_branch
    %36 = sbr.rel (0) target = $region37
  $region36: #{wrapped_model_forward.1} parent=0 // pred_region
    _
  $region37: #{wrapped_model_forward.1} parent=0 // pred_fallthru
    _
  // Predicated region
  $region38: #{wrapped_model_forward.1} parent=0 // pred_check
    _
  $region39: #{wrapped_model_forward.1} parent=0 // pred_check_branch
    %38 = sbr.rel (0) target = $region41
  $region40: #{wrapped_model_forward.1} parent=0 // pred_region
    _
  $region41: #{wrapped_model_forward.1} parent=0 // pred_fallthru
    _
  // Predicated region
  $region42: #{wrapped_model_forward.1} parent=0 // pred_check
    _
  $region43: #{wrapped_model_forward.1} parent=0 // pred_check_branch
    %40 = sbr.rel (0) target = $region45
  $region44: #{wrapped_model_forward.1} parent=0 // pred_region
    _
  $region45: #{wrapped_model_forward.1} parent=0 // pred_fallthru
    _
  // Predicated region
  $region46: #{wrapped_model_forward.1} parent=0 // pred_check
    _
  $region47: #{wrapped_model_forward.1} parent=0 // pred_check_branch
    %42 = sbr.rel (0) target = $region49
  $region48: #{wrapped_model_forward.1} parent=0 // pred_region
    _
  $region49: #{wrapped_model_forward.1} parent=0 // pred_fallthru
    _
  %v44 = vld [vmem:[%s0] sm:$0xff]
  %v45 = vld [vmem:[%s0 + $0x8] sm:$0xff]
  %v46 = vld [vmem:[%s0 + $0x10] sm:$0xff]
  %v47 = vld [vmem:[%s0 + $0x18] sm:$0xff]
  %v48 = vld [vmem:[%s0 + $0x20] sm:$0xff]
  %v49 = vld [vmem:[%s0 + $0x28] sm:$0xff]
  %v50 = vld [vmem:[%s0 + $0x30] sm:$0xff]
  %v51 = vld [vmem:[%s0 + $0x38] sm:$0xff]
  %v52 = vld [vmem:[%s0 + $0x40] sm:$0xff]
  %v53 = vld [vmem:[%s0 + $0x48] sm:$0xff]
  %v54 = vld [vmem:[%s0 + $0x50] sm:$0xff]
  %v55 = vld [vmem:[%s0 + $0x58] sm:$0xff]
  %v56 = vld [vmem:[%s0 + $0x60] sm:$0xff]
  %v57 = vld [vmem:[%s0 + $0x68] sm:$0xff]
  %v58 = vld [vmem:[%s0 + $0x70] sm:$0xff]
  %v59 = vld [vmem:[%s0 + $0x78] sm:$0xff]
  %v60 = vld [vmem:[%s1] sm:$0xff]
  %v61 = vld [vmem:[%s1 + $0x8] sm:$0xff]
  %v62 = vld [vmem:[%s1 + $0x10] sm:$0xff]
  %v63 = vld [vmem:[%s1 + $0x18] sm:$0xff]
  %v64 = vld [vmem:[%s1 + $0x20] sm:$0xff]
  %v65 = vld [vmem:[%s1 + $0x28] sm:$0xff]
  %v66 = vld [vmem:[%s1 + $0x30] sm:$0xff]
  %v67 = vld [vmem:[%s1 + $0x38] sm:$0xff]
  %v68 = vpack.c.bf16 %v45, %v44
  %v69 = vpack.c.bf16 %v47, %v46
  %v70 = vpack.c.bf16 %v49, %v48
  %v71 = vpack.c.bf16 %v51, %v50
  %v72 = vpack.c.bf16 %v53, %v52
  %v73 = vpack.c.bf16 %v55, %v54
  %v74 = vpack.c.bf16 %v57, %v56
  %v75 = vpack.c.bf16 %v59, %v58
  %v76 = vpack.c.bf16 %v61, %v60
  %v77 = vpack.c.bf16 %v63, %v62
  %v78 = vpack.c.bf16 %v65, %v64
  %v79 = vpack.c.bf16 %v67, %v66
  %v80 = vld [vmem:[%s2] sm:$0x1]
  %v82 = vperm.slane %v80, 0
  %vm84 = vcmask 523264
  %v86 = vsel %vm84, %v68, 0
  %v89 = vsel %vm84, %v69, 0
  %v92 = vsel %vm84, %v70, 0
  %v95 = vsel %vm84, %v71, 0
  %v98 = vsel %vm84, %v72, 0
  %v101 = vsel %vm84, %v73, 0
  %v104 = vsel %vm84, %v74, 0
  %v107 = vsel %vm84, %v75, 0
  %109 = vmatpush.bf16.msra.mxu0 0
  %110 = vmatpush.bf16.msra.mxu0 0
  %111 = vmatpush.bf16.msra.mxu0 0
  %112 = vmatpush.bf16.msra.mxu0 0
  %113 = vmatpush.bf16.msra.mxu0 %v79
  %114 = vmatpush.bf16.msra.mxu0 %v78
  %115 = vmatpush.bf16.msra.mxu0 %v77
  %116 = vmatpush.bf16.msra.mxu0 %v76
  %117 = vmatmul.bf16.gmra.mxu0 %v86
  %v118 = vpop.f32.mrf.mxu0
  %v119 = vadd.f32 %v82, %v118
  %v120 = vpop.f32.mrf.mxu0
  %v121 = vadd.f32 %v82, %v120
  %122 = vmatmul.bf16.gmra.mxu0 %v89
  %v123 = vpop.f32.mrf.mxu0
  %v124 = vadd.f32 %v82, %v123
  %v125 = vpop.f32.mrf.mxu0
  %v126 = vadd.f32 %v82, %v125
  %127 = vmatmul.bf16.gmra.mxu0 %v92
  %v128 = vpop.f32.mrf.mxu0
  %v129 = vadd.f32 %v82, %v128
  %v130 = vpop.f32.mrf.mxu0
  %v131 = vadd.f32 %v82, %v130
  %132 = vmatmul.bf16.gmra.mxu0 %v95
  %v133 = vpop.f32.mrf.mxu0
  %v134 = vadd.f32 %v82, %v133
  %v135 = vpop.f32.mrf.mxu0
  %v136 = vadd.f32 %v82, %v135
  %137 = vmatmul.bf16.gmra.mxu0 %v98
  %v138 = vpop.f32.mrf.mxu0
  %v139 = vadd.f32 %v82, %v138
  %v140 = vpop.f32.mrf.mxu0
  %v141 = vadd.f32 %v82, %v140
  %142 = vmatmul.bf16.gmra.mxu0 %v101
  %v143 = vpop.f32.mrf.mxu0
  %v144 = vadd.f32 %v82, %v143
  %v145 = vpop.f32.mrf.mxu0
  %v146 = vadd.f32 %v82, %v145
  %147 = vmatmul.bf16.gmra.mxu0 %v104
  %v148 = vpop.f32.mrf.mxu0
  %v149 = vadd.f32 %v82, %v148
  %v150 = vpop.f32.mrf.mxu0
  %v151 = vadd.f32 %v82, %v150
  %152 = vmatmul.bf16.gmra.mxu0 %v107
  %v153 = vpop.f32.mrf.mxu0
  %v154 = vadd.f32 %v82, %v153
  %v155 = vpop.f32.mrf.mxu0
  %v156 = vadd.f32 %v82, %v155
  %157 = vdwg.mxu0
  %vm158 = vcmp.ge.f32.partialorder %v119, 0.0
  %vm159 = vcmp.ge.f32.partialorder %v121, 0.0
  %vm160 = vcmp.ge.f32.partialorder %v124, 0.0
  %vm161 = vcmp.ge.f32.partialorder %v126, 0.0
  %vm162 = vcmp.ge.f32.partialorder %v129, 0.0
  %vm163 = vcmp.ge.f32.partialorder %v131, 0.0
  %vm164 = vcmp.ge.f32.partialorder %v134, 0.0
  %vm165 = vcmp.ge.f32.partialorder %v136, 0.0
  %vm166 = vcmp.ge.f32.partialorder %v139, 0.0
  %vm167 = vcmp.ge.f32.partialorder %v141, 0.0
  %vm168 = vcmp.ge.f32.partialorder %v144, 0.0
  %vm169 = vcmp.ge.f32.partialorder %v146, 0.0
  %vm170 = vcmp.ge.f32.partialorder %v149, 0.0
  %vm171 = vcmp.ge.f32.partialorder %v151, 0.0
  %vm172 = vcmp.ge.f32.partialorder %v154, 0.0
  %vm173 = vcmp.ge.f32.partialorder %v156, 0.0
  %v174 = vmul.f32 %v119, 0.2
  %v175 = vmul.f32 %v121, 0.2
  %v176 = vmul.f32 %v124, 0.2
  %v177 = vmul.f32 %v126, 0.2
  %v178 = vmul.f32 %v129, 0.2
  %v179 = vmul.f32 %v131, 0.2
  %v180 = vmul.f32 %v134, 0.2
  %v181 = vmul.f32 %v136, 0.2
  %v182 = vmul.f32 %v139, 0.2
  %v183 = vmul.f32 %v141, 0.2
  %v184 = vmul.f32 %v144, 0.2
  %v185 = vmul.f32 %v146, 0.2
  %v186 = vmul.f32 %v149, 0.2
  %v187 = vmul.f32 %v151, 0.2
  %v188 = vmul.f32 %v154, 0.2
  %v189 = vmul.f32 %v156, 0.2
  %v190 = vsel %vm158, %v119, %v174
  %v191 = vsel %vm159, %v121, %v175
  %v192 = vsel %vm160, %v124, %v176
  %v193 = vsel %vm161, %v126, %v177
  %v194 = vsel %vm162, %v129, %v178
  %v195 = vsel %vm163, %v131, %v179
  %v196 = vsel %vm164, %v134, %v180
  %v197 = vsel %vm165, %v136, %v181
  %v198 = vsel %vm166, %v139, %v182
  %v199 = vsel %vm167, %v141, %v183
  %v200 = vsel %vm168, %v144, %v184
  %v201 = vsel %vm169, %v146, %v185
  %v202 = vsel %vm170, %v149, %v186
  %v203 = vsel %vm171, %v151, %v187
  %v204 = vsel %vm172, %v154, %v188
  %v205 = vsel %vm173, %v156, %v189
  %v206 = vld [vmem:[%s4] sm:$0xff]
  %v207 = vld [vmem:[%s4 + $0x8] sm:$0xff]
  %v208 = vpack.c.bf16 %v191, %v190
  %v209 = vpack.c.bf16 %v193, %v192
  %v210 = vpack.c.bf16 %v195, %v194
  %v211 = vpack.c.bf16 %v197, %v196
  %v212 = vpack.c.bf16 %v199, %v198
  %v213 = vpack.c.bf16 %v201, %v200
  %v214 = vpack.c.bf16 %v203, %v202
  %v215 = vpack.c.bf16 %v205, %v204
  %v216 = vpack.c.bf16 %v206, %v206
  %v217 = vpack.c.bf16 %v207, %v207
  %vm218 = vcmask 64512
  %v220 = vsel %vm218, %v208, 0
  %v223 = vsel %vm218, %v209, 0
  %v226 = vsel %vm218, %v210, 0
  %v229 = vsel %vm218, %v211, 0
  %v232 = vsel %vm218, %v212, 0
  %v235 = vsel %vm218, %v213, 0
  %v238 = vsel %vm218, %v214, 0
  %v241 = vsel %vm218, %v215, 0
  %vm243 = vcmask 1043456
  %v245 = vsel %vm243, %v216, 0
  %v248 = vsel %vm243, %v217, 0
  %250 = vmatpush.bf16.msra.mxu0 0
  %251 = vmatpush.bf16.msra.mxu0 0
  %252 = vmatpush.bf16.msra.mxu0 0
  %253 = vmatpush.bf16.msra.mxu0 0
  %254 = vmatpush.bf16.msra.mxu0 0
  %255 = vmatpush.bf16.msra.mxu0 0
  %256 = vmatpush.bf16.msra.mxu0 0
  %257 = vmatpush.bf16.msra.mxu0 %v245
  %258 = vmatmul.bf16.gmra.mxu0 %v220
  %v259 = vpop.f32.mrf.mxu0
  %v260 = vadd.f32 0.0, %v259
  %v261 = vpop.f32.mrf.mxu0
  %v262 = vadd.f32 0.0, %v261
  %263 = vmatmul.bf16.gmra.mxu0 %v223
  %v264 = vpop.f32.mrf.mxu0
  %v265 = vadd.f32 0.0, %v264
  %v266 = vpop.f32.mrf.mxu0
  %v267 = vadd.f32 0.0, %v266
  %268 = vmatmul.bf16.gmra.mxu0 %v226
  %v269 = vpop.f32.mrf.mxu0
  %v270 = vadd.f32 0.0, %v269
  %v271 = vpop.f32.mrf.mxu0
  %v272 = vadd.f32 0.0, %v271
  %273 = vmatmul.bf16.gmra.mxu0 %v229
  %v274 = vpop.f32.mrf.mxu0
  %v275 = vadd.f32 0.0, %v274
  %v276 = vpop.f32.mrf.mxu0
  %v277 = vadd.f32 0.0, %v276
  %278 = vmatmul.bf16.gmra.mxu0 %v232
  %v279 = vpop.f32.mrf.mxu0
  %v280 = vadd.f32 0.0, %v279
  %v281 = vpop.f32.mrf.mxu0
  %v282 = vadd.f32 0.0, %v281
  %283 = vmatmul.bf16.gmra.mxu0 %v235
  %v284 = vpop.f32.mrf.mxu0
  %v285 = vadd.f32 0.0, %v284
  %v286 = vpop.f32.mrf.mxu0
  %v287 = vadd.f32 0.0, %v286
  %288 = vmatmul.bf16.gmra.mxu0 %v238
  %v289 = vpop.f32.mrf.mxu0
  %v290 = vadd.f32 0.0, %v289
  %v291 = vpop.f32.mrf.mxu0
  %v292 = vadd.f32 0.0, %v291
  %293 = vmatmul.bf16.gmra.mxu0 %v241
  %v294 = vpop.f32.mrf.mxu0
  %v295 = vadd.f32 0.0, %v294
  %v296 = vpop.f32.mrf.mxu0
  %v297 = vadd.f32 0.0, %v296
  %298 = vdwg.mxu0
  %299 = vmatpush.bf16.msra.mxu0 0
  %300 = vmatpush.bf16.msra.mxu0 0
  %301 = vmatpush.bf16.msra.mxu0 0
  %302 = vmatpush.bf16.msra.mxu0 0
  %303 = vmatpush.bf16.msra.mxu0 0
  %304 = vmatpush.bf16.msra.mxu0 0
  %305 = vmatpush.bf16.msra.mxu0 0
  %306 = vmatpush.bf16.msra.mxu0 %v248
  %307 = vmatmul.bf16.gmra.mxu0 %v220
  %v308 = vpop.f32.mrf.mxu0
  %v309 = vadd.f32 0.0, %v308
  %v310 = vpop.f32.mrf.mxu0
  %v311 = vadd.f32 0.0, %v310
  %312 = vmatmul.bf16.gmra.mxu0 %v223
  %v313 = vpop.f32.mrf.mxu0
  %v314 = vadd.f32 0.0, %v313
  %v315 = vpop.f32.mrf.mxu0
  %v316 = vadd.f32 0.0, %v315
  %317 = vmatmul.bf16.gmra.mxu0 %v226
  %v318 = vpop.f32.mrf.mxu0
  %v319 = vadd.f32 0.0, %v318
  %v320 = vpop.f32.mrf.mxu0
  %v321 = vadd.f32 0.0, %v320
  %322 = vmatmul.bf16.gmra.mxu0 %v229
  %v323 = vpop.f32.mrf.mxu0
  %v324 = vadd.f32 0.0, %v323
  %v325 = vpop.f32.mrf.mxu0
  %v326 = vadd.f32 0.0, %v325
  %327 = vmatmul.bf16.gmra.mxu0 %v232
  %v328 = vpop.f32.mrf.mxu0
  %v329 = vadd.f32 0.0, %v328
  %v330 = vpop.f32.mrf.mxu0
  %v331 = vadd.f32 0.0, %v330
  %332 = vmatmul.bf16.gmra.mxu0 %v235
  %v333 = vpop.f32.mrf.mxu0
  %v334 = vadd.f32 0.0, %v333
  %v335 = vpop.f32.mrf.mxu0
  %v336 = vadd.f32 0.0, %v335
  %337 = vmatmul.bf16.gmra.mxu0 %v238
  %v338 = vpop.f32.mrf.mxu0
  %v339 = vadd.f32 0.0, %v338
  %v340 = vpop.f32.mrf.mxu0
  %v341 = vadd.f32 0.0, %v340
  %342 = vmatmul.bf16.gmra.mxu0 %v241
  %v343 = vpop.f32.mrf.mxu0
  %v344 = vadd.f32 0.0, %v343
  %v345 = vpop.f32.mrf.mxu0
  %v346 = vadd.f32 0.0, %v345
  %347 = vdwg.mxu0
  %v348 = vld [vmem:[%s3] sm:$0xff]
  %v349 = vld [vmem:[%s3 + $0x8] sm:$0xff]
  %v350 = vld [vmem:[%s3 + $0x10] sm:$0xff]
  %v351 = vld [vmem:[%s3 + $0x18] sm:$0xff]
  %s352 = scalar_lea.vmem %s3, 32
  %v353 = vld [vmem:[%s352] sm:$0xff]
  %v354 = vld [vmem:[%s352 + $0x8] sm:$0xff]
  %v355 = vld [vmem:[%s352 + $0x10] sm:$0xff]
  %v356 = vld [vmem:[%s352 + $0x18] sm:$0xff]
  %373 = vrot.lane.b32.xlu0 %v260, 112
  %v374 = vpop.permute.xlu0 %373
  %375 = vrot.lane.b32.xlu0 %v262, 112
  %v376 = vpop.permute.xlu0 %375
  %377 = vrot.lane.b32.xlu0 %v265, 112
  %v378 = vpop.permute.xlu0 %377
  %379 = vrot.lane.b32.xlu0 %v267, 112
  %v380 = vpop.permute.xlu0 %379
  %381 = vrot.lane.b32.xlu0 %v270, 112
  %v382 = vpop.permute.xlu0 %381
  %383 = vrot.lane.b32.xlu0 %v272, 112
  %v384 = vpop.permute.xlu0 %383
  %385 = vrot.lane.b32.xlu0 %v275, 112
  %v386 = vpop.permute.xlu0 %385
  %387 = vrot.lane.b32.xlu0 %v277, 112
  %v388 = vpop.permute.xlu0 %387
  %389 = vrot.lane.b32.xlu0 %v280, 112
  %v390 = vpop.permute.xlu0 %389
  %391 = vrot.lane.b32.xlu0 %v282, 112
  %v392 = vpop.permute.xlu0 %391
  %393 = vrot.lane.b32.xlu0 %v285, 112
  %v394 = vpop.permute.xlu0 %393
  %395 = vrot.lane.b32.xlu0 %v287, 112
  %v396 = vpop.permute.xlu0 %395
  %397 = vrot.lane.b32.xlu0 %v290, 112
  %v398 = vpop.permute.xlu0 %397
  %399 = vrot.lane.b32.xlu0 %v292, 112
  %v400 = vpop.permute.xlu0 %399
  %401 = vrot.lane.b32.xlu0 %v295, 112
  %v402 = vpop.permute.xlu0 %401
  %403 = vrot.lane.b32.xlu0 %v297, 112
  %v404 = vpop.permute.xlu0 %403
  %421 = vmatpush.msra.mxu0 %v404
  %422 = vmatpush.msra.mxu0 %v402
  %423 = vmatpush.msra.mxu0 %v400
  %424 = vmatpush.msra.mxu0 %v398
  %425 = vmatpush.msra.mxu0 %v396
  %426 = vmatpush.msra.mxu0 %v394
  %427 = vmatpush.msra.mxu0 %v392
  %428 = vmatpush.msra.mxu0 %v390
  %429 = vmatpush.msra.mxu0 %v388
  %430 = vmatpush.msra.mxu0 %v386
  %431 = vmatpush.msra.mxu0 %v384
  %432 = vmatpush.msra.mxu0 %v382
  %433 = vmatpush.msra.mxu0 %v380
  %434 = vmatpush.msra.mxu0 %v378
  %435 = vmatpush.msra.mxu0 %v376
  %436 = vmatpush.msra.mxu0 %v374
  %437 = vmatmul.f32.gmra.mxu0 %v353
  %v438 = vpop.f32.mrf.mxu0
  %v439 = vadd.f32 0.0, %v438
  %440 = vmatmul.f32.gmra.mxu0 %v354
  %v441 = vpop.f32.mrf.mxu0
  %v442 = vadd.f32 0.0, %v441
  %443 = vmatmul.f32.gmra.mxu0 %v355
  %v444 = vpop.f32.mrf.mxu0
  %v445 = vadd.f32 0.0, %v444
  %446 = vmatmul.f32.gmra.mxu0 %v356
  %v447 = vpop.f32.mrf.mxu0
  %v448 = vadd.f32 0.0, %v447
  %449 = vdwg.mxu0
  %450 = vmatpush.msra.mxu0 %v297
  %451 = vmatpush.msra.mxu0 %v295
  %452 = vmatpush.msra.mxu0 %v292
  %453 = vmatpush.msra.mxu0 %v290
  %454 = vmatpush.msra.mxu0 %v287
  %455 = vmatpush.msra.mxu0 %v285
  %456 = vmatpush.msra.mxu0 %v282
  %457 = vmatpush.msra.mxu0 %v280
  %458 = vmatpush.msra.mxu0 %v277
  %459 = vmatpush.msra.mxu0 %v275
  %460 = vmatpush.msra.mxu0 %v272
  %461 = vmatpush.msra.mxu0 %v270
  %462 = vmatpush.msra.mxu0 %v267
  %463 = vmatpush.msra.mxu0 %v265
  %464 = vmatpush.msra.mxu0 %v262
  %465 = vmatpush.msra.mxu0 %v260
  %466 = vmatmul.f32.gmra.mxu0 %v348
  %v467 = vpop.f32.mrf.mxu0
  %v468 = vadd.f32 %v439, %v467
  %469 = vmatmul.f32.gmra.mxu0 %v349
  %v470 = vpop.f32.mrf.mxu0
  %v471 = vadd.f32 %v442, %v470
  %472 = vmatmul.f32.gmra.mxu0 %v350
  %v473 = vpop.f32.mrf.mxu0
  %v474 = vadd.f32 %v445, %v473
  %475 = vmatmul.f32.gmra.mxu0 %v351
  %v476 = vpop.f32.mrf.mxu0
  %v477 = vadd.f32 %v448, %v476
  %478 = vdwg.mxu0
  %s479 = scalar_lea.vmem %s3, 64
  %v480 = vld [vmem:[%s479] sm:$0xff]
  %v481 = vld [vmem:[%s479 + $0x8] sm:$0xff]
  %v482 = vld [vmem:[%s479 + $0x10] sm:$0xff]
  %v483 = vld [vmem:[%s479 + $0x18] sm:$0xff]
  %484 = vrot.lane.b32.xlu0 %v260, 96
  %v485 = vpop.permute.xlu0 %484
  %486 = vrot.lane.b32.xlu0 %v262, 96
  %v487 = vpop.permute.xlu0 %486
  %488 = vrot.lane.b32.xlu0 %v265, 96
  %v489 = vpop.permute.xlu0 %488
  %490 = vrot.lane.b32.xlu0 %v267, 96
  %v491 = vpop.permute.xlu0 %490
  %492 = vrot.lane.b32.xlu0 %v270, 96
  %v493 = vpop.permute.xlu0 %492
  %494 = vrot.lane.b32.xlu0 %v272, 96
  %v495 = vpop.permute.xlu0 %494
  %496 = vrot.lane.b32.xlu0 %v275, 96
  %v497 = vpop.permute.xlu0 %496
  %498 = vrot.lane.b32.xlu0 %v277, 96
  %v499 = vpop.permute.xlu0 %498
  %500 = vrot.lane.b32.xlu0 %v280, 96
  %v501 = vpop.permute.xlu0 %500
  %502 = vrot.lane.b32.xlu0 %v282, 96
  %v503 = vpop.permute.xlu0 %502
  %504 = vrot.lane.b32.xlu0 %v285, 96
  %v505 = vpop.permute.xlu0 %504
  %506 = vrot.lane.b32.xlu0 %v287, 96
  %v507 = vpop.permute.xlu0 %506
  %508 = vrot.lane.b32.xlu0 %v290, 96
  %v509 = vpop.permute.xlu0 %508
  %510 = vrot.lane.b32.xlu0 %v292, 96
  %v511 = vpop.permute.xlu0 %510
  %512 = vrot.lane.b32.xlu0 %v295, 96
  %v513 = vpop.permute.xlu0 %512
  %514 = vrot.lane.b32.xlu0 %v297, 96
  %v515 = vpop.permute.xlu0 %514
  %532 = vmatpush.msra.mxu0 %v515
  %533 = vmatpush.msra.mxu0 %v513
  %534 = vmatpush.msra.mxu0 %v511
  %535 = vmatpush.msra.mxu0 %v509
  %536 = vmatpush.msra.mxu0 %v507
  %537 = vmatpush.msra.mxu0 %v505
  %538 = vmatpush.msra.mxu0 %v503
  %539 = vmatpush.msra.mxu0 %v501
  %540 = vmatpush.msra.mxu0 %v499
  %541 = vmatpush.msra.mxu0 %v497
  %542 = vmatpush.msra.mxu0 %v495
  %543 = vmatpush.msra.mxu0 %v493
  %544 = vmatpush.msra.mxu0 %v491
  %545 = vmatpush.msra.mxu0 %v489
  %546 = vmatpush.msra.mxu0 %v487
  %547 = vmatpush.msra.mxu0 %v485
  %548 = vmatmul.f32.gmra.mxu0 %v480
  %v549 = vpop.f32.mrf.mxu0
  %v550 = vadd.f32 0.0, %v549
  %551 = vmatmul.f32.gmra.mxu0 %v481
  %v552 = vpop.f32.mrf.mxu0
  %v553 = vadd.f32 0.0, %v552
  %554 = vmatmul.f32.gmra.mxu0 %v482
  %v555 = vpop.f32.mrf.mxu0
  %v556 = vadd.f32 0.0, %v555
  %557 = vmatmul.f32.gmra.mxu0 %v483
  %v558 = vpop.f32.mrf.mxu0
  %v559 = vadd.f32 0.0, %v558
  %560 = vdwg.mxu0
  %v561 = vadd.f32 %v468, %v550
  %v562 = vadd.f32 %v471, %v553
  %v563 = vadd.f32 %v474, %v556
  %v564 = vadd.f32 %v477, %v559
  %s565 = scalar_lea.vmem %s3, 96
  %v566 = vld [vmem:[%s565] sm:$0xff]
  %v567 = vld [vmem:[%s565 + $0x8] sm:$0xff]
  %v568 = vld [vmem:[%s565 + $0x10] sm:$0xff]
  %v569 = vld [vmem:[%s565 + $0x18] sm:$0xff]
  %570 = vrot.lane.b32.xlu0 %v260, 80
  %v571 = vpop.permute.xlu0 %570
  %572 = vrot.lane.b32.xlu0 %v262, 80
  %v573 = vpop.permute.xlu0 %572
  %574 = vrot.lane.b32.xlu0 %v265, 80
  %v575 = vpop.permute.xlu0 %574
  %576 = vrot.lane.b32.xlu0 %v267, 80
  %v577 = vpop.permute.xlu0 %576
  %578 = vrot.lane.b32.xlu0 %v270, 80
  %v579 = vpop.permute.xlu0 %578
  %580 = vrot.lane.b32.xlu0 %v272, 80
  %v581 = vpop.permute.xlu0 %580
  %582 = vrot.lane.b32.xlu0 %v275, 80
  %v583 = vpop.permute.xlu0 %582
  %584 = vrot.lane.b32.xlu0 %v277, 80
  %v585 = vpop.permute.xlu0 %584
  %586 = vrot.lane.b32.xlu0 %v280, 80
  %v587 = vpop.permute.xlu0 %586
  %588 = vrot.lane.b32.xlu0 %v282, 80
  %v589 = vpop.permute.xlu0 %588
  %590 = vrot.lane.b32.xlu0 %v285, 80
  %v591 = vpop.permute.xlu0 %590
  %592 = vrot.lane.b32.xlu0 %v287, 80
  %v593 = vpop.permute.xlu0 %592
  %594 = vrot.lane.b32.xlu0 %v290, 80
  %v595 = vpop.permute.xlu0 %594
  %596 = vrot.lane.b32.xlu0 %v292, 80
  %v597 = vpop.permute.xlu0 %596
  %598 = vrot.lane.b32.xlu0 %v295, 80
  %v599 = vpop.permute.xlu0 %598
  %600 = vrot.lane.b32.xlu0 %v297, 80
  %v601 = vpop.permute.xlu0 %600
  %618 = vmatpush.msra.mxu0 %v601
  %619 = vmatpush.msra.mxu0 %v599
  %620 = vmatpush.msra.mxu0 %v597
  %621 = vmatpush.msra.mxu0 %v595
  %622 = vmatpush.msra.mxu0 %v593
  %623 = vmatpush.msra.mxu0 %v591
  %624 = vmatpush.msra.mxu0 %v589
  %625 = vmatpush.msra.mxu0 %v587
  %626 = vmatpush.msra.mxu0 %v585
  %627 = vmatpush.msra.mxu0 %v583
  %628 = vmatpush.msra.mxu0 %v581
  %629 = vmatpush.msra.mxu0 %v579
  %630 = vmatpush.msra.mxu0 %v577
  %631 = vmatpush.msra.mxu0 %v575
  %632 = vmatpush.msra.mxu0 %v573
  %633 = vmatpush.msra.mxu0 %v571
  %634 = vmatmul.f32.gmra.mxu0 %v566
  %v635 = vpop.f32.mrf.mxu0
  %v636 = vadd.f32 0.0, %v635
  %637 = vmatmul.f32.gmra.mxu0 %v567
  %v638 = vpop.f32.mrf.mxu0
  %v639 = vadd.f32 0.0, %v638
  %640 = vmatmul.f32.gmra.mxu0 %v568
  %v641 = vpop.f32.mrf.mxu0
  %v642 = vadd.f32 0.0, %v641
  %643 = vmatmul.f32.gmra.mxu0 %v569
  %v644 = vpop.f32.mrf.mxu0
  %v645 = vadd.f32 0.0, %v644
  %646 = vdwg.mxu0
  %v647 = vadd.f32 %v561, %v636
  %v648 = vadd.f32 %v562, %v639
  %v649 = vadd.f32 %v563, %v642
  %v650 = vadd.f32 %v564, %v645
  %s651 = scalar_lea.vmem %s3, 128
  %v652 = vld [vmem:[%s651] sm:$0xff]
  %v653 = vld [vmem:[%s651 + $0x8] sm:$0xff]
  %v654 = vld [vmem:[%s651 + $0x10] sm:$0xff]
  %v655 = vld [vmem:[%s651 + $0x18] sm:$0xff]
  %656 = vrot.lane.b32.xlu0 %v260, 64
  %v657 = vpop.permute.xlu0 %656
  %658 = vrot.lane.b32.xlu0 %v262, 64
  %v659 = vpop.permute.xlu0 %658
  %660 = vrot.lane.b32.xlu0 %v265, 64
  %v661 = vpop.permute.xlu0 %660
  %662 = vrot.lane.b32.xlu0 %v267, 64
  %v663 = vpop.permute.xlu0 %662
  %664 = vrot.lane.b32.xlu0 %v270, 64
  %v665 = vpop.permute.xlu0 %664
  %666 = vrot.lane.b32.xlu0 %v272, 64
  %v667 = vpop.permute.xlu0 %666
  %668 = vrot.lane.b32.xlu0 %v275, 64
  %v669 = vpop.permute.xlu0 %668
  %670 = vrot.lane.b32.xlu0 %v277, 64
  %v671 = vpop.permute.xlu0 %670
  %672 = vrot.lane.b32.xlu0 %v280, 64
  %v673 = vpop.permute.xlu0 %672
  %674 = vrot.lane.b32.xlu0 %v282, 64
  %v675 = vpop.permute.xlu0 %674
  %676 = vrot.lane.b32.xlu0 %v285, 64
  %v677 = vpop.permute.xlu0 %676
  %678 = vrot.lane.b32.xlu0 %v287, 64
  %v679 = vpop.permute.xlu0 %678
  %680 = vrot.lane.b32.xlu0 %v290, 64
  %v681 = vpop.permute.xlu0 %680
  %682 = vrot.lane.b32.xlu0 %v292, 64
  %v683 = vpop.permute.xlu0 %682
  %684 = vrot.lane.b32.xlu0 %v295, 64
  %v685 = vpop.permute.xlu0 %684
  %686 = vrot.lane.b32.xlu0 %v297, 64
  %v687 = vpop.permute.xlu0 %686
  %704 = vmatpush.msra.mxu0 %v687
  %705 = vmatpush.msra.mxu0 %v685
  %706 = vmatpush.msra.mxu0 %v683
  %707 = vmatpush.msra.mxu0 %v681
  %708 = vmatpush.msra.mxu0 %v679
  %709 = vmatpush.msra.mxu0 %v677
  %710 = vmatpush.msra.mxu0 %v675
  %711 = vmatpush.msra.mxu0 %v673
  %712 = vmatpush.msra.mxu0 %v671
  %713 = vmatpush.msra.mxu0 %v669
  %714 = vmatpush.msra.mxu0 %v667
  %715 = vmatpush.msra.mxu0 %v665
  %716 = vmatpush.msra.mxu0 %v663
  %717 = vmatpush.msra.mxu0 %v661
  %718 = vmatpush.msra.mxu0 %v659
  %719 = vmatpush.msra.mxu0 %v657
  %720 = vmatmul.f32.gmra.mxu0 %v652
  %v721 = vpop.f32.mrf.mxu0
  %v722 = vadd.f32 0.0, %v721
  %723 = vmatmul.f32.gmra.mxu0 %v653
  %v724 = vpop.f32.mrf.mxu0
  %v725 = vadd.f32 0.0, %v724
  %726 = vmatmul.f32.gmra.mxu0 %v654
  %v727 = vpop.f32.mrf.mxu0
  %v728 = vadd.f32 0.0, %v727
  %729 = vmatmul.f32.gmra.mxu0 %v655
  %v730 = vpop.f32.mrf.mxu0
  %v731 = vadd.f32 0.0, %v730
  %732 = vdwg.mxu0
  %v733 = vadd.f32 %v647, %v722
  %v734 = vadd.f32 %v648, %v725
  %v735 = vadd.f32 %v649, %v728
  %v736 = vadd.f32 %v650, %v731
  %s737 = scalar_lea.vmem %s3, 160
  %v738 = vld [vmem:[%s737] sm:$0xff]
  %v739 = vld [vmem:[%s737 + $0x8] sm:$0xff]
  %v740 = vld [vmem:[%s737 + $0x10] sm:$0xff]
  %v741 = vld [vmem:[%s737 + $0x18] sm:$0xff]
  %742 = vrot.lane.b32.xlu0 %v260, 48
  %v743 = vpop.permute.xlu0 %742
  %744 = vrot.lane.b32.xlu0 %v262, 48
  %v745 = vpop.permute.xlu0 %744
  %746 = vrot.lane.b32.xlu0 %v265, 48
  %v747 = vpop.permute.xlu0 %746
  %748 = vrot.lane.b32.xlu0 %v267, 48
  %v749 = vpop.permute.xlu0 %748
  %750 = vrot.lane.b32.xlu0 %v270, 48
  %v751 = vpop.permute.xlu0 %750
  %752 = vrot.lane.b32.xlu0 %v272, 48
  %v753 = vpop.permute.xlu0 %752
  %754 = vrot.lane.b32.xlu0 %v275, 48
  %v755 = vpop.permute.xlu0 %754
  %756 = vrot.lane.b32.xlu0 %v277, 48
  %v757 = vpop.permute.xlu0 %756
  %758 = vrot.lane.b32.xlu0 %v280, 48
  %v759 = vpop.permute.xlu0 %758
  %760 = vrot.lane.b32.xlu0 %v282, 48
  %v761 = vpop.permute.xlu0 %760
  %762 = vrot.lane.b32.xlu0 %v285, 48
  %v763 = vpop.permute.xlu0 %762
  %764 = vrot.lane.b32.xlu0 %v287, 48
  %v765 = vpop.permute.xlu0 %764
  %766 = vrot.lane.b32.xlu0 %v290, 48
  %v767 = vpop.permute.xlu0 %766
  %768 = vrot.lane.b32.xlu0 %v292, 48
  %v769 = vpop.permute.xlu0 %768
  %770 = vrot.lane.b32.xlu0 %v295, 48
  %v771 = vpop.permute.xlu0 %770
  %772 = vrot.lane.b32.xlu0 %v297, 48
  %v773 = vpop.permute.xlu0 %772
  %790 = vmatpush.msra.mxu0 %v773
  %791 = vmatpush.msra.mxu0 %v771
  %792 = vmatpush.msra.mxu0 %v769
  %793 = vmatpush.msra.mxu0 %v767
  %794 = vmatpush.msra.mxu0 %v765
  %795 = vmatpush.msra.mxu0 %v763
  %796 = vmatpush.msra.mxu0 %v761
  %797 = vmatpush.msra.mxu0 %v759
  %798 = vmatpush.msra.mxu0 %v757
  %799 = vmatpush.msra.mxu0 %v755
  %800 = vmatpush.msra.mxu0 %v753
  %801 = vmatpush.msra.mxu0 %v751
  %802 = vmatpush.msra.mxu0 %v749
  %803 = vmatpush.msra.mxu0 %v747
  %804 = vmatpush.msra.mxu0 %v745
  %805 = vmatpush.msra.mxu0 %v743
  %806 = vmatmul.f32.gmra.mxu0 %v738
  %v807 = vpop.f32.mrf.mxu0
  %v808 = vadd.f32 0.0, %v807
  %809 = vmatmul.f32.gmra.mxu0 %v739
  %v810 = vpop.f32.mrf.mxu0
  %v811 = vadd.f32 0.0, %v810
  %812 = vmatmul.f32.gmra.mxu0 %v740
  %v813 = vpop.f32.mrf.mxu0
  %v814 = vadd.f32 0.0, %v813
  %815 = vmatmul.f32.gmra.mxu0 %v741
  %v816 = vpop.f32.mrf.mxu0
  %v817 = vadd.f32 0.0, %v816
  %818 = vdwg.mxu0
  %v819 = vadd.f32 %v733, %v808
  %v820 = vadd.f32 %v734, %v811
  %v821 = vadd.f32 %v735, %v814
  %v822 = vadd.f32 %v736, %v817
  %s823 = scalar_lea.vmem %s3, 192
  %v824 = vld [vmem:[%s823] sm:$0xff]
  %v825 = vld [vmem:[%s823 + $0x8] sm:$0xff]
  %v826 = vld [vmem:[%s823 + $0x10] sm:$0xff]
  %v827 = vld [vmem:[%s823 + $0x18] sm:$0xff]
  %828 = vrot.lane.b32.xlu0 %v260, 32
  %v829 = vpop.permute.xlu0 %828
  %830 = vrot.lane.b32.xlu0 %v262, 32
  %v831 = vpop.permute.xlu0 %830
  %832 = vrot.lane.b32.xlu0 %v265, 32
  %v833 = vpop.permute.xlu0 %832
  %834 = vrot.lane.b32.xlu0 %v267, 32
  %v835 = vpop.permute.xlu0 %834
  %836 = vrot.lane.b32.xlu0 %v270, 32
  %v837 = vpop.permute.xlu0 %836
  %838 = vrot.lane.b32.xlu0 %v272, 32
  %v839 = vpop.permute.xlu0 %838
  %840 = vrot.lane.b32.xlu0 %v275, 32
  %v841 = vpop.permute.xlu0 %840
  %842 = vrot.lane.b32.xlu0 %v277, 32
  %v843 = vpop.permute.xlu0 %842
  %844 = vrot.lane.b32.xlu0 %v280, 32
  %v845 = vpop.permute.xlu0 %844
  %846 = vrot.lane.b32.xlu0 %v282, 32
  %v847 = vpop.permute.xlu0 %846
  %848 = vrot.lane.b32.xlu0 %v285, 32
  %v849 = vpop.permute.xlu0 %848
  %850 = vrot.lane.b32.xlu0 %v287, 32
  %v851 = vpop.permute.xlu0 %850
  %852 = vrot.lane.b32.xlu0 %v290, 32
  %v853 = vpop.permute.xlu0 %852
  %854 = vrot.lane.b32.xlu0 %v292, 32
  %v855 = vpop.permute.xlu0 %854
  %856 = vrot.lane.b32.xlu0 %v295, 32
  %v857 = vpop.permute.xlu0 %856
  %858 = vrot.lane.b32.xlu0 %v297, 32
  %v859 = vpop.permute.xlu0 %858
  %876 = vmatpush.msra.mxu0 %v859
  %877 = vmatpush.msra.mxu0 %v857
  %878 = vmatpush.msra.mxu0 %v855
  %879 = vmatpush.msra.mxu0 %v853
  %880 = vmatpush.msra.mxu0 %v851
  %881 = vmatpush.msra.mxu0 %v849
  %882 = vmatpush.msra.mxu0 %v847
  %883 = vmatpush.msra.mxu0 %v845
  %884 = vmatpush.msra.mxu0 %v843
  %885 = vmatpush.msra.mxu0 %v841
  %886 = vmatpush.msra.mxu0 %v839
  %887 = vmatpush.msra.mxu0 %v837
  %888 = vmatpush.msra.mxu0 %v835
  %889 = vmatpush.msra.mxu0 %v833
  %890 = vmatpush.msra.mxu0 %v831
  %891 = vmatpush.msra.mxu0 %v829
  %892 = vmatmul.f32.gmra.mxu0 %v824
  %v893 = vpop.f32.mrf.mxu0
  %v894 = vadd.f32 0.0, %v893
  %895 = vmatmul.f32.gmra.mxu0 %v825
  %v896 = vpop.f32.mrf.mxu0
  %v897 = vadd.f32 0.0, %v896
  %898 = vmatmul.f32.gmra.mxu0 %v826
  %v899 = vpop.f32.mrf.mxu0
  %v900 = vadd.f32 0.0, %v899
  %901 = vmatmul.f32.gmra.mxu0 %v827
  %v902 = vpop.f32.mrf.mxu0
  %v903 = vadd.f32 0.0, %v902
  %904 = vdwg.mxu0
  %v905 = vadd.f32 %v819, %v894
  %v906 = vadd.f32 %v820, %v897
  %v907 = vadd.f32 %v821, %v900
  %v908 = vadd.f32 %v822, %v903
  %s909 = scalar_lea.vmem %s3, 224
  %v910 = vld [vmem:[%s909] sm:$0xff]
  %v911 = vld [vmem:[%s909 + $0x8] sm:$0xff]
  %v912 = vld [vmem:[%s909 + $0x10] sm:$0xff]
  %v913 = vld [vmem:[%s909 + $0x18] sm:$0xff]
  %914 = vrot.lane.b32.xlu0 %v260, 16
  %v915 = vpop.permute.xlu0 %914
  %916 = vrot.lane.b32.xlu0 %v262, 16
  %v917 = vpop.permute.xlu0 %916
  %918 = vrot.lane.b32.xlu0 %v265, 16
  %v919 = vpop.permute.xlu0 %918
  %920 = vrot.lane.b32.xlu0 %v267, 16
  %v921 = vpop.permute.xlu0 %920
  %922 = vrot.lane.b32.xlu0 %v270, 16
  %v923 = vpop.permute.xlu0 %922
  %924 = vrot.lane.b32.xlu0 %v272, 16
  %v925 = vpop.permute.xlu0 %924
  %926 = vrot.lane.b32.xlu0 %v275, 16
  %v927 = vpop.permute.xlu0 %926
  %928 = vrot.lane.b32.xlu0 %v277, 16
  %v929 = vpop.permute.xlu0 %928
  %930 = vrot.lane.b32.xlu0 %v280, 16
  %v931 = vpop.permute.xlu0 %930
  %932 = vrot.lane.b32.xlu0 %v282, 16
  %v933 = vpop.permute.xlu0 %932
  %934 = vrot.lane.b32.xlu0 %v285, 16
  %v935 = vpop.permute.xlu0 %934
  %936 = vrot.lane.b32.xlu0 %v287, 16
  %v937 = vpop.permute.xlu0 %936
  %938 = vrot.lane.b32.xlu0 %v290, 16
  %v939 = vpop.permute.xlu0 %938
  %940 = vrot.lane.b32.xlu0 %v292, 16
  %v941 = vpop.permute.xlu0 %940
  %942 = vrot.lane.b32.xlu0 %v295, 16
  %v943 = vpop.permute.xlu0 %942
  %944 = vrot.lane.b32.xlu0 %v297, 16
  %v945 = vpop.permute.xlu0 %944
  %962 = vmatpush.msra.mxu0 %v945
  %963 = vmatpush.msra.mxu0 %v943
  %964 = vmatpush.msra.mxu0 %v941
  %965 = vmatpush.msra.mxu0 %v939
  %966 = vmatpush.msra.mxu0 %v937
  %967 = vmatpush.msra.mxu0 %v935
  %968 = vmatpush.msra.mxu0 %v933
  %969 = vmatpush.msra.mxu0 %v931
  %970 = vmatpush.msra.mxu0 %v929
  %971 = vmatpush.msra.mxu0 %v927
  %972 = vmatpush.msra.mxu0 %v925
  %973 = vmatpush.msra.mxu0 %v923
  %974 = vmatpush.msra.mxu0 %v921
  %975 = vmatpush.msra.mxu0 %v919
  %976 = vmatpush.msra.mxu0 %v917
  %977 = vmatpush.msra.mxu0 %v915
  %978 = vmatmul.f32.gmra.mxu0 %v910
  %v979 = vpop.f32.mrf.mxu0
  %v980 = vadd.f32 0.0, %v979
  %981 = vmatmul.f32.gmra.mxu0 %v911
  %v982 = vpop.f32.mrf.mxu0
  %v983 = vadd.f32 0.0, %v982
  %984 = vmatmul.f32.gmra.mxu0 %v912
  %v985 = vpop.f32.mrf.mxu0
  %v986 = vadd.f32 0.0, %v985
  %987 = vmatmul.f32.gmra.mxu0 %v913
  %v988 = vpop.f32.mrf.mxu0
  %v989 = vadd.f32 0.0, %v988
  %990 = vdwg.mxu0
  %v991 = vadd.f32 %v905, %v980
  %v992 = vadd.f32 %v906, %v983
  %v993 = vadd.f32 %v907, %v986
  %v994 = vadd.f32 %v908, %v989
  %s995 = scalar_lea.vmem %s3, 256
  %v996 = vld [vmem:[%s995] sm:$0xff]
  %v997 = vld [vmem:[%s995 + $0x8] sm:$0xff]
  %v998 = vld [vmem:[%s995 + $0x10] sm:$0xff]
  %v999 = vld [vmem:[%s995 + $0x18] sm:$0xff]
  %1000 = vmatpush.msra.mxu0 %v346
  %1001 = vmatpush.msra.mxu0 %v344
  %1002 = vmatpush.msra.mxu0 %v341
  %1003 = vmatpush.msra.mxu0 %v339
  %1004 = vmatpush.msra.mxu0 %v336
  %1005 = vmatpush.msra.mxu0 %v334
  %1006 = vmatpush.msra.mxu0 %v331
  %1007 = vmatpush.msra.mxu0 %v329
  %1008 = vmatpush.msra.mxu0 %v326
  %1009 = vmatpush.msra.mxu0 %v324
  %1010 = vmatpush.msra.mxu0 %v321
  %1011 = vmatpush.msra.mxu0 %v319
  %1012 = vmatpush.msra.mxu0 %v316
  %1013 = vmatpush.msra.mxu0 %v314
  %1014 = vmatpush.msra.mxu0 %v311
  %1015 = vmatpush.msra.mxu0 %v309
  %1016 = vmatmul.f32.gmra.mxu0 %v996
  %v1017 = vpop.f32.mrf.mxu0
  %v1018 = vadd.f32 0.0, %v1017
  %1019 = vmatmul.f32.gmra.mxu0 %v997
  %v1020 = vpop.f32.mrf.mxu0
  %v1021 = vadd.f32 0.0, %v1020
  %1022 = vmatmul.f32.gmra.mxu0 %v998
  %v1023 = vpop.f32.mrf.mxu0
  %v1024 = vadd.f32 0.0, %v1023
  %1025 = vmatmul.f32.gmra.mxu0 %v999
  %v1026 = vpop.f32.mrf.mxu0
  %v1027 = vadd.f32 0.0, %v1026
  %1028 = vdwg.mxu0
  %v1029 = vadd.f32 %v991, %v1018
  %v1030 = vadd.f32 %v992, %v1021
  %v1031 = vadd.f32 %v993, %v1024
  %v1032 = vadd.f32 %v994, %v1027
  %s1033 = scalar_lea.vmem %s3, 288
  %v1034 = vld [vmem:[%s1033] sm:$0xff]
  %v1035 = vld [vmem:[%s1033 + $0x8] sm:$0xff]
  %v1036 = vld [vmem:[%s1033 + $0x10] sm:$0xff]
  %v1037 = vld [vmem:[%s1033 + $0x18] sm:$0xff]
  %1054 = vrot.lane.b32.xlu0 %v309, 112
  %v1055 = vpop.permute.xlu0 %1054
  %1056 = vrot.lane.b32.xlu0 %v311, 112
  %v1057 = vpop.permute.xlu0 %1056
  %1058 = vrot.lane.b32.xlu0 %v314, 112
  %v1059 = vpop.permute.xlu0 %1058
  %1060 = vrot.lane.b32.xlu0 %v316, 112
  %v1061 = vpop.permute.xlu0 %1060
  %1062 = vrot.lane.b32.xlu0 %v319, 112
  %v1063 = vpop.permute.xlu0 %1062
  %1064 = vrot.lane.b32.xlu0 %v321, 112
  %v1065 = vpop.permute.xlu0 %1064
  %1066 = vrot.lane.b32.xlu0 %v324, 112
  %v1067 = vpop.permute.xlu0 %1066
  %1068 = vrot.lane.b32.xlu0 %v326, 112
  %v1069 = vpop.permute.xlu0 %1068
  %1070 = vrot.lane.b32.xlu0 %v329, 112
  %v1071 = vpop.permute.xlu0 %1070
  %1072 = vrot.lane.b32.xlu0 %v331, 112
  %v1073 = vpop.permute.xlu0 %1072
  %1074 = vrot.lane.b32.xlu0 %v334, 112
  %v1075 = vpop.permute.xlu0 %1074
  %1076 = vrot.lane.b32.xlu0 %v336, 112
  %v1077 = vpop.permute.xlu0 %1076
  %1078 = vrot.lane.b32.xlu0 %v339, 112
  %v1079 = vpop.permute.xlu0 %1078
  %1080 = vrot.lane.b32.xlu0 %v341, 112
  %v1081 = vpop.permute.xlu0 %1080
  %1082 = vrot.lane.b32.xlu0 %v344, 112
  %v1083 = vpop.permute.xlu0 %1082
  %1084 = vrot.lane.b32.xlu0 %v346, 112
  %v1085 = vpop.permute.xlu0 %1084
  %1102 = vmatpush.msra.mxu0 %v1085
  %1103 = vmatpush.msra.mxu0 %v1083
  %1104 = vmatpush.msra.mxu0 %v1081
  %1105 = vmatpush.msra.mxu0 %v1079
  %1106 = vmatpush.msra.mxu0 %v1077
  %1107 = vmatpush.msra.mxu0 %v1075
  %1108 = vmatpush.msra.mxu0 %v1073
  %1109 = vmatpush.msra.mxu0 %v1071
  %1110 = vmatpush.msra.mxu0 %v1069
  %1111 = vmatpush.msra.mxu0 %v1067
  %1112 = vmatpush.msra.mxu0 %v1065
  %1113 = vmatpush.msra.mxu0 %v1063
  %1114 = vmatpush.msra.mxu0 %v1061
  %1115 = vmatpush.msra.mxu0 %v1059
  %1116 = vmatpush.msra.mxu0 %v1057
  %1117 = vmatpush.msra.mxu0 %v1055
  %1118 = vmatmul.f32.gmra.mxu0 %v1034
  %v1119 = vpop.f32.mrf.mxu0
  %v1120 = vadd.f32 0.0, %v1119
  %1121 = vmatmul.f32.gmra.mxu0 %v1035
  %v1122 = vpop.f32.mrf.mxu0
  %v1123 = vadd.f32 0.0, %v1122
  %1124 = vmatmul.f32.gmra.mxu0 %v1036
  %v1125 = vpop.f32.mrf.mxu0
  %v1126 = vadd.f32 0.0, %v1125
  %1127 = vmatmul.f32.gmra.mxu0 %v1037
  %v1128 = vpop.f32.mrf.mxu0
  %v1129 = vadd.f32 0.0, %v1128
  %1130 = vdwg.mxu0
  %v1131 = vadd.f32 %v1029, %v1120
  %v1132 = vadd.f32 %v1030, %v1123
  %v1133 = vadd.f32 %v1031, %v1126
  %v1134 = vadd.f32 %v1032, %v1129
  %s1135 = scalar_lea.vmem %s3, 320
  %v1136 = vld [vmem:[%s1135] sm:$0xff]
  %v1137 = vld [vmem:[%s1135 + $0x8] sm:$0xff]
  %v1138 = vld [vmem:[%s1135 + $0x10] sm:$0xff]
  %v1139 = vld [vmem:[%s1135 + $0x18] sm:$0xff]
  %1140 = vrot.lane.b32.xlu0 %v309, 96
  %v1141 = vpop.permute.xlu0 %1140
  %1142 = vrot.lane.b32.xlu0 %v311, 96
  %v1143 = vpop.permute.xlu0 %1142
  %1144 = vrot.lane.b32.xlu0 %v314, 96
  %v1145 = vpop.permute.xlu0 %1144
  %1146 = vrot.lane.b32.xlu0 %v316, 96
  %v1147 = vpop.permute.xlu0 %1146
  %1148 = vrot.lane.b32.xlu0 %v319, 96
  %v1149 = vpop.permute.xlu0 %1148
  %1150 = vrot.lane.b32.xlu0 %v321, 96
  %v1151 = vpop.permute.xlu0 %1150
  %1152 = vrot.lane.b32.xlu0 %v324, 96
  %v1153 = vpop.permute.xlu0 %1152
  %1154 = vrot.lane.b32.xlu0 %v326, 96
  %v1155 = vpop.permute.xlu0 %1154
  %1156 = vrot.lane.b32.xlu0 %v329, 96
  %v1157 = vpop.permute.xlu0 %1156
  %1158 = vrot.lane.b32.xlu0 %v331, 96
  %v1159 = vpop.permute.xlu0 %1158
  %1160 = vrot.lane.b32.xlu0 %v334, 96
  %v1161 = vpop.permute.xlu0 %1160
  %1162 = vrot.lane.b32.xlu0 %v336, 96
  %v1163 = vpop.permute.xlu0 %1162
  %1164 = vrot.lane.b32.xlu0 %v339, 96
  %v1165 = vpop.permute.xlu0 %1164
  %1166 = vrot.lane.b32.xlu0 %v341, 96
  %v1167 = vpop.permute.xlu0 %1166
  %1168 = vrot.lane.b32.xlu0 %v344, 96
  %v1169 = vpop.permute.xlu0 %1168
  %1170 = vrot.lane.b32.xlu0 %v346, 96
  %v1171 = vpop.permute.xlu0 %1170
  %1188 = vmatpush.msra.mxu0 %v1171
  %1189 = vmatpush.msra.mxu0 %v1169
  %1190 = vmatpush.msra.mxu0 %v1167
  %1191 = vmatpush.msra.mxu0 %v1165
  %1192 = vmatpush.msra.mxu0 %v1163
  %1193 = vmatpush.msra.mxu0 %v1161
  %1194 = vmatpush.msra.mxu0 %v1159
  %1195 = vmatpush.msra.mxu0 %v1157
  %1196 = vmatpush.msra.mxu0 %v1155
  %1197 = vmatpush.msra.mxu0 %v1153
  %1198 = vmatpush.msra.mxu0 %v1151
  %1199 = vmatpush.msra.mxu0 %v1149
  %1200 = vmatpush.msra.mxu0 %v1147
  %1201 = vmatpush.msra.mxu0 %v1145
  %1202 = vmatpush.msra.mxu0 %v1143
  %1203 = vmatpush.msra.mxu0 %v1141
  %1204 = vmatmul.f32.gmra.mxu0 %v1136
  %v1205 = vpop.f32.mrf.mxu0
  %v1206 = vadd.f32 0.0, %v1205
  %1207 = vmatmul.f32.gmra.mxu0 %v1137
  %v1208 = vpop.f32.mrf.mxu0
  %v1209 = vadd.f32 0.0, %v1208
  %1210 = vmatmul.f32.gmra.mxu0 %v1138
  %v1211 = vpop.f32.mrf.mxu0
  %v1212 = vadd.f32 0.0, %v1211
  %1213 = vmatmul.f32.gmra.mxu0 %v1139
  %v1214 = vpop.f32.mrf.mxu0
  %v1215 = vadd.f32 0.0, %v1214
  %1216 = vdwg.mxu0
  %v1217 = vadd.f32 %v1131, %v1206
  %v1218 = vadd.f32 %v1132, %v1209
  %v1219 = vadd.f32 %v1133, %v1212
  %v1220 = vadd.f32 %v1134, %v1215
  %s1221 = scalar_lea.vmem %s3, 352
  %v1222 = vld [vmem:[%s1221] sm:$0xff]
  %v1223 = vld [vmem:[%s1221 + $0x8] sm:$0xff]
  %v1224 = vld [vmem:[%s1221 + $0x10] sm:$0xff]
  %v1225 = vld [vmem:[%s1221 + $0x18] sm:$0xff]
  %1226 = vrot.lane.b32.xlu0 %v309, 80
  %v1227 = vpop.permute.xlu0 %1226
  %1228 = vrot.lane.b32.xlu0 %v311, 80
  %v1229 = vpop.permute.xlu0 %1228
  %1230 = vrot.lane.b32.xlu0 %v314, 80
  %v1231 = vpop.permute.xlu0 %1230
  %1232 = vrot.lane.b32.xlu0 %v316, 80
  %v1233 = vpop.permute.xlu0 %1232
  %1234 = vrot.lane.b32.xlu0 %v319, 80
  %v1235 = vpop.permute.xlu0 %1234
  %1236 = vrot.lane.b32.xlu0 %v321, 80
  %v1237 = vpop.permute.xlu0 %1236
  %1238 = vrot.lane.b32.xlu0 %v324, 80
  %v1239 = vpop.permute.xlu0 %1238
  %1240 = vrot.lane.b32.xlu0 %v326, 80
  %v1241 = vpop.permute.xlu0 %1240
  %1242 = vrot.lane.b32.xlu0 %v329, 80
  %v1243 = vpop.permute.xlu0 %1242
  %1244 = vrot.lane.b32.xlu0 %v331, 80
  %v1245 = vpop.permute.xlu0 %1244
  %1246 = vrot.lane.b32.xlu0 %v334, 80
  %v1247 = vpop.permute.xlu0 %1246
  %1248 = vrot.lane.b32.xlu0 %v336, 80
  %v1249 = vpop.permute.xlu0 %1248
  %1250 = vrot.lane.b32.xlu0 %v339, 80
  %v1251 = vpop.permute.xlu0 %1250
  %1252 = vrot.lane.b32.xlu0 %v341, 80
  %v1253 = vpop.permute.xlu0 %1252
  %1254 = vrot.lane.b32.xlu0 %v344, 80
  %v1255 = vpop.permute.xlu0 %1254
  %1256 = vrot.lane.b32.xlu0 %v346, 80
  %v1257 = vpop.permute.xlu0 %1256
  %1274 = vmatpush.msra.mxu0 %v1257
  %1275 = vmatpush.msra.mxu0 %v1255
  %1276 = vmatpush.msra.mxu0 %v1253
  %1277 = vmatpush.msra.mxu0 %v1251
  %1278 = vmatpush.msra.mxu0 %v1249
  %1279 = vmatpush.msra.mxu0 %v1247
  %1280 = vmatpush.msra.mxu0 %v1245
  %1281 = vmatpush.msra.mxu0 %v1243
  %1282 = vmatpush.msra.mxu0 %v1241
  %1283 = vmatpush.msra.mxu0 %v1239
  %1284 = vmatpush.msra.mxu0 %v1237
  %1285 = vmatpush.msra.mxu0 %v1235
  %1286 = vmatpush.msra.mxu0 %v1233
  %1287 = vmatpush.msra.mxu0 %v1231
  %1288 = vmatpush.msra.mxu0 %v1229
  %1289 = vmatpush.msra.mxu0 %v1227
  %1290 = vmatmul.f32.gmra.mxu0 %v1222
  %v1291 = vpop.f32.mrf.mxu0
  %v1292 = vadd.f32 0.0, %v1291
  %1293 = vmatmul.f32.gmra.mxu0 %v1223
  %v1294 = vpop.f32.mrf.mxu0
  %v1295 = vadd.f32 0.0, %v1294
  %1296 = vmatmul.f32.gmra.mxu0 %v1224
  %v1297 = vpop.f32.mrf.mxu0
  %v1298 = vadd.f32 0.0, %v1297
  %1299 = vmatmul.f32.gmra.mxu0 %v1225
  %v1300 = vpop.f32.mrf.mxu0
  %v1301 = vadd.f32 0.0, %v1300
  %1302 = vdwg.mxu0
  %v1303 = vadd.f32 %v1217, %v1292
  %v1304 = vadd.f32 %v1218, %v1295
  %v1305 = vadd.f32 %v1219, %v1298
  %v1306 = vadd.f32 %v1220, %v1301
  %s1307 = scalar_lea.vmem %s3, 384
  %v1308 = vld [vmem:[%s1307] sm:$0xff]
  %v1309 = vld [vmem:[%s1307 + $0x8] sm:$0xff]
  %v1310 = vld [vmem:[%s1307 + $0x10] sm:$0xff]
  %v1311 = vld [vmem:[%s1307 + $0x18] sm:$0xff]
  %1312 = vrot.lane.b32.xlu0 %v309, 64
  %v1313 = vpop.permute.xlu0 %1312
  %1314 = vrot.lane.b32.xlu0 %v311, 64
  %v1315 = vpop.permute.xlu0 %1314
  %1316 = vrot.lane.b32.xlu0 %v314, 64
  %v1317 = vpop.permute.xlu0 %1316
  %1318 = vrot.lane.b32.xlu0 %v316, 64
  %v1319 = vpop.permute.xlu0 %1318
  %1320 = vrot.lane.b32.xlu0 %v319, 64
  %v1321 = vpop.permute.xlu0 %1320
  %1322 = vrot.lane.b32.xlu0 %v321, 64
  %v1323 = vpop.permute.xlu0 %1322
  %1324 = vrot.lane.b32.xlu0 %v324, 64
  %v1325 = vpop.permute.xlu0 %1324
  %1326 = vrot.lane.b32.xlu0 %v326, 64
  %v1327 = vpop.permute.xlu0 %1326
  %1328 = vrot.lane.b32.xlu0 %v329, 64
  %v1329 = vpop.permute.xlu0 %1328
  %1330 = vrot.lane.b32.xlu0 %v331, 64
  %v1331 = vpop.permute.xlu0 %1330
  %1332 = vrot.lane.b32.xlu0 %v334, 64
  %v1333 = vpop.permute.xlu0 %1332
  %1334 = vrot.lane.b32.xlu0 %v336, 64
  %v1335 = vpop.permute.xlu0 %1334
  %1336 = vrot.lane.b32.xlu0 %v339, 64
  %v1337 = vpop.permute.xlu0 %1336
  %1338 = vrot.lane.b32.xlu0 %v341, 64
  %v1339 = vpop.permute.xlu0 %1338
  %1340 = vrot.lane.b32.xlu0 %v344, 64
  %v1341 = vpop.permute.xlu0 %1340
  %1342 = vrot.lane.b32.xlu0 %v346, 64
  %v1343 = vpop.permute.xlu0 %1342
  %1360 = vmatpush.msra.mxu0 %v1343
  %1361 = vmatpush.msra.mxu0 %v1341
  %1362 = vmatpush.msra.mxu0 %v1339
  %1363 = vmatpush.msra.mxu0 %v1337
  %1364 = vmatpush.msra.mxu0 %v1335
  %1365 = vmatpush.msra.mxu0 %v1333
  %1366 = vmatpush.msra.mxu0 %v1331
  %1367 = vmatpush.msra.mxu0 %v1329
  %1368 = vmatpush.msra.mxu0 %v1327
  %1369 = vmatpush.msra.mxu0 %v1325
  %1370 = vmatpush.msra.mxu0 %v1323
  %1371 = vmatpush.msra.mxu0 %v1321
  %1372 = vmatpush.msra.mxu0 %v1319
  %1373 = vmatpush.msra.mxu0 %v1317
  %1374 = vmatpush.msra.mxu0 %v1315
  %1375 = vmatpush.msra.mxu0 %v1313
  %1376 = vmatmul.f32.gmra.mxu0 %v1308
  %v1377 = vpop.f32.mrf.mxu0
  %v1378 = vadd.f32 0.0, %v1377
  %1379 = vmatmul.f32.gmra.mxu0 %v1309
  %v1380 = vpop.f32.mrf.mxu0
  %v1381 = vadd.f32 0.0, %v1380
  %1382 = vmatmul.f32.gmra.mxu0 %v1310
  %v1383 = vpop.f32.mrf.mxu0
  %v1384 = vadd.f32 0.0, %v1383
  %1385 = vmatmul.f32.gmra.mxu0 %v1311
  %v1386 = vpop.f32.mrf.mxu0
  %v1387 = vadd.f32 0.0, %v1386
  %1388 = vdwg.mxu0
  %v1389 = vadd.f32 %v1303, %v1378
  %v1390 = vadd.f32 %v1304, %v1381
  %v1391 = vadd.f32 %v1305, %v1384
  %v1392 = vadd.f32 %v1306, %v1387
  %s1393 = scalar_lea.vmem %s3, 416
  %v1394 = vld [vmem:[%s1393] sm:$0xff]
  %v1395 = vld [vmem:[%s1393 + $0x8] sm:$0xff]
  %v1396 = vld [vmem:[%s1393 + $0x10] sm:$0xff]
  %v1397 = vld [vmem:[%s1393 + $0x18] sm:$0xff]
  %1398 = vrot.lane.b32.xlu0 %v309, 48
  %v1399 = vpop.permute.xlu0 %1398
  %1400 = vrot.lane.b32.xlu0 %v311, 48
  %v1401 = vpop.permute.xlu0 %1400
  %1402 = vrot.lane.b32.xlu0 %v314, 48
  %v1403 = vpop.permute.xlu0 %1402
  %1404 = vrot.lane.b32.xlu0 %v316, 48
  %v1405 = vpop.permute.xlu0 %1404
  %1406 = vrot.lane.b32.xlu0 %v319, 48
  %v1407 = vpop.permute.xlu0 %1406
  %1408 = vrot.lane.b32.xlu0 %v321, 48
  %v1409 = vpop.permute.xlu0 %1408
  %1410 = vrot.lane.b32.xlu0 %v324, 48
  %v1411 = vpop.permute.xlu0 %1410
  %1412 = vrot.lane.b32.xlu0 %v326, 48
  %v1413 = vpop.permute.xlu0 %1412
  %1414 = vrot.lane.b32.xlu0 %v329, 48
  %v1415 = vpop.permute.xlu0 %1414
  %1416 = vrot.lane.b32.xlu0 %v331, 48
  %v1417 = vpop.permute.xlu0 %1416
  %1418 = vrot.lane.b32.xlu0 %v334, 48
  %v1419 = vpop.permute.xlu0 %1418
  %1420 = vrot.lane.b32.xlu0 %v336, 48
  %v1421 = vpop.permute.xlu0 %1420
  %1422 = vrot.lane.b32.xlu0 %v339, 48
  %v1423 = vpop.permute.xlu0 %1422
  %1424 = vrot.lane.b32.xlu0 %v341, 48
  %v1425 = vpop.permute.xlu0 %1424
  %1426 = vrot.lane.b32.xlu0 %v344, 48
  %v1427 = vpop.permute.xlu0 %1426
  %1428 = vrot.lane.b32.xlu0 %v346, 48
  %v1429 = vpop.permute.xlu0 %1428
  %1446 = vmatpush.msra.mxu0 %v1429
  %1447 = vmatpush.msra.mxu0 %v1427
  %1448 = vmatpush.msra.mxu0 %v1425
  %1449 = vmatpush.msra.mxu0 %v1423
  %1450 = vmatpush.msra.mxu0 %v1421
  %1451 = vmatpush.msra.mxu0 %v1419
  %1452 = vmatpush.msra.mxu0 %v1417
  %1453 = vmatpush.msra.mxu0 %v1415
  %1454 = vmatpush.msra.mxu0 %v1413
  %1455 = vmatpush.msra.mxu0 %v1411
  %1456 = vmatpush.msra.mxu0 %v1409
  %1457 = vmatpush.msra.mxu0 %v1407
  %1458 = vmatpush.msra.mxu0 %v1405
  %1459 = vmatpush.msra.mxu0 %v1403
  %1460 = vmatpush.msra.mxu0 %v1401
  %1461 = vmatpush.msra.mxu0 %v1399
  %1462 = vmatmul.f32.gmra.mxu0 %v1394
  %v1463 = vpop.f32.mrf.mxu0
  %v1464 = vadd.f32 0.0, %v1463
  %1465 = vmatmul.f32.gmra.mxu0 %v1395
  %v1466 = vpop.f32.mrf.mxu0
  %v1467 = vadd.f32 0.0, %v1466
  %1468 = vmatmul.f32.gmra.mxu0 %v1396
  %v1469 = vpop.f32.mrf.mxu0
  %v1470 = vadd.f32 0.0, %v1469
  %1471 = vmatmul.f32.gmra.mxu0 %v1397
  %v1472 = vpop.f32.mrf.mxu0
  %v1473 = vadd.f32 0.0, %v1472
  %1474 = vdwg.mxu0
  %v1475 = vadd.f32 %v1389, %v1464
  %v1476 = vadd.f32 %v1390, %v1467
  %v1477 = vadd.f32 %v1391, %v1470
  %v1478 = vadd.f32 %v1392, %v1473
  %s1479 = scalar_lea.vmem %s3, 448
  %v1480 = vld [vmem:[%s1479] sm:$0xff]
  %v1481 = vld [vmem:[%s1479 + $0x8] sm:$0xff]
  %v1482 = vld [vmem:[%s1479 + $0x10] sm:$0xff]
  %v1483 = vld [vmem:[%s1479 + $0x18] sm:$0xff]
  %1484 = vrot.lane.b32.xlu0 %v309, 32
  %v1485 = vpop.permute.xlu0 %1484
  %1486 = vrot.lane.b32.xlu0 %v311, 32
  %v1487 = vpop.permute.xlu0 %1486
  %1488 = vrot.lane.b32.xlu0 %v314, 32
  %v1489 = vpop.permute.xlu0 %1488
  %1490 = vrot.lane.b32.xlu0 %v316, 32
  %v1491 = vpop.permute.xlu0 %1490
  %1492 = vrot.lane.b32.xlu0 %v319, 32
  %v1493 = vpop.permute.xlu0 %1492
  %1494 = vrot.lane.b32.xlu0 %v321, 32
  %v1495 = vpop.permute.xlu0 %1494
  %1496 = vrot.lane.b32.xlu0 %v324, 32
  %v1497 = vpop.permute.xlu0 %1496
  %1498 = vrot.lane.b32.xlu0 %v326, 32
  %v1499 = vpop.permute.xlu0 %1498
  %1500 = vrot.lane.b32.xlu0 %v329, 32
  %v1501 = vpop.permute.xlu0 %1500
  %1502 = vrot.lane.b32.xlu0 %v331, 32
  %v1503 = vpop.permute.xlu0 %1502
  %1504 = vrot.lane.b32.xlu0 %v334, 32
  %v1505 = vpop.permute.xlu0 %1504
  %1506 = vrot.lane.b32.xlu0 %v336, 32
  %v1507 = vpop.permute.xlu0 %1506
  %1508 = vrot.lane.b32.xlu0 %v339, 32
  %v1509 = vpop.permute.xlu0 %1508
  %1510 = vrot.lane.b32.xlu0 %v341, 32
  %v1511 = vpop.permute.xlu0 %1510
  %1512 = vrot.lane.b32.xlu0 %v344, 32
  %v1513 = vpop.permute.xlu0 %1512
  %1514 = vrot.lane.b32.xlu0 %v346, 32
  %v1515 = vpop.permute.xlu0 %1514
  %1532 = vmatpush.msra.mxu0 %v1515
  %1533 = vmatpush.msra.mxu0 %v1513
  %1534 = vmatpush.msra.mxu0 %v1511
  %1535 = vmatpush.msra.mxu0 %v1509
  %1536 = vmatpush.msra.mxu0 %v1507
  %1537 = vmatpush.msra.mxu0 %v1505
  %1538 = vmatpush.msra.mxu0 %v1503
  %1539 = vmatpush.msra.mxu0 %v1501
  %1540 = vmatpush.msra.mxu0 %v1499
  %1541 = vmatpush.msra.mxu0 %v1497
  %1542 = vmatpush.msra.mxu0 %v1495
  %1543 = vmatpush.msra.mxu0 %v1493
  %1544 = vmatpush.msra.mxu0 %v1491
  %1545 = vmatpush.msra.mxu0 %v1489
  %1546 = vmatpush.msra.mxu0 %v1487
  %1547 = vmatpush.msra.mxu0 %v1485
  %1548 = vmatmul.f32.gmra.mxu0 %v1480
  %v1549 = vpop.f32.mrf.mxu0
  %v1550 = vadd.f32 0.0, %v1549
  %1551 = vmatmul.f32.gmra.mxu0 %v1481
  %v1552 = vpop.f32.mrf.mxu0
  %v1553 = vadd.f32 0.0, %v1552
  %1554 = vmatmul.f32.gmra.mxu0 %v1482
  %v1555 = vpop.f32.mrf.mxu0
  %v1556 = vadd.f32 0.0, %v1555
  %1557 = vmatmul.f32.gmra.mxu0 %v1483
  %v1558 = vpop.f32.mrf.mxu0
  %v1559 = vadd.f32 0.0, %v1558
  %1560 = vdwg.mxu0
  %v1561 = vadd.f32 %v1475, %v1550
  %v1562 = vadd.f32 %v1476, %v1553
  %v1563 = vadd.f32 %v1477, %v1556
  %v1564 = vadd.f32 %v1478, %v1559
  %s1565 = scalar_lea.vmem %s3, 480
  %v1566 = vld [vmem:[%s1565] sm:$0xff]
  %v1567 = vld [vmem:[%s1565 + $0x8] sm:$0xff]
  %v1568 = vld [vmem:[%s1565 + $0x10] sm:$0xff]
  %v1569 = vld [vmem:[%s1565 + $0x18] sm:$0xff]
  %1570 = vrot.lane.b32.xlu0 %v309, 16
  %v1571 = vpop.permute.xlu0 %1570
  %1572 = vrot.lane.b32.xlu0 %v311, 16
  %v1573 = vpop.permute.xlu0 %1572
  %1574 = vrot.lane.b32.xlu0 %v314, 16
  %v1575 = vpop.permute.xlu0 %1574
  %1576 = vrot.lane.b32.xlu0 %v316, 16
  %v1577 = vpop.permute.xlu0 %1576
  %1578 = vrot.lane.b32.xlu0 %v319, 16
  %v1579 = vpop.permute.xlu0 %1578
  %1580 = vrot.lane.b32.xlu0 %v321, 16
  %v1581 = vpop.permute.xlu0 %1580
  %1582 = vrot.lane.b32.xlu0 %v324, 16
  %v1583 = vpop.permute.xlu0 %1582
  %1584 = vrot.lane.b32.xlu0 %v326, 16
  %v1585 = vpop.permute.xlu0 %1584
  %1586 = vrot.lane.b32.xlu0 %v329, 16
  %v1587 = vpop.permute.xlu0 %1586
  %1588 = vrot.lane.b32.xlu0 %v331, 16
  %v1589 = vpop.permute.xlu0 %1588
  %1590 = vrot.lane.b32.xlu0 %v334, 16
  %v1591 = vpop.permute.xlu0 %1590
  %1592 = vrot.lane.b32.xlu0 %v336, 16
  %v1593 = vpop.permute.xlu0 %1592
  %1594 = vrot.lane.b32.xlu0 %v339, 16
  %v1595 = vpop.permute.xlu0 %1594
  %1596 = vrot.lane.b32.xlu0 %v341, 16
  %v1597 = vpop.permute.xlu0 %1596
  %1598 = vrot.lane.b32.xlu0 %v344, 16
  %v1599 = vpop.permute.xlu0 %1598
  %1600 = vrot.lane.b32.xlu0 %v346, 16
  %v1601 = vpop.permute.xlu0 %1600
  %1618 = vmatpush.msra.mxu0 %v1601
  %1619 = vmatpush.msra.mxu0 %v1599
  %1620 = vmatpush.msra.mxu0 %v1597
  %1621 = vmatpush.msra.mxu0 %v1595
  %1622 = vmatpush.msra.mxu0 %v1593
  %1623 = vmatpush.msra.mxu0 %v1591
  %1624 = vmatpush.msra.mxu0 %v1589
  %1625 = vmatpush.msra.mxu0 %v1587
  %1626 = vmatpush.msra.mxu0 %v1585
  %1627 = vmatpush.msra.mxu0 %v1583
  %1628 = vmatpush.msra.mxu0 %v1581
  %1629 = vmatpush.msra.mxu0 %v1579
  %1630 = vmatpush.msra.mxu0 %v1577
  %1631 = vmatpush.msra.mxu0 %v1575
  %1632 = vmatpush.msra.mxu0 %v1573
  %1633 = vmatpush.msra.mxu0 %v1571
  %1634 = vmatmul.f32.gmra.mxu0 %v1566
  %v1635 = vpop.f32.mrf.mxu0
  %v1636 = vadd.f32 0.0, %v1635
  %1637 = vmatmul.f32.gmra.mxu0 %v1567
  %v1638 = vpop.f32.mrf.mxu0
  %v1639 = vadd.f32 0.0, %v1638
  %1640 = vmatmul.f32.gmra.mxu0 %v1568
  %v1641 = vpop.f32.mrf.mxu0
  %v1642 = vadd.f32 0.0, %v1641
  %1643 = vmatmul.f32.gmra.mxu0 %v1569
  %v1644 = vpop.f32.mrf.mxu0
  %v1645 = vadd.f32 0.0, %v1644
  %1646 = vdwg.mxu0
  %v1647 = vadd.f32 %v1561, %v1636
  %v1648 = vadd.f32 %v1562, %v1639
  %v1649 = vadd.f32 %v1563, %v1642
  %v1650 = vadd.f32 %v1564, %v1645
  %v1651 = vld [vmem:[%s5] sm:$0x1]
  %v1653 = vperm.slane %v1651, 0
  %v1655 = vadd.f32 %v1647, %v1653
  %v1656 = vadd.f32 %v1648, %v1653
  %v1657 = vadd.f32 %v1649, %v1653
  %v1658 = vadd.f32 %v1650, %v1653
  %vm1659 = vcmp.ge.f32.partialorder %v1655, 0.0
  %vm1660 = vcmp.ge.f32.partialorder %v1656, 0.0
  %vm1661 = vcmp.ge.f32.partialorder %v1657, 0.0
  %vm1662 = vcmp.ge.f32.partialorder %v1658, 0.0
  %v1663 = vmul.f32 %v1655, 0.2
  %v1664 = vmul.f32 %v1656, 0.2
  %v1665 = vmul.f32 %v1657, 0.2
  %v1666 = vmul.f32 %v1658, 0.2
  %v1667 = vsel %vm1659, %v1655, %v1663
  %v1668 = vsel %vm1660, %v1656, %v1664
  %v1669 = vsel %vm1661, %v1657, %v1665
  %v1670 = vsel %vm1662, %v1658, %v1666
  %v1671 = vld [vmem:[%s7] sm:$0xff]
  %v1672 = vld [vmem:[%s7 + $0x8] sm:$0xff]
  %v1673 = vld [vmem:[%s7 + $0x10] sm:$0xff]
  %v1674 = vld [vmem:[%s7 + $0x18] sm:$0xff]
  %v1675 = vld [vmem:[%s7 + $0x20] sm:$0xff]
  %v1676 = vld [vmem:[%s7 + $0x28] sm:$0xff]
  %v1677 = vld [vmem:[%s7 + $0x30] sm:$0xff]
  %v1678 = vld [vmem:[%s7 + $0x38] sm:$0xff]
  %v1679 = vpack.c.bf16 %v1668, %v1667
  %v1680 = vpack.c.bf16 %v1670, %v1669
  %v1681 = vpack.c.bf16 %v1675, %v1671
  %v1682 = vpack.c.bf16 %v1676, %v1672
  %v1683 = vpack.c.bf16 %v1677, %v1673
  %v1684 = vpack.c.bf16 %v1678, %v1674
  %vm1685 = vcmask 130048
  %v1687 = vsel %vm1685, %v1679, 0
  %v1690 = vsel %vm1685, %v1680, 0
  %1692 = vmatpush.bf16.msra.mxu0 0
  %1693 = vmatpush.bf16.msra.mxu0 0
  %1694 = vmatpush.bf16.msra.mxu0 0
  %1695 = vmatpush.bf16.msra.mxu0 0
  %1696 = vmatpush.bf16.msra.mxu0 0
  %1697 = vmatpush.bf16.msra.mxu0 0
  %1698 = vmatpush.bf16.msra.mxu0 0
  %1699 = vmatpush.bf16.msra.mxu0 %v1681
  %1700 = vmatmul.bf16.gmra.mxu0 %v1687
  %v1701 = vpop.f32.mrf.mxu0
  %v1702 = vadd.f32 0.0, %v1701
  %v1703 = vpop.f32.mrf.mxu0
  %v1704 = vadd.f32 0.0, %v1703
  %1705 = vmatmul.bf16.gmra.mxu0 %v1690
  %v1706 = vpop.f32.mrf.mxu0
  %v1707 = vadd.f32 0.0, %v1706
  %v1708 = vpop.f32.mrf.mxu0
  %v1709 = vadd.f32 0.0, %v1708
  %1710 = vdwg.mxu0
  %1711 = vmatpush.bf16.msra.mxu0 0
  %1712 = vmatpush.bf16.msra.mxu0 0
  %1713 = vmatpush.bf16.msra.mxu0 0
  %1714 = vmatpush.bf16.msra.mxu0 0
  %1715 = vmatpush.bf16.msra.mxu0 0
  %1716 = vmatpush.bf16.msra.mxu0 0
  %1717 = vmatpush.bf16.msra.mxu0 0
  %1718 = vmatpush.bf16.msra.mxu0 %v1682
  %1719 = vmatmul.bf16.gmra.mxu0 %v1687
  %v1720 = vpop.f32.mrf.mxu0
  %v1721 = vadd.f32 0.0, %v1720
  %v1722 = vpop.f32.mrf.mxu0
  %v1723 = vadd.f32 0.0, %v1722
  %1724 = vmatmul.bf16.gmra.mxu0 %v1690
  %v1725 = vpop.f32.mrf.mxu0
  %v1726 = vadd.f32 0.0, %v1725
  %v1727 = vpop.f32.mrf.mxu0
  %v1728 = vadd.f32 0.0, %v1727
  %1729 = vdwg.mxu0
  %1730 = vmatpush.bf16.msra.mxu0 0
  %1731 = vmatpush.bf16.msra.mxu0 0
  %1732 = vmatpush.bf16.msra.mxu0 0
  %1733 = vmatpush.bf16.msra.mxu0 0
  %1734 = vmatpush.bf16.msra.mxu0 0
  %1735 = vmatpush.bf16.msra.mxu0 0
  %1736 = vmatpush.bf16.msra.mxu0 0
  %1737 = vmatpush.bf16.msra.mxu0 %v1683
  %1738 = vmatmul.bf16.gmra.mxu0 %v1687
  %v1739 = vpop.f32.mrf.mxu0
  %v1740 = vadd.f32 0.0, %v1739
  %v1741 = vpop.f32.mrf.mxu0
  %v1742 = vadd.f32 0.0, %v1741
  %1743 = vmatmul.bf16.gmra.mxu0 %v1690
  %v1744 = vpop.f32.mrf.mxu0
  %v1745 = vadd.f32 0.0, %v1744
  %v1746 = vpop.f32.mrf.mxu0
  %v1747 = vadd.f32 0.0, %v1746
  %1748 = vdwg.mxu0
  %1749 = vmatpush.bf16.msra.mxu0 0
  %1750 = vmatpush.bf16.msra.mxu0 0
  %1751 = vmatpush.bf16.msra.mxu0 0
  %1752 = vmatpush.bf16.msra.mxu0 0
  %1753 = vmatpush.bf16.msra.mxu0 0
  %1754 = vmatpush.bf16.msra.mxu0 0
  %1755 = vmatpush.bf16.msra.mxu0 0
  %1756 = vmatpush.bf16.msra.mxu0 %v1684
  %1757 = vmatmul.bf16.gmra.mxu0 %v1687
  %v1758 = vpop.f32.mrf.mxu0
  %v1759 = vadd.f32 0.0, %v1758
  %v1760 = vpop.f32.mrf.mxu0
  %v1761 = vadd.f32 0.0, %v1760
  %1762 = vmatmul.bf16.gmra.mxu0 %v1690
  %v1763 = vpop.f32.mrf.mxu0
  %v1764 = vadd.f32 0.0, %v1763
  %v1765 = vpop.f32.mrf.mxu0
  %v1766 = vadd.f32 0.0, %v1765
  %1767 = vdwg.mxu0
  %v1768 = vld [vmem:[%s6] sm:$0xff]
  %v1769 = vld [vmem:[%s6 + $0x8] sm:$0xff]
  %v1770 = vld [vmem:[%s6 + $0x10] sm:$0x3]
  %s1771 = scalar_lea.vmem %s6, 24
  %v1772 = vld [vmem:[%s1771] sm:$0xff]
  %v1773 = vld [vmem:[%s1771 + $0x8] sm:$0xff]
  %v1774 = vld [vmem:[%s1771 + $0x10] sm:$0x3]
  %1779 = vrot.lane.b32.xlu0 %v1702, 96
  %v1780 = vpop.permute.xlu0 %1779
  %1781 = vrot.lane.b32.xlu0 %v1704, 96
  %v1782 = vpop.permute.xlu0 %1781
  %1783 = vrot.lane.b32.xlu0 %v1707, 96
  %v1784 = vpop.permute.xlu0 %1783
  %1785 = vrot.lane.b32.xlu0 %v1709, 96
  %v1786 = vpop.permute.xlu0 %1785
  %vm1791 = vcmask 261120
  %v1793 = vsel %vm1791, %v1772, 0
  %v1796 = vsel %vm1791, %v1773, 0
  %v1799 = vsel %vm1791, %v1774, 0
  %1801 = vmatpush.msra.mxu0 0.0
  %1802 = vmatpush.msra.mxu0 0.0
  %1803 = vmatpush.msra.mxu0 0.0
  %1804 = vmatpush.msra.mxu0 0.0
  %1805 = vmatpush.msra.mxu0 0.0
  %1806 = vmatpush.msra.mxu0 0.0
  %1807 = vmatpush.msra.mxu0 0.0
  %1808 = vmatpush.msra.mxu0 0.0
  %1809 = vmatpush.msra.mxu0 0.0
  %1810 = vmatpush.msra.mxu0 0.0
  %1811 = vmatpush.msra.mxu0 0.0
  %1812 = vmatpush.msra.mxu0 0.0
  %1813 = vmatpush.msra.mxu0 %v1786
  %1814 = vmatpush.msra.mxu0 %v1784
  %1815 = vmatpush.msra.mxu0 %v1782
  %1816 = vmatpush.msra.mxu0 %v1780
  %1817 = vmatmul.f32.gmra.mxu0 %v1793
  %v1818 = vpop.f32.mrf.mxu0
  %v1819 = vadd.f32 0.0, %v1818
  %1820 = vmatmul.f32.gmra.mxu0 %v1796
  %v1821 = vpop.f32.mrf.mxu0
  %v1822 = vadd.f32 0.0, %v1821
  %1823 = vmatmul.f32.gmra.mxu0 %v1799
  %v1824 = vpop.f32.mrf.mxu0
  %v1825 = vadd.f32 0.0, %v1824
  %1826 = vdwg.mxu0
  %v1828 = vsel %vm1791, %v1768, 0
  %v1831 = vsel %vm1791, %v1769, 0
  %v1834 = vsel %vm1791, %v1770, 0
  %1836 = vmatpush.msra.mxu0 0.0
  %1837 = vmatpush.msra.mxu0 0.0
  %1838 = vmatpush.msra.mxu0 0.0
  %1839 = vmatpush.msra.mxu0 0.0
  %1840 = vmatpush.msra.mxu0 0.0
  %1841 = vmatpush.msra.mxu0 0.0
  %1842 = vmatpush.msra.mxu0 0.0
  %1843 = vmatpush.msra.mxu0 0.0
  %1844 = vmatpush.msra.mxu0 0.0
  %1845 = vmatpush.msra.mxu0 0.0
  %1846 = vmatpush.msra.mxu0 0.0
  %1847 = vmatpush.msra.mxu0 0.0
  %1848 = vmatpush.msra.mxu0 %v1709
  %1849 = vmatpush.msra.mxu0 %v1707
  %1850 = vmatpush.msra.mxu0 %v1704
  %1851 = vmatpush.msra.mxu0 %v1702
  %1852 = vmatmul.f32.gmra.mxu0 %v1828
  %v1853 = vpop.f32.mrf.mxu0
  %v1854 = vadd.f32 %v1819, %v1853
  %1855 = vmatmul.f32.gmra.mxu0 %v1831
  %v1856 = vpop.f32.mrf.mxu0
  %v1857 = vadd.f32 %v1822, %v1856
  %1858 = vmatmul.f32.gmra.mxu0 %v1834
  %v1859 = vpop.f32.mrf.mxu0
  %v1860 = vadd.f32 %v1825, %v1859
  %1861 = vdwg.mxu0
  %s1862 = scalar_lea.vmem %s6, 48
  %v1863 = vld [vmem:[%s1862] sm:$0xff]
  %v1864 = vld [vmem:[%s1862 + $0x8] sm:$0xff]
  %v1865 = vld [vmem:[%s1862 + $0x10] sm:$0x3]
  %1866 = vrot.lane.b32.xlu0 %v1702, 64
  %v1867 = vpop.permute.xlu0 %1866
  %1868 = vrot.lane.b32.xlu0 %v1704, 64
  %v1869 = vpop.permute.xlu0 %1868
  %1870 = vrot.lane.b32.xlu0 %v1707, 64
  %v1871 = vpop.permute.xlu0 %1870
  %1872 = vrot.lane.b32.xlu0 %v1709, 64
  %v1873 = vpop.permute.xlu0 %1872
  %v1879 = vsel %vm1791, %v1863, 0
  %v1882 = vsel %vm1791, %v1864, 0
  %v1885 = vsel %vm1791, %v1865, 0
  %1887 = vmatpush.msra.mxu0 0.0
  %1888 = vmatpush.msra.mxu0 0.0
  %1889 = vmatpush.msra.mxu0 0.0
  %1890 = vmatpush.msra.mxu0 0.0
  %1891 = vmatpush.msra.mxu0 0.0
  %1892 = vmatpush.msra.mxu0 0.0
  %1893 = vmatpush.msra.mxu0 0.0
  %1894 = vmatpush.msra.mxu0 0.0
  %1895 = vmatpush.msra.mxu0 0.0
  %1896 = vmatpush.msra.mxu0 0.0
  %1897 = vmatpush.msra.mxu0 0.0
  %1898 = vmatpush.msra.mxu0 0.0
  %1899 = vmatpush.msra.mxu0 %v1873
  %1900 = vmatpush.msra.mxu0 %v1871
  %1901 = vmatpush.msra.mxu0 %v1869
  %1902 = vmatpush.msra.mxu0 %v1867
  %1903 = vmatmul.f32.gmra.mxu0 %v1879
  %v1904 = vpop.f32.mrf.mxu0
  %v1905 = vadd.f32 0.0, %v1904
  %1906 = vmatmul.f32.gmra.mxu0 %v1882
  %v1907 = vpop.f32.mrf.mxu0
  %v1908 = vadd.f32 0.0, %v1907
  %1909 = vmatmul.f32.gmra.mxu0 %v1885
  %v1910 = vpop.f32.mrf.mxu0
  %v1911 = vadd.f32 0.0, %v1910
  %1912 = vdwg.mxu0
  %v1913 = vadd.f32 %v1854, %v1905
  %v1914 = vadd.f32 %v1857, %v1908
  %v1915 = vadd.f32 %v1860, %v1911
  %s1916 = scalar_lea.vmem %s6, 72
  %v1917 = vld [vmem:[%s1916] sm:$0xff]
  %v1918 = vld [vmem:[%s1916 + $0x8] sm:$0xff]
  %v1919 = vld [vmem:[%s1916 + $0x10] sm:$0x3]
  %1920 = vrot.lane.b32.xlu0 %v1702, 32
  %v1921 = vpop.permute.xlu0 %1920
  %1922 = vrot.lane.b32.xlu0 %v1704, 32
  %v1923 = vpop.permute.xlu0 %1922
  %1924 = vrot.lane.b32.xlu0 %v1707, 32
  %v1925 = vpop.permute.xlu0 %1924
  %1926 = vrot.lane.b32.xlu0 %v1709, 32
  %v1927 = vpop.permute.xlu0 %1926
  %v1933 = vsel %vm1791, %v1917, 0
  %v1936 = vsel %vm1791, %v1918, 0
  %v1939 = vsel %vm1791, %v1919, 0
  %1941 = vmatpush.msra.mxu0 0.0
  %1942 = vmatpush.msra.mxu0 0.0
  %1943 = vmatpush.msra.mxu0 0.0
  %1944 = vmatpush.msra.mxu0 0.0
  %1945 = vmatpush.msra.mxu0 0.0
  %1946 = vmatpush.msra.mxu0 0.0
  %1947 = vmatpush.msra.mxu0 0.0
  %1948 = vmatpush.msra.mxu0 0.0
  %1949 = vmatpush.msra.mxu0 0.0
  %1950 = vmatpush.msra.mxu0 0.0
  %1951 = vmatpush.msra.mxu0 0.0
  %1952 = vmatpush.msra.mxu0 0.0
  %1953 = vmatpush.msra.mxu0 %v1927
  %1954 = vmatpush.msra.mxu0 %v1925
  %1955 = vmatpush.msra.mxu0 %v1923
  %1956 = vmatpush.msra.mxu0 %v1921
  %1957 = vmatmul.f32.gmra.mxu0 %v1933
  %v1958 = vpop.f32.mrf.mxu0
  %v1959 = vadd.f32 0.0, %v1958
  %1960 = vmatmul.f32.gmra.mxu0 %v1936
  %v1961 = vpop.f32.mrf.mxu0
  %v1962 = vadd.f32 0.0, %v1961
  %1963 = vmatmul.f32.gmra.mxu0 %v1939
  %v1964 = vpop.f32.mrf.mxu0
  %v1965 = vadd.f32 0.0, %v1964
  %1966 = vdwg.mxu0
  %v1967 = vadd.f32 %v1913, %v1959
  %v1968 = vadd.f32 %v1914, %v1962
  %v1969 = vadd.f32 %v1915, %v1965
  %s1970 = scalar_lea.vmem %s6, 96
  %v1971 = vld [vmem:[%s1970] sm:$0xff]
  %v1972 = vld [vmem:[%s1970 + $0x8] sm:$0xff]
  %v1973 = vld [vmem:[%s1970 + $0x10] sm:$0x3]
  %v1975 = vsel %vm1791, %v1971, 0
  %v1978 = vsel %vm1791, %v1972, 0
  %v1981 = vsel %vm1791, %v1973, 0
  %1983 = vmatpush.msra.mxu0 0.0
  %1984 = vmatpush.msra.mxu0 0.0
  %1985 = vmatpush.msra.mxu0 0.0
  %1986 = vmatpush.msra.mxu0 0.0
  %1987 = vmatpush.msra.mxu0 0.0
  %1988 = vmatpush.msra.mxu0 0.0
  %1989 = vmatpush.msra.mxu0 0.0
  %1990 = vmatpush.msra.mxu0 0.0
  %1991 = vmatpush.msra.mxu0 0.0
  %1992 = vmatpush.msra.mxu0 0.0
  %1993 = vmatpush.msra.mxu0 0.0
  %1994 = vmatpush.msra.mxu0 0.0
  %1995 = vmatpush.msra.mxu0 %v1728
  %1996 = vmatpush.msra.mxu0 %v1726
  %1997 = vmatpush.msra.mxu0 %v1723
  %1998 = vmatpush.msra.mxu0 %v1721
  %1999 = vmatmul.f32.gmra.mxu0 %v1975
  %v2000 = vpop.f32.mrf.mxu0
  %v2001 = vadd.f32 0.0, %v2000
  %2002 = vmatmul.f32.gmra.mxu0 %v1978
  %v2003 = vpop.f32.mrf.mxu0
  %v2004 = vadd.f32 0.0, %v2003
  %2005 = vmatmul.f32.gmra.mxu0 %v1981
  %v2006 = vpop.f32.mrf.mxu0
  %v2007 = vadd.f32 0.0, %v2006
  %2008 = vdwg.mxu0
  %v2009 = vadd.f32 %v1967, %v2001
  %v2010 = vadd.f32 %v1968, %v2004
  %v2011 = vadd.f32 %v1969, %v2007
  %s2012 = scalar_lea.vmem %s6, 120
  %v2013 = vld [vmem:[%s2012] sm:$0xff]
  %v2014 = vld [vmem:[%s2012 + $0x8] sm:$0xff]
  %v2015 = vld [vmem:[%s2012 + $0x10] sm:$0x3]
  %2020 = vrot.lane.b32.xlu0 %v1721, 96
  %v2021 = vpop.permute.xlu0 %2020
  %2022 = vrot.lane.b32.xlu0 %v1723, 96
  %v2023 = vpop.permute.xlu0 %2022
  %2024 = vrot.lane.b32.xlu0 %v1726, 96
  %v2025 = vpop.permute.xlu0 %2024
  %2026 = vrot.lane.b32.xlu0 %v1728, 96
  %v2027 = vpop.permute.xlu0 %2026
  %v2033 = vsel %vm1791, %v2013, 0
  %v2036 = vsel %vm1791, %v2014, 0
  %v2039 = vsel %vm1791, %v2015, 0
  %2041 = vmatpush.msra.mxu0 0.0
  %2042 = vmatpush.msra.mxu0 0.0
  %2043 = vmatpush.msra.mxu0 0.0
  %2044 = vmatpush.msra.mxu0 0.0
  %2045 = vmatpush.msra.mxu0 0.0
  %2046 = vmatpush.msra.mxu0 0.0
  %2047 = vmatpush.msra.mxu0 0.0
  %2048 = vmatpush.msra.mxu0 0.0
  %2049 = vmatpush.msra.mxu0 0.0
  %2050 = vmatpush.msra.mxu0 0.0
  %2051 = vmatpush.msra.mxu0 0.0
  %2052 = vmatpush.msra.mxu0 0.0
  %2053 = vmatpush.msra.mxu0 %v2027
  %2054 = vmatpush.msra.mxu0 %v2025
  %2055 = vmatpush.msra.mxu0 %v2023
  %2056 = vmatpush.msra.mxu0 %v2021
  %2057 = vmatmul.f32.gmra.mxu0 %v2033
  %v2058 = vpop.f32.mrf.mxu0
  %v2059 = vadd.f32 0.0, %v2058
  %2060 = vmatmul.f32.gmra.mxu0 %v2036
  %v2061 = vpop.f32.mrf.mxu0
  %v2062 = vadd.f32 0.0, %v2061
  %2063 = vmatmul.f32.gmra.mxu0 %v2039
  %v2064 = vpop.f32.mrf.mxu0
  %v2065 = vadd.f32 0.0, %v2064
  %2066 = vdwg.mxu0
  %v2067 = vadd.f32 %v2009, %v2059
  %v2068 = vadd.f32 %v2010, %v2062
  %v2069 = vadd.f32 %v2011, %v2065
  %s2070 = scalar_lea.vmem %s6, 144
  %v2071 = vld [vmem:[%s2070] sm:$0xff]
  %v2072 = vld [vmem:[%s2070 + $0x8] sm:$0xff]
  %v2073 = vld [vmem:[%s2070 + $0x10] sm:$0x3]
  %2074 = vrot.lane.b32.xlu0 %v1721, 64
  %v2075 = vpop.permute.xlu0 %2074
  %2076 = vrot.lane.b32.xlu0 %v1723, 64
  %v2077 = vpop.permute.xlu0 %2076
  %2078 = vrot.lane.b32.xlu0 %v1726, 64
  %v2079 = vpop.permute.xlu0 %2078
  %2080 = vrot.lane.b32.xlu0 %v1728, 64
  %v2081 = vpop.permute.xlu0 %2080
  %v2087 = vsel %vm1791, %v2071, 0
  %v2090 = vsel %vm1791, %v2072, 0
  %v2093 = vsel %vm1791, %v2073, 0
  %2095 = vmatpush.msra.mxu0 0.0
  %2096 = vmatpush.msra.mxu0 0.0
  %2097 = vmatpush.msra.mxu0 0.0
  %2098 = vmatpush.msra.mxu0 0.0
  %2099 = vmatpush.msra.mxu0 0.0
  %2100 = vmatpush.msra.mxu0 0.0
  %2101 = vmatpush.msra.mxu0 0.0
  %2102 = vmatpush.msra.mxu0 0.0
  %2103 = vmatpush.msra.mxu0 0.0
  %2104 = vmatpush.msra.mxu0 0.0
  %2105 = vmatpush.msra.mxu0 0.0
  %2106 = vmatpush.msra.mxu0 0.0
  %2107 = vmatpush.msra.mxu0 %v2081
  %2108 = vmatpush.msra.mxu0 %v2079
  %2109 = vmatpush.msra.mxu0 %v2077
  %2110 = vmatpush.msra.mxu0 %v2075
  %2111 = vmatmul.f32.gmra.mxu0 %v2087
  %v2112 = vpop.f32.mrf.mxu0
  %v2113 = vadd.f32 0.0, %v2112
  %2114 = vmatmul.f32.gmra.mxu0 %v2090
  %v2115 = vpop.f32.mrf.mxu0
  %v2116 = vadd.f32 0.0, %v2115
  %2117 = vmatmul.f32.gmra.mxu0 %v2093
  %v2118 = vpop.f32.mrf.mxu0
  %v2119 = vadd.f32 0.0, %v2118
  %2120 = vdwg.mxu0
  %v2121 = vadd.f32 %v2067, %v2113
  %v2122 = vadd.f32 %v2068, %v2116
  %v2123 = vadd.f32 %v2069, %v2119
  %s2124 = scalar_lea.vmem %s6, 168
  %v2125 = vld [vmem:[%s2124] sm:$0xff]
  %v2126 = vld [vmem:[%s2124 + $0x8] sm:$0xff]
  %v2127 = vld [vmem:[%s2124 + $0x10] sm:$0x3]
  %2128 = vrot.lane.b32.xlu0 %v1721, 32
  %v2129 = vpop.permute.xlu0 %2128
  %2130 = vrot.lane.b32.xlu0 %v1723, 32
  %v2131 = vpop.permute.xlu0 %2130
  %2132 = vrot.lane.b32.xlu0 %v1726, 32
  %v2133 = vpop.permute.xlu0 %2132
  %2134 = vrot.lane.b32.xlu0 %v1728, 32
  %v2135 = vpop.permute.xlu0 %2134
  %v2141 = vsel %vm1791, %v2125, 0
  %v2144 = vsel %vm1791, %v2126, 0
  %v2147 = vsel %vm1791, %v2127, 0
  %2149 = vmatpush.msra.mxu0 0.0
  %2150 = vmatpush.msra.mxu0 0.0
  %2151 = vmatpush.msra.mxu0 0.0
  %2152 = vmatpush.msra.mxu0 0.0
  %2153 = vmatpush.msra.mxu0 0.0
  %2154 = vmatpush.msra.mxu0 0.0
  %2155 = vmatpush.msra.mxu0 0.0
  %2156 = vmatpush.msra.mxu0 0.0
  %2157 = vmatpush.msra.mxu0 0.0
  %2158 = vmatpush.msra.mxu0 0.0
  %2159 = vmatpush.msra.mxu0 0.0
  %2160 = vmatpush.msra.mxu0 0.0
  %2161 = vmatpush.msra.mxu0 %v2135
  %2162 = vmatpush.msra.mxu0 %v2133
  %2163 = vmatpush.msra.mxu0 %v2131
  %2164 = vmatpush.msra.mxu0 %v2129
  %2165 = vmatmul.f32.gmra.mxu0 %v2141
  %v2166 = vpop.f32.mrf.mxu0
  %v2167 = vadd.f32 0.0, %v2166
  %2168 = vmatmul.f32.gmra.mxu0 %v2144
  %v2169 = vpop.f32.mrf.mxu0
  %v2170 = vadd.f32 0.0, %v2169
  %2171 = vmatmul.f32.gmra.mxu0 %v2147
  %v2172 = vpop.f32.mrf.mxu0
  %v2173 = vadd.f32 0.0, %v2172
  %2174 = vdwg.mxu0
  %v2175 = vadd.f32 %v2121, %v2167
  %v2176 = vadd.f32 %v2122, %v2170
  %v2177 = vadd.f32 %v2123, %v2173
  %s2178 = scalar_lea.vmem %s6, 192
  %v2179 = vld [vmem:[%s2178] sm:$0xff]
  %v2180 = vld [vmem:[%s2178 + $0x8] sm:$0xff]
  %v2181 = vld [vmem:[%s2178 + $0x10] sm:$0x3]
  %v2183 = vsel %vm1791, %v2179, 0
  %v2186 = vsel %vm1791, %v2180, 0
  %v2189 = vsel %vm1791, %v2181, 0
  %2191 = vmatpush.msra.mxu0 0.0
  %2192 = vmatpush.msra.mxu0 0.0
  %2193 = vmatpush.msra.mxu0 0.0
  %2194 = vmatpush.msra.mxu0 0.0
  %2195 = vmatpush.msra.mxu0 0.0
  %2196 = vmatpush.msra.mxu0 0.0
  %2197 = vmatpush.msra.mxu0 0.0
  %2198 = vmatpush.msra.mxu0 0.0
  %2199 = vmatpush.msra.mxu0 0.0
  %2200 = vmatpush.msra.mxu0 0.0
  %2201 = vmatpush.msra.mxu0 0.0
  %2202 = vmatpush.msra.mxu0 0.0
  %2203 = vmatpush.msra.mxu0 %v1747
  %2204 = vmatpush.msra.mxu0 %v1745
  %2205 = vmatpush.msra.mxu0 %v1742
  %2206 = vmatpush.msra.mxu0 %v1740
  %2207 = vmatmul.f32.gmra.mxu0 %v2183
  %v2208 = vpop.f32.mrf.mxu0
  %v2209 = vadd.f32 0.0, %v2208
  %2210 = vmatmul.f32.gmra.mxu0 %v2186
  %v2211 = vpop.f32.mrf.mxu0
  %v2212 = vadd.f32 0.0, %v2211
  %2213 = vmatmul.f32.gmra.mxu0 %v2189
  %v2214 = vpop.f32.mrf.mxu0
  %v2215 = vadd.f32 0.0, %v2214
  %2216 = vdwg.mxu0
  %v2217 = vadd.f32 %v2175, %v2209
  %v2218 = vadd.f32 %v2176, %v2212
  %v2219 = vadd.f32 %v2177, %v2215
  %s2220 = scalar_lea.vmem %s6, 216
  %v2221 = vld [vmem:[%s2220] sm:$0xff]
  %v2222 = vld [vmem:[%s2220 + $0x8] sm:$0xff]
  %v2223 = vld [vmem:[%s2220 + $0x10] sm:$0x3]
  %2228 = vrot.lane.b32.xlu0 %v1740, 96
  %v2229 = vpop.permute.xlu0 %2228
  %2230 = vrot.lane.b32.xlu0 %v1742, 96
  %v2231 = vpop.permute.xlu0 %2230
  %2232 = vrot.lane.b32.xlu0 %v1745, 96
  %v2233 = vpop.permute.xlu0 %2232
  %2234 = vrot.lane.b32.xlu0 %v1747, 96
  %v2235 = vpop.permute.xlu0 %2234
  %v2241 = vsel %vm1791, %v2221, 0
  %v2244 = vsel %vm1791, %v2222, 0
  %v2247 = vsel %vm1791, %v2223, 0
  %2249 = vmatpush.msra.mxu0 0.0
  %2250 = vmatpush.msra.mxu0 0.0
  %2251 = vmatpush.msra.mxu0 0.0
  %2252 = vmatpush.msra.mxu0 0.0
  %2253 = vmatpush.msra.mxu0 0.0
  %2254 = vmatpush.msra.mxu0 0.0
  %2255 = vmatpush.msra.mxu0 0.0
  %2256 = vmatpush.msra.mxu0 0.0
  %2257 = vmatpush.msra.mxu0 0.0
  %2258 = vmatpush.msra.mxu0 0.0
  %2259 = vmatpush.msra.mxu0 0.0
  %2260 = vmatpush.msra.mxu0 0.0
  %2261 = vmatpush.msra.mxu0 %v2235
  %2262 = vmatpush.msra.mxu0 %v2233
  %2263 = vmatpush.msra.mxu0 %v2231
  %2264 = vmatpush.msra.mxu0 %v2229
  %2265 = vmatmul.f32.gmra.mxu0 %v2241
  %v2266 = vpop.f32.mrf.mxu0
  %v2267 = vadd.f32 0.0, %v2266
  %2268 = vmatmul.f32.gmra.mxu0 %v2244
  %v2269 = vpop.f32.mrf.mxu0
  %v2270 = vadd.f32 0.0, %v2269
  %2271 = vmatmul.f32.gmra.mxu0 %v2247
  %v2272 = vpop.f32.mrf.mxu0
  %v2273 = vadd.f32 0.0, %v2272
  %2274 = vdwg.mxu0
  %v2275 = vadd.f32 %v2217, %v2267
  %v2276 = vadd.f32 %v2218, %v2270
  %v2277 = vadd.f32 %v2219, %v2273
  %s2278 = scalar_lea.vmem %s6, 240
  %v2279 = vld [vmem:[%s2278] sm:$0xff]
  %v2280 = vld [vmem:[%s2278 + $0x8] sm:$0xff]
  %v2281 = vld [vmem:[%s2278 + $0x10] sm:$0x3]
  %2282 = vrot.lane.b32.xlu0 %v1740, 64
  %v2283 = vpop.permute.xlu0 %2282
  %2284 = vrot.lane.b32.xlu0 %v1742, 64
  %v2285 = vpop.permute.xlu0 %2284
  %2286 = vrot.lane.b32.xlu0 %v1745, 64
  %v2287 = vpop.permute.xlu0 %2286
  %2288 = vrot.lane.b32.xlu0 %v1747, 64
  %v2289 = vpop.permute.xlu0 %2288
  %v2295 = vsel %vm1791, %v2279, 0
  %v2298 = vsel %vm1791, %v2280, 0
  %v2301 = vsel %vm1791, %v2281, 0
  %2303 = vmatpush.msra.mxu0 0.0
  %2304 = vmatpush.msra.mxu0 0.0
  %2305 = vmatpush.msra.mxu0 0.0
  %2306 = vmatpush.msra.mxu0 0.0
  %2307 = vmatpush.msra.mxu0 0.0
  %2308 = vmatpush.msra.mxu0 0.0
  %2309 = vmatpush.msra.mxu0 0.0
  %2310 = vmatpush.msra.mxu0 0.0
  %2311 = vmatpush.msra.mxu0 0.0
  %2312 = vmatpush.msra.mxu0 0.0
  %2313 = vmatpush.msra.mxu0 0.0
  %2314 = vmatpush.msra.mxu0 0.0
  %2315 = vmatpush.msra.mxu0 %v2289
  %2316 = vmatpush.msra.mxu0 %v2287
  %2317 = vmatpush.msra.mxu0 %v2285
  %2318 = vmatpush.msra.mxu0 %v2283
  %2319 = vmatmul.f32.gmra.mxu0 %v2295
  %v2320 = vpop.f32.mrf.mxu0
  %v2321 = vadd.f32 0.0, %v2320
  %2322 = vmatmul.f32.gmra.mxu0 %v2298
  %v2323 = vpop.f32.mrf.mxu0
  %v2324 = vadd.f32 0.0, %v2323
  %2325 = vmatmul.f32.gmra.mxu0 %v2301
  %v2326 = vpop.f32.mrf.mxu0
  %v2327 = vadd.f32 0.0, %v2326
  %2328 = vdwg.mxu0
  %v2329 = vadd.f32 %v2275, %v2321
  %v2330 = vadd.f32 %v2276, %v2324
  %v2331 = vadd.f32 %v2277, %v2327
  %s2332 = scalar_lea.vmem %s6, 264
  %v2333 = vld [vmem:[%s2332] sm:$0xff]
  %v2334 = vld [vmem:[%s2332 + $0x8] sm:$0xff]
  %v2335 = vld [vmem:[%s2332 + $0x10] sm:$0x3]
  %2336 = vrot.lane.b32.xlu0 %v1740, 32
  %v2337 = vpop.permute.xlu0 %2336
  %2338 = vrot.lane.b32.xlu0 %v1742, 32
  %v2339 = vpop.permute.xlu0 %2338
  %2340 = vrot.lane.b32.xlu0 %v1745, 32
  %v2341 = vpop.permute.xlu0 %2340
  %2342 = vrot.lane.b32.xlu0 %v1747, 32
  %v2343 = vpop.permute.xlu0 %2342
  %v2349 = vsel %vm1791, %v2333, 0
  %v2352 = vsel %vm1791, %v2334, 0
  %v2355 = vsel %vm1791, %v2335, 0
  %2357 = vmatpush.msra.mxu0 0.0
  %2358 = vmatpush.msra.mxu0 0.0
  %2359 = vmatpush.msra.mxu0 0.0
  %2360 = vmatpush.msra.mxu0 0.0
  %2361 = vmatpush.msra.mxu0 0.0
  %2362 = vmatpush.msra.mxu0 0.0
  %2363 = vmatpush.msra.mxu0 0.0
  %2364 = vmatpush.msra.mxu0 0.0
  %2365 = vmatpush.msra.mxu0 0.0
  %2366 = vmatpush.msra.mxu0 0.0
  %2367 = vmatpush.msra.mxu0 0.0
  %2368 = vmatpush.msra.mxu0 0.0
  %2369 = vmatpush.msra.mxu0 %v2343
  %2370 = vmatpush.msra.mxu0 %v2341
  %2371 = vmatpush.msra.mxu0 %v2339
  %2372 = vmatpush.msra.mxu0 %v2337
  %2373 = vmatmul.f32.gmra.mxu0 %v2349
  %v2374 = vpop.f32.mrf.mxu0
  %v2375 = vadd.f32 0.0, %v2374
  %2376 = vmatmul.f32.gmra.mxu0 %v2352
  %v2377 = vpop.f32.mrf.mxu0
  %v2378 = vadd.f32 0.0, %v2377
  %2379 = vmatmul.f32.gmra.mxu0 %v2355
  %v2380 = vpop.f32.mrf.mxu0
  %v2381 = vadd.f32 0.0, %v2380
  %2382 = vdwg.mxu0
  %v2383 = vadd.f32 %v2329, %v2375
  %v2384 = vadd.f32 %v2330, %v2378
  %v2385 = vadd.f32 %v2331, %v2381
  %s2386 = scalar_lea.vmem %s6, 288
  %v2387 = vld [vmem:[%s2386] sm:$0xff]
  %v2388 = vld [vmem:[%s2386 + $0x8] sm:$0xff]
  %v2389 = vld [vmem:[%s2386 + $0x10] sm:$0x3]
  %v2391 = vsel %vm1791, %v2387, 0
  %v2394 = vsel %vm1791, %v2388, 0
  %v2397 = vsel %vm1791, %v2389, 0
  %2399 = vmatpush.msra.mxu0 0.0
  %2400 = vmatpush.msra.mxu0 0.0
  %2401 = vmatpush.msra.mxu0 0.0
  %2402 = vmatpush.msra.mxu0 0.0
  %2403 = vmatpush.msra.mxu0 0.0
  %2404 = vmatpush.msra.mxu0 0.0
  %2405 = vmatpush.msra.mxu0 0.0
  %2406 = vmatpush.msra.mxu0 0.0
  %2407 = vmatpush.msra.mxu0 0.0
  %2408 = vmatpush.msra.mxu0 0.0
  %2409 = vmatpush.msra.mxu0 0.0
  %2410 = vmatpush.msra.mxu0 0.0
  %2411 = vmatpush.msra.mxu0 %v1766
  %2412 = vmatpush.msra.mxu0 %v1764
  %2413 = vmatpush.msra.mxu0 %v1761
  %2414 = vmatpush.msra.mxu0 %v1759
  %2415 = vmatmul.f32.gmra.mxu0 %v2391
  %v2416 = vpop.f32.mrf.mxu0
  %v2417 = vadd.f32 0.0, %v2416
  %2418 = vmatmul.f32.gmra.mxu0 %v2394
  %v2419 = vpop.f32.mrf.mxu0
  %v2420 = vadd.f32 0.0, %v2419
  %2421 = vmatmul.f32.gmra.mxu0 %v2397
  %v2422 = vpop.f32.mrf.mxu0
  %v2423 = vadd.f32 0.0, %v2422
  %2424 = vdwg.mxu0
  %v2425 = vadd.f32 %v2383, %v2417
  %v2426 = vadd.f32 %v2384, %v2420
  %v2427 = vadd.f32 %v2385, %v2423
  %s2428 = scalar_lea.vmem %s6, 312
  %v2429 = vld [vmem:[%s2428] sm:$0xff]
  %v2430 = vld [vmem:[%s2428 + $0x8] sm:$0xff]
  %v2431 = vld [vmem:[%s2428 + $0x10] sm:$0x3]
  %2436 = vrot.lane.b32.xlu0 %v1759, 96
  %v2437 = vpop.permute.xlu0 %2436
  %2438 = vrot.lane.b32.xlu0 %v1761, 96
  %v2439 = vpop.permute.xlu0 %2438
  %2440 = vrot.lane.b32.xlu0 %v1764, 96
  %v2441 = vpop.permute.xlu0 %2440
  %2442 = vrot.lane.b32.xlu0 %v1766, 96
  %v2443 = vpop.permute.xlu0 %2442
  %v2449 = vsel %vm1791, %v2429, 0
  %v2452 = vsel %vm1791, %v2430, 0
  %v2455 = vsel %vm1791, %v2431, 0
  %2457 = vmatpush.msra.mxu0 0.0
  %2458 = vmatpush.msra.mxu0 0.0
  %2459 = vmatpush.msra.mxu0 0.0
  %2460 = vmatpush.msra.mxu0 0.0
  %2461 = vmatpush.msra.mxu0 0.0
  %2462 = vmatpush.msra.mxu0 0.0
  %2463 = vmatpush.msra.mxu0 0.0
  %2464 = vmatpush.msra.mxu0 0.0
  %2465 = vmatpush.msra.mxu0 0.0
  %2466 = vmatpush.msra.mxu0 0.0
  %2467 = vmatpush.msra.mxu0 0.0
  %2468 = vmatpush.msra.mxu0 0.0
  %2469 = vmatpush.msra.mxu0 %v2443
  %2470 = vmatpush.msra.mxu0 %v2441
  %2471 = vmatpush.msra.mxu0 %v2439
  %2472 = vmatpush.msra.mxu0 %v2437
  %2473 = vmatmul.f32.gmra.mxu0 %v2449
  %v2474 = vpop.f32.mrf.mxu0
  %v2475 = vadd.f32 0.0, %v2474
  %2476 = vmatmul.f32.gmra.mxu0 %v2452
  %v2477 = vpop.f32.mrf.mxu0
  %v2478 = vadd.f32 0.0, %v2477
  %2479 = vmatmul.f32.gmra.mxu0 %v2455
  %v2480 = vpop.f32.mrf.mxu0
  %v2481 = vadd.f32 0.0, %v2480
  %2482 = vdwg.mxu0
  %v2483 = vadd.f32 %v2425, %v2475
  %v2484 = vadd.f32 %v2426, %v2478
  %v2485 = vadd.f32 %v2427, %v2481
  %s2486 = scalar_lea.vmem %s6, 336
  %v2487 = vld [vmem:[%s2486] sm:$0xff]
  %v2488 = vld [vmem:[%s2486 + $0x8] sm:$0xff]
  %v2489 = vld [vmem:[%s2486 + $0x10] sm:$0x3]
  %2490 = vrot.lane.b32.xlu0 %v1759, 64
  %v2491 = vpop.permute.xlu0 %2490
  %2492 = vrot.lane.b32.xlu0 %v1761, 64
  %v2493 = vpop.permute.xlu0 %2492
  %2494 = vrot.lane.b32.xlu0 %v1764, 64
  %v2495 = vpop.permute.xlu0 %2494
  %2496 = vrot.lane.b32.xlu0 %v1766, 64
  %v2497 = vpop.permute.xlu0 %2496
  %v2503 = vsel %vm1791, %v2487, 0
  %v2506 = vsel %vm1791, %v2488, 0
  %v2509 = vsel %vm1791, %v2489, 0
  %2511 = vmatpush.msra.mxu0 0.0
  %2512 = vmatpush.msra.mxu0 0.0
  %2513 = vmatpush.msra.mxu0 0.0
  %2514 = vmatpush.msra.mxu0 0.0
  %2515 = vmatpush.msra.mxu0 0.0
  %2516 = vmatpush.msra.mxu0 0.0
  %2517 = vmatpush.msra.mxu0 0.0
  %2518 = vmatpush.msra.mxu0 0.0
  %2519 = vmatpush.msra.mxu0 0.0
  %2520 = vmatpush.msra.mxu0 0.0
  %2521 = vmatpush.msra.mxu0 0.0
  %2522 = vmatpush.msra.mxu0 0.0
  %2523 = vmatpush.msra.mxu0 %v2497
  %2524 = vmatpush.msra.mxu0 %v2495
  %2525 = vmatpush.msra.mxu0 %v2493
  %2526 = vmatpush.msra.mxu0 %v2491
  %2527 = vmatmul.f32.gmra.mxu0 %v2503
  %v2528 = vpop.f32.mrf.mxu0
  %v2529 = vadd.f32 0.0, %v2528
  %2530 = vmatmul.f32.gmra.mxu0 %v2506
  %v2531 = vpop.f32.mrf.mxu0
  %v2532 = vadd.f32 0.0, %v2531
  %2533 = vmatmul.f32.gmra.mxu0 %v2509
  %v2534 = vpop.f32.mrf.mxu0
  %v2535 = vadd.f32 0.0, %v2534
  %2536 = vdwg.mxu0
  %v2537 = vadd.f32 %v2483, %v2529
  %v2538 = vadd.f32 %v2484, %v2532
  %v2539 = vadd.f32 %v2485, %v2535
  %s2540 = scalar_lea.vmem %s6, 360
  %v2541 = vld [vmem:[%s2540] sm:$0xff]
  %v2542 = vld [vmem:[%s2540 + $0x8] sm:$0xff]
  %v2543 = vld [vmem:[%s2540 + $0x10] sm:$0x3]
  %2544 = vrot.lane.b32.xlu0 %v1759, 32
  %v2545 = vpop.permute.xlu0 %2544
  %2546 = vrot.lane.b32.xlu0 %v1761, 32
  %v2547 = vpop.permute.xlu0 %2546
  %2548 = vrot.lane.b32.xlu0 %v1764, 32
  %v2549 = vpop.permute.xlu0 %2548
  %2550 = vrot.lane.b32.xlu0 %v1766, 32
  %v2551 = vpop.permute.xlu0 %2550
  %v2557 = vsel %vm1791, %v2541, 0
  %v2560 = vsel %vm1791, %v2542, 0
  %v2563 = vsel %vm1791, %v2543, 0
  %2565 = vmatpush.msra.mxu0 0.0
  %2566 = vmatpush.msra.mxu0 0.0
  %2567 = vmatpush.msra.mxu0 0.0
  %2568 = vmatpush.msra.mxu0 0.0
  %2569 = vmatpush.msra.mxu0 0.0
  %2570 = vmatpush.msra.mxu0 0.0
  %2571 = vmatpush.msra.mxu0 0.0
  %2572 = vmatpush.msra.mxu0 0.0
  %2573 = vmatpush.msra.mxu0 0.0
  %2574 = vmatpush.msra.mxu0 0.0
  %2575 = vmatpush.msra.mxu0 0.0
  %2576 = vmatpush.msra.mxu0 0.0
  %2577 = vmatpush.msra.mxu0 %v2551
  %2578 = vmatpush.msra.mxu0 %v2549
  %2579 = vmatpush.msra.mxu0 %v2547
  %2580 = vmatpush.msra.mxu0 %v2545
  %2581 = vmatmul.f32.gmra.mxu0 %v2557
  %v2582 = vpop.f32.mrf.mxu0
  %v2583 = vadd.f32 0.0, %v2582
  %2584 = vmatmul.f32.gmra.mxu0 %v2560
  %v2585 = vpop.f32.mrf.mxu0
  %v2586 = vadd.f32 0.0, %v2585
  %2587 = vmatmul.f32.gmra.mxu0 %v2563
  %v2588 = vpop.f32.mrf.mxu0
  %v2589 = vadd.f32 0.0, %v2588
  %2590 = vdwg.mxu0
  %v2591 = vadd.f32 %v2537, %v2583
  %v2592 = vadd.f32 %v2538, %v2586
  %v2593 = vadd.f32 %v2539, %v2589
  %v2594 = vld [vmem:[%s8] sm:$0x1]
  %v2596 = vperm.slane %v2594, 0
  %v2598 = vadd.f32 %v2591, %v2596
  %v2599 = vadd.f32 %v2592, %v2596
  %v2600 = vadd.f32 %v2593, %v2596
  %vm2601 = vcmp.ge.f32.partialorder %v2598, 0.0
  %vm2602 = vcmp.ge.f32.partialorder %v2599, 0.0
  %vm2603 = vcmp.ge.f32.partialorder %v2600, 0.0
  %v2604 = vmul.f32 %v2598, 0.2
  %v2605 = vmul.f32 %v2599, 0.2
  %v2606 = vmul.f32 %v2600, 0.2
  %v2607 = vsel %vm2601, %v2598, %v2604
  %v2608 = vsel %vm2602, %v2599, %v2605
  %v2609 = vsel %vm2603, %v2600, %v2606
  %v2610 = vld [vmem:[%s10] sm:$0xff]
  %v2611 = vld [vmem:[%s10 + $0x8] sm:$0xff]
  %v2612 = vld [vmem:[%s10 + $0x10] sm:$0xff]
  %v2613 = vld [vmem:[%s10 + $0x18] sm:$0xff]
  %v2614 = vpack.c.bf16 %v2608, %v2607
  %v2615 = vpack.c.bf16 %v2609, %v2609
  %v2616 = vpack.c.bf16 %v2611, %v2610
  %v2617 = vpack.c.bf16 %v2613, %v2612
  %v2619 = vsel %vm1791, %v2614, 0
  %v2622 = vsel %vm1791, %v2615, 0
  %2624 = vmatpush.bf16.msra.mxu0 0
  %2625 = vmatpush.bf16.msra.mxu0 0
  %2626 = vmatpush.bf16.msra.mxu0 0
  %2627 = vmatpush.bf16.msra.mxu0 0
  %2628 = vmatpush.bf16.msra.mxu0 0
  %2629 = vmatpush.bf16.msra.mxu0 0
  %2630 = vmatpush.bf16.msra.mxu0 %v2617
  %2631 = vmatpush.bf16.msra.mxu0 %v2616
  %2632 = vmatmul.bf16.gmra.mxu0 %v2619
  %v2633 = vpop.f32.mrf.mxu0
  %v2634 = vadd.f32 0.0, %v2633
  %v2635 = vpop.f32.mrf.mxu0
  %v2636 = vadd.f32 0.0, %v2635
  %2637 = vmatmul.bf16.gmra.mxu0 %v2622
  %v2638 = vpop.f32.mrf.mxu0
  %v2639 = vadd.f32 0.0, %v2638
  %v2640 = vpop.f32.mrf.mxu0
  %2641 = vdwg.mxu0
  %v2642 = vld [vmem:[%s9] sm:$0xff]
  %s2643 = scalar_lea.vmem %s9, 8
  %v2644 = vld [vmem:[%s2643] sm:$0xff]
  %2648 = vrot.lane.b32.xlu0 %v2634, 127
  %v2649 = vpop.permute.xlu0 %2648
  %2650 = vrot.lane.b32.xlu0 %v2636, 127
  %v2651 = vpop.permute.xlu0 %2650
  %2652 = vrot.lane.b32.xlu0 %v2639, 127
  %v2653 = vpop.permute.xlu0 %2652
  %vm2656 = vcmask 146432
  %v2658 = vsel %vm2656, %v2644, 0
  %vm2660 = vcmask 1041408
  %v2661 = vsel %vm2660, %v2653, 0
  %2663 = vmatpush.msra.mxu0 0.0
  %2664 = vmatpush.msra.mxu0 0.0
  %2665 = vmatpush.msra.mxu0 0.0
  %2666 = vmatpush.msra.mxu0 0.0
  %2667 = vmatpush.msra.mxu0 0.0
  %2668 = vmatpush.msra.mxu0 0.0
  %2669 = vmatpush.msra.mxu0 0.0
  %2670 = vmatpush.msra.mxu0 0.0
  %2671 = vmatpush.msra.mxu0 0.0
  %2672 = vmatpush.msra.mxu0 0.0
  %2673 = vmatpush.msra.mxu0 0.0
  %2674 = vmatpush.msra.mxu0 0.0
  %2675 = vmatpush.msra.mxu0 0.0
  %2676 = vmatpush.msra.mxu0 %v2661
  %2677 = vmatpush.msra.mxu0 %v2651
  %2678 = vmatpush.msra.mxu0 %v2649
  %2679 = vmatmul.f32.gmra.mxu0 %v2658
  %v2680 = vpop.f32.mrf.mxu0
  %v2681 = vadd.f32 0.0, %v2680
  %2682 = vdwg.mxu0
  %v2684 = vsel %vm2656, %v2642, 0
  %v2686 = vsel %vm2660, %v2639, 0
  %2688 = vmatpush.msra.mxu0 0.0
  %2689 = vmatpush.msra.mxu0 0.0
  %2690 = vmatpush.msra.mxu0 0.0
  %2691 = vmatpush.msra.mxu0 0.0
  %2692 = vmatpush.msra.mxu0 0.0
  %2693 = vmatpush.msra.mxu0 0.0
  %2694 = vmatpush.msra.mxu0 0.0
  %2695 = vmatpush.msra.mxu0 0.0
  %2696 = vmatpush.msra.mxu0 0.0
  %2697 = vmatpush.msra.mxu0 0.0
  %2698 = vmatpush.msra.mxu0 0.0
  %2699 = vmatpush.msra.mxu0 0.0
  %2700 = vmatpush.msra.mxu0 0.0
  %2701 = vmatpush.msra.mxu0 %v2686
  %2702 = vmatpush.msra.mxu0 %v2636
  %2703 = vmatpush.msra.mxu0 %v2634
  %2704 = vmatmul.f32.gmra.mxu0 %v2684
  %v2705 = vpop.f32.mrf.mxu0
  %v2706 = vadd.f32 %v2681, %v2705
  %2707 = vdwg.mxu0
  %s2708 = scalar_lea.vmem %s9, 16
  %v2709 = vld [vmem:[%s2708] sm:$0xff]
  %2710 = vrot.lane.b32.xlu0 %v2634, 126
  %v2711 = vpop.permute.xlu0 %2710
  %2712 = vrot.lane.b32.xlu0 %v2636, 126
  %v2713 = vpop.permute.xlu0 %2712
  %2714 = vrot.lane.b32.xlu0 %v2639, 126
  %v2715 = vpop.permute.xlu0 %2714
  %v2719 = vsel %vm2656, %v2709, 0
  %v2721 = vsel %vm2660, %v2715, 0
  %2723 = vmatpush.msra.mxu0 0.0
  %2724 = vmatpush.msra.mxu0 0.0
  %2725 = vmatpush.msra.mxu0 0.0
  %2726 = vmatpush.msra.mxu0 0.0
  %2727 = vmatpush.msra.mxu0 0.0
  %2728 = vmatpush.msra.mxu0 0.0
  %2729 = vmatpush.msra.mxu0 0.0
  %2730 = vmatpush.msra.mxu0 0.0
  %2731 = vmatpush.msra.mxu0 0.0
  %2732 = vmatpush.msra.mxu0 0.0
  %2733 = vmatpush.msra.mxu0 0.0
  %2734 = vmatpush.msra.mxu0 0.0
  %2735 = vmatpush.msra.mxu0 0.0
  %2736 = vmatpush.msra.mxu0 %v2721
  %2737 = vmatpush.msra.mxu0 %v2713
  %2738 = vmatpush.msra.mxu0 %v2711
  %2739 = vmatmul.f32.gmra.mxu0 %v2719
  %v2740 = vpop.f32.mrf.mxu0
  %v2741 = vadd.f32 0.0, %v2740
  %2742 = vdwg.mxu0
  %v2743 = vadd.f32 %v2706, %v2741
  %s2744 = scalar_lea.vmem %s9, 24
  %v2745 = vld [vmem:[%s2744] sm:$0xff]
  %2746 = vrot.lane.b32.xlu0 %v2634, 125
  %v2747 = vpop.permute.xlu0 %2746
  %2748 = vrot.lane.b32.xlu0 %v2636, 125
  %v2749 = vpop.permute.xlu0 %2748
  %2750 = vrot.lane.b32.xlu0 %v2639, 125
  %v2751 = vpop.permute.xlu0 %2750
  %v2755 = vsel %vm2656, %v2745, 0
  %v2757 = vsel %vm2660, %v2751, 0
  %2759 = vmatpush.msra.mxu0 0.0
  %2760 = vmatpush.msra.mxu0 0.0
  %2761 = vmatpush.msra.mxu0 0.0
  %2762 = vmatpush.msra.mxu0 0.0
  %2763 = vmatpush.msra.mxu0 0.0
  %2764 = vmatpush.msra.mxu0 0.0
  %2765 = vmatpush.msra.mxu0 0.0
  %2766 = vmatpush.msra.mxu0 0.0
  %2767 = vmatpush.msra.mxu0 0.0
  %2768 = vmatpush.msra.mxu0 0.0
  %2769 = vmatpush.msra.mxu0 0.0
  %2770 = vmatpush.msra.mxu0 0.0
  %2771 = vmatpush.msra.mxu0 0.0
  %2772 = vmatpush.msra.mxu0 %v2757
  %2773 = vmatpush.msra.mxu0 %v2749
  %2774 = vmatpush.msra.mxu0 %v2747
  %2775 = vmatmul.f32.gmra.mxu0 %v2755
  %v2776 = vpop.f32.mrf.mxu0
  %v2777 = vadd.f32 0.0, %v2776
  %2778 = vdwg.mxu0
  %v2779 = vadd.f32 %v2743, %v2777
  %s2780 = scalar_lea.vmem %s9, 32
  %v2781 = vld [vmem:[%s2780] sm:$0xff]
  %2782 = vrot.lane.b32.xlu0 %v2634, 124
  %v2783 = vpop.permute.xlu0 %2782
  %2784 = vrot.lane.b32.xlu0 %v2636, 124
  %v2785 = vpop.permute.xlu0 %2784
  %2786 = vrot.lane.b32.xlu0 %v2639, 124
  %v2787 = vpop.permute.xlu0 %2786
  %v2791 = vsel %vm2656, %v2781, 0
  %v2793 = vsel %vm2660, %v2787, 0
  %2795 = vmatpush.msra.mxu0 0.0
  %2796 = vmatpush.msra.mxu0 0.0
  %2797 = vmatpush.msra.mxu0 0.0
  %2798 = vmatpush.msra.mxu0 0.0
  %2799 = vmatpush.msra.mxu0 0.0
  %2800 = vmatpush.msra.mxu0 0.0
  %2801 = vmatpush.msra.mxu0 0.0
  %2802 = vmatpush.msra.mxu0 0.0
  %2803 = vmatpush.msra.mxu0 0.0
  %2804 = vmatpush.msra.mxu0 0.0
  %2805 = vmatpush.msra.mxu0 0.0
  %2806 = vmatpush.msra.mxu0 0.0
  %2807 = vmatpush.msra.mxu0 0.0
  %2808 = vmatpush.msra.mxu0 %v2793
  %2809 = vmatpush.msra.mxu0 %v2785
  %2810 = vmatpush.msra.mxu0 %v2783
  %2811 = vmatmul.f32.gmra.mxu0 %v2791
  %v2812 = vpop.f32.mrf.mxu0
  %v2813 = vadd.f32 0.0, %v2812
  %2814 = vdwg.mxu0
  %v2815 = vadd.f32 %v2779, %v2813
  %s2816 = scalar_lea.vmem %s9, 40
  %v2817 = vld [vmem:[%s2816] sm:$0xff]
  %2818 = vrot.lane.b32.xlu0 %v2634, 123
  %v2819 = vpop.permute.xlu0 %2818
  %2820 = vrot.lane.b32.xlu0 %v2636, 123
  %v2821 = vpop.permute.xlu0 %2820
  %2822 = vrot.lane.b32.xlu0 %v2639, 123
  %v2823 = vpop.permute.xlu0 %2822
  %v2827 = vsel %vm2656, %v2817, 0
  %v2829 = vsel %vm2660, %v2823, 0
  %2831 = vmatpush.msra.mxu0 0.0
  %2832 = vmatpush.msra.mxu0 0.0
  %2833 = vmatpush.msra.mxu0 0.0
  %2834 = vmatpush.msra.mxu0 0.0
  %2835 = vmatpush.msra.mxu0 0.0
  %2836 = vmatpush.msra.mxu0 0.0
  %2837 = vmatpush.msra.mxu0 0.0
  %2838 = vmatpush.msra.mxu0 0.0
  %2839 = vmatpush.msra.mxu0 0.0
  %2840 = vmatpush.msra.mxu0 0.0
  %2841 = vmatpush.msra.mxu0 0.0
  %2842 = vmatpush.msra.mxu0 0.0
  %2843 = vmatpush.msra.mxu0 0.0
  %2844 = vmatpush.msra.mxu0 %v2829
  %2845 = vmatpush.msra.mxu0 %v2821
  %2846 = vmatpush.msra.mxu0 %v2819
  %2847 = vmatmul.f32.gmra.mxu0 %v2827
  %v2848 = vpop.f32.mrf.mxu0
  %v2849 = vadd.f32 0.0, %v2848
  %2850 = vdwg.mxu0
  %v2851 = vadd.f32 %v2815, %v2849
  %s2852 = scalar_lea.vmem %s9, 48
  %v2853 = vld [vmem:[%s2852] sm:$0xff]
  %2854 = vrot.lane.b32.xlu0 %v2634, 122
  %v2855 = vpop.permute.xlu0 %2854
  %2856 = vrot.lane.b32.xlu0 %v2636, 122
  %v2857 = vpop.permute.xlu0 %2856
  %2858 = vrot.lane.b32.xlu0 %v2639, 122
  %v2859 = vpop.permute.xlu0 %2858
  %v2863 = vsel %vm2656, %v2853, 0
  %v2865 = vsel %vm2660, %v2859, 0
  %2867 = vmatpush.msra.mxu0 0.0
  %2868 = vmatpush.msra.mxu0 0.0
  %2869 = vmatpush.msra.mxu0 0.0
  %2870 = vmatpush.msra.mxu0 0.0
  %2871 = vmatpush.msra.mxu0 0.0
  %2872 = vmatpush.msra.mxu0 0.0
  %2873 = vmatpush.msra.mxu0 0.0
  %2874 = vmatpush.msra.mxu0 0.0
  %2875 = vmatpush.msra.mxu0 0.0
  %2876 = vmatpush.msra.mxu0 0.0
  %2877 = vmatpush.msra.mxu0 0.0
  %2878 = vmatpush.msra.mxu0 0.0
  %2879 = vmatpush.msra.mxu0 0.0
  %2880 = vmatpush.msra.mxu0 %v2865
  %2881 = vmatpush.msra.mxu0 %v2857
  %2882 = vmatpush.msra.mxu0 %v2855
  %2883 = vmatmul.f32.gmra.mxu0 %v2863
  %v2884 = vpop.f32.mrf.mxu0
  %v2885 = vadd.f32 0.0, %v2884
  %2886 = vdwg.mxu0
  %v2887 = vadd.f32 %v2851, %v2885
  %s2888 = scalar_lea.vmem %s9, 56
  %v2889 = vld [vmem:[%s2888] sm:$0xff]
  %2890 = vrot.lane.b32.xlu0 %v2634, 121
  %v2891 = vpop.permute.xlu0 %2890
  %2892 = vrot.lane.b32.xlu0 %v2636, 121
  %v2893 = vpop.permute.xlu0 %2892
  %2894 = vrot.lane.b32.xlu0 %v2639, 121
  %v2895 = vpop.permute.xlu0 %2894
  %v2899 = vsel %vm2656, %v2889, 0
  %v2901 = vsel %vm2660, %v2895, 0
  %2903 = vmatpush.msra.mxu0 0.0
  %2904 = vmatpush.msra.mxu0 0.0
  %2905 = vmatpush.msra.mxu0 0.0
  %2906 = vmatpush.msra.mxu0 0.0
  %2907 = vmatpush.msra.mxu0 0.0
  %2908 = vmatpush.msra.mxu0 0.0
  %2909 = vmatpush.msra.mxu0 0.0
  %2910 = vmatpush.msra.mxu0 0.0
  %2911 = vmatpush.msra.mxu0 0.0
  %2912 = vmatpush.msra.mxu0 0.0
  %2913 = vmatpush.msra.mxu0 0.0
  %2914 = vmatpush.msra.mxu0 0.0
  %2915 = vmatpush.msra.mxu0 0.0
  %2916 = vmatpush.msra.mxu0 %v2901
  %2917 = vmatpush.msra.mxu0 %v2893
  %2918 = vmatpush.msra.mxu0 %v2891
  %2919 = vmatmul.f32.gmra.mxu0 %v2899
  %v2920 = vpop.f32.mrf.mxu0
  %v2921 = vadd.f32 0.0, %v2920
  %2922 = vdwg.mxu0
  %v2923 = vadd.f32 %v2887, %v2921
  %s2924 = scalar_lea.vmem %s9, 64
  %v2925 = vld [vmem:[%s2924] sm:$0xff]
  %2926 = vrot.lane.b32.xlu0 %v2634, 120
  %v2927 = vpop.permute.xlu0 %2926
  %2928 = vrot.lane.b32.xlu0 %v2636, 120
  %v2929 = vpop.permute.xlu0 %2928
  %2930 = vrot.lane.b32.xlu0 %v2639, 120
  %v2931 = vpop.permute.xlu0 %2930
  %v2935 = vsel %vm2656, %v2925, 0
  %v2937 = vsel %vm2660, %v2931, 0
  %2939 = vmatpush.msra.mxu0 0.0
  %2940 = vmatpush.msra.mxu0 0.0
  %2941 = vmatpush.msra.mxu0 0.0
  %2942 = vmatpush.msra.mxu0 0.0
  %2943 = vmatpush.msra.mxu0 0.0
  %2944 = vmatpush.msra.mxu0 0.0
  %2945 = vmatpush.msra.mxu0 0.0
  %2946 = vmatpush.msra.mxu0 0.0
  %2947 = vmatpush.msra.mxu0 0.0
  %2948 = vmatpush.msra.mxu0 0.0
  %2949 = vmatpush.msra.mxu0 0.0
  %2950 = vmatpush.msra.mxu0 0.0
  %2951 = vmatpush.msra.mxu0 0.0
  %2952 = vmatpush.msra.mxu0 %v2937
  %2953 = vmatpush.msra.mxu0 %v2929
  %2954 = vmatpush.msra.mxu0 %v2927
  %2955 = vmatmul.f32.gmra.mxu0 %v2935
  %v2956 = vpop.f32.mrf.mxu0
  %v2957 = vadd.f32 0.0, %v2956
  %2958 = vdwg.mxu0
  %v2959 = vadd.f32 %v2923, %v2957
  %s2960 = scalar_lea.vmem %s9, 72
  %v2961 = vld [vmem:[%s2960] sm:$0xff]
  %2962 = vrot.lane.b32.xlu0 %v2634, 119
  %v2963 = vpop.permute.xlu0 %2962
  %2964 = vrot.lane.b32.xlu0 %v2636, 119
  %v2965 = vpop.permute.xlu0 %2964
  %2966 = vrot.lane.b32.xlu0 %v2639, 119
  %v2967 = vpop.permute.xlu0 %2966
  %v2971 = vsel %vm2656, %v2961, 0
  %v2973 = vsel %vm2660, %v2967, 0
  %2975 = vmatpush.msra.mxu0 0.0
  %2976 = vmatpush.msra.mxu0 0.0
  %2977 = vmatpush.msra.mxu0 0.0
  %2978 = vmatpush.msra.mxu0 0.0
  %2979 = vmatpush.msra.mxu0 0.0
  %2980 = vmatpush.msra.mxu0 0.0
  %2981 = vmatpush.msra.mxu0 0.0
  %2982 = vmatpush.msra.mxu0 0.0
  %2983 = vmatpush.msra.mxu0 0.0
  %2984 = vmatpush.msra.mxu0 0.0
  %2985 = vmatpush.msra.mxu0 0.0
  %2986 = vmatpush.msra.mxu0 0.0
  %2987 = vmatpush.msra.mxu0 0.0
  %2988 = vmatpush.msra.mxu0 %v2973
  %2989 = vmatpush.msra.mxu0 %v2965
  %2990 = vmatpush.msra.mxu0 %v2963
  %2991 = vmatmul.f32.gmra.mxu0 %v2971
  %v2992 = vpop.f32.mrf.mxu0
  %v2993 = vadd.f32 0.0, %v2992
  %2994 = vdwg.mxu0
  %v2995 = vadd.f32 %v2959, %v2993
  %s2996 = scalar_lea.vmem %s9, 80
  %v2997 = vld [vmem:[%s2996] sm:$0xff]
  %2998 = vrot.lane.b32.xlu0 %v2634, 118
  %v2999 = vpop.permute.xlu0 %2998
  %3000 = vrot.lane.b32.xlu0 %v2636, 118
  %v3001 = vpop.permute.xlu0 %3000
  %3002 = vrot.lane.b32.xlu0 %v2639, 118
  %v3003 = vpop.permute.xlu0 %3002
  %v3007 = vsel %vm2656, %v2997, 0
  %v3009 = vsel %vm2660, %v3003, 0
  %3011 = vmatpush.msra.mxu0 0.0
  %3012 = vmatpush.msra.mxu0 0.0
  %3013 = vmatpush.msra.mxu0 0.0
  %3014 = vmatpush.msra.mxu0 0.0
  %3015 = vmatpush.msra.mxu0 0.0
  %3016 = vmatpush.msra.mxu0 0.0
  %3017 = vmatpush.msra.mxu0 0.0
  %3018 = vmatpush.msra.mxu0 0.0
  %3019 = vmatpush.msra.mxu0 0.0
  %3020 = vmatpush.msra.mxu0 0.0
  %3021 = vmatpush.msra.mxu0 0.0
  %3022 = vmatpush.msra.mxu0 0.0
  %3023 = vmatpush.msra.mxu0 0.0
  %3024 = vmatpush.msra.mxu0 %v3009
  %3025 = vmatpush.msra.mxu0 %v3001
  %3026 = vmatpush.msra.mxu0 %v2999
  %3027 = vmatmul.f32.gmra.mxu0 %v3007
  %v3028 = vpop.f32.mrf.mxu0
  %v3029 = vadd.f32 0.0, %v3028
  %3030 = vdwg.mxu0
  %v3031 = vadd.f32 %v2995, %v3029
  %s3032 = scalar_lea.vmem %s9, 88
  %v3033 = vld [vmem:[%s3032] sm:$0xff]
  %3034 = vrot.lane.b32.xlu0 %v2634, 117
  %v3035 = vpop.permute.xlu0 %3034
  %3036 = vrot.lane.b32.xlu0 %v2636, 117
  %v3037 = vpop.permute.xlu0 %3036
  %3038 = vrot.lane.b32.xlu0 %v2639, 117
  %v3039 = vpop.permute.xlu0 %3038
  %v3043 = vsel %vm2656, %v3033, 0
  %v3045 = vsel %vm2660, %v3039, 0
  %3047 = vmatpush.msra.mxu0 0.0
  %3048 = vmatpush.msra.mxu0 0.0
  %3049 = vmatpush.msra.mxu0 0.0
  %3050 = vmatpush.msra.mxu0 0.0
  %3051 = vmatpush.msra.mxu0 0.0
  %3052 = vmatpush.msra.mxu0 0.0
  %3053 = vmatpush.msra.mxu0 0.0
  %3054 = vmatpush.msra.mxu0 0.0
  %3055 = vmatpush.msra.mxu0 0.0
  %3056 = vmatpush.msra.mxu0 0.0
  %3057 = vmatpush.msra.mxu0 0.0
  %3058 = vmatpush.msra.mxu0 0.0
  %3059 = vmatpush.msra.mxu0 0.0
  %3060 = vmatpush.msra.mxu0 %v3045
  %3061 = vmatpush.msra.mxu0 %v3037
  %3062 = vmatpush.msra.mxu0 %v3035
  %3063 = vmatmul.f32.gmra.mxu0 %v3043
  %v3064 = vpop.f32.mrf.mxu0
  %v3065 = vadd.f32 0.0, %v3064
  %3066 = vdwg.mxu0
  %v3067 = vadd.f32 %v3031, %v3065
  %s3068 = scalar_lea.vmem %s9, 96
  %v3069 = vld [vmem:[%s3068] sm:$0xff]
  %3070 = vrot.lane.b32.xlu0 %v2634, 116
  %v3071 = vpop.permute.xlu0 %3070
  %3072 = vrot.lane.b32.xlu0 %v2636, 116
  %v3073 = vpop.permute.xlu0 %3072
  %3074 = vrot.lane.b32.xlu0 %v2639, 116
  %v3075 = vpop.permute.xlu0 %3074
  %v3079 = vsel %vm2656, %v3069, 0
  %v3081 = vsel %vm2660, %v3075, 0
  %3083 = vmatpush.msra.mxu0 0.0
  %3084 = vmatpush.msra.mxu0 0.0
  %3085 = vmatpush.msra.mxu0 0.0
  %3086 = vmatpush.msra.mxu0 0.0
  %3087 = vmatpush.msra.mxu0 0.0
  %3088 = vmatpush.msra.mxu0 0.0
  %3089 = vmatpush.msra.mxu0 0.0
  %3090 = vmatpush.msra.mxu0 0.0
  %3091 = vmatpush.msra.mxu0 0.0
  %3092 = vmatpush.msra.mxu0 0.0
  %3093 = vmatpush.msra.mxu0 0.0
  %3094 = vmatpush.msra.mxu0 0.0
  %3095 = vmatpush.msra.mxu0 0.0
  %3096 = vmatpush.msra.mxu0 %v3081
  %3097 = vmatpush.msra.mxu0 %v3073
  %3098 = vmatpush.msra.mxu0 %v3071
  %3099 = vmatmul.f32.gmra.mxu0 %v3079
  %v3100 = vpop.f32.mrf.mxu0
  %v3101 = vadd.f32 0.0, %v3100
  %3102 = vdwg.mxu0
  %v3103 = vadd.f32 %v3067, %v3101
  %s3104 = scalar_lea.vmem %s9, 104
  %v3105 = vld [vmem:[%s3104] sm:$0xff]
  %3106 = vrot.lane.b32.xlu0 %v2634, 115
  %v3107 = vpop.permute.xlu0 %3106
  %3108 = vrot.lane.b32.xlu0 %v2636, 115
  %v3109 = vpop.permute.xlu0 %3108
  %3110 = vrot.lane.b32.xlu0 %v2639, 115
  %v3111 = vpop.permute.xlu0 %3110
  %v3115 = vsel %vm2656, %v3105, 0
  %v3117 = vsel %vm2660, %v3111, 0
  %3119 = vmatpush.msra.mxu0 0.0
  %3120 = vmatpush.msra.mxu0 0.0
  %3121 = vmatpush.msra.mxu0 0.0
  %3122 = vmatpush.msra.mxu0 0.0
  %3123 = vmatpush.msra.mxu0 0.0
  %3124 = vmatpush.msra.mxu0 0.0
  %3125 = vmatpush.msra.mxu0 0.0
  %3126 = vmatpush.msra.mxu0 0.0
  %3127 = vmatpush.msra.mxu0 0.0
  %3128 = vmatpush.msra.mxu0 0.0
  %3129 = vmatpush.msra.mxu0 0.0
  %3130 = vmatpush.msra.mxu0 0.0
  %3131 = vmatpush.msra.mxu0 0.0
  %3132 = vmatpush.msra.mxu0 %v3117
  %3133 = vmatpush.msra.mxu0 %v3109
  %3134 = vmatpush.msra.mxu0 %v3107
  %3135 = vmatmul.f32.gmra.mxu0 %v3115
  %v3136 = vpop.f32.mrf.mxu0
  %v3137 = vadd.f32 0.0, %v3136
  %3138 = vdwg.mxu0
  %v3139 = vadd.f32 %v3103, %v3137
  %s3140 = scalar_lea.vmem %s9, 112
  %v3141 = vld [vmem:[%s3140] sm:$0xff]
  %3142 = vrot.lane.b32.xlu0 %v2634, 114
  %v3143 = vpop.permute.xlu0 %3142
  %3144 = vrot.lane.b32.xlu0 %v2636, 114
  %v3145 = vpop.permute.xlu0 %3144
  %3146 = vrot.lane.b32.xlu0 %v2639, 114
  %v3147 = vpop.permute.xlu0 %3146
  %v3151 = vsel %vm2656, %v3141, 0
  %v3153 = vsel %vm2660, %v3147, 0
  %3155 = vmatpush.msra.mxu0 0.0
  %3156 = vmatpush.msra.mxu0 0.0
  %3157 = vmatpush.msra.mxu0 0.0
  %3158 = vmatpush.msra.mxu0 0.0
  %3159 = vmatpush.msra.mxu0 0.0
  %3160 = vmatpush.msra.mxu0 0.0
  %3161 = vmatpush.msra.mxu0 0.0
  %3162 = vmatpush.msra.mxu0 0.0
  %3163 = vmatpush.msra.mxu0 0.0
  %3164 = vmatpush.msra.mxu0 0.0
  %3165 = vmatpush.msra.mxu0 0.0
  %3166 = vmatpush.msra.mxu0 0.0
  %3167 = vmatpush.msra.mxu0 0.0
  %3168 = vmatpush.msra.mxu0 %v3153
  %3169 = vmatpush.msra.mxu0 %v3145
  %3170 = vmatpush.msra.mxu0 %v3143
  %3171 = vmatmul.f32.gmra.mxu0 %v3151
  %v3172 = vpop.f32.mrf.mxu0
  %v3173 = vadd.f32 0.0, %v3172
  %3174 = vdwg.mxu0
  %v3175 = vadd.f32 %v3139, %v3173
  %s3176 = scalar_lea.vmem %s9, 120
  %v3177 = vld [vmem:[%s3176] sm:$0xff]
  %3178 = vrot.lane.b32.xlu0 %v2634, 113
  %v3179 = vpop.permute.xlu0 %3178
  %3180 = vrot.lane.b32.xlu0 %v2636, 113
  %v3181 = vpop.permute.xlu0 %3180
  %3182 = vrot.lane.b32.xlu0 %v2639, 113
  %v3183 = vpop.permute.xlu0 %3182
  %v3187 = vsel %vm2656, %v3177, 0
  %v3189 = vsel %vm2660, %v3183, 0
  %3191 = vmatpush.msra.mxu0 0.0
  %3192 = vmatpush.msra.mxu0 0.0
  %3193 = vmatpush.msra.mxu0 0.0
  %3194 = vmatpush.msra.mxu0 0.0
  %3195 = vmatpush.msra.mxu0 0.0
  %3196 = vmatpush.msra.mxu0 0.0
  %3197 = vmatpush.msra.mxu0 0.0
  %3198 = vmatpush.msra.mxu0 0.0
  %3199 = vmatpush.msra.mxu0 0.0
  %3200 = vmatpush.msra.mxu0 0.0
  %3201 = vmatpush.msra.mxu0 0.0
  %3202 = vmatpush.msra.mxu0 0.0
  %3203 = vmatpush.msra.mxu0 0.0
  %3204 = vmatpush.msra.mxu0 %v3189
  %3205 = vmatpush.msra.mxu0 %v3181
  %3206 = vmatpush.msra.mxu0 %v3179
  %3207 = vmatmul.f32.gmra.mxu0 %v3187
  %v3208 = vpop.f32.mrf.mxu0
  %v3209 = vadd.f32 0.0, %v3208
  %3210 = vdwg.mxu0
  %v3211 = vadd.f32 %v3175, %v3209
  %v3212 = vld [vmem:[#allocation2] sm:$0x1]
  %v3214 = vperm.slane %v3212, 0
  %v3216 = vadd.f32 %v3211, %v3214
  %vm3217 = vcmask 7168
  %3218 = vst.msk [vmem:[%s12] sm:$0xff] %vm3217, %v3216
  // Predicated region
  $region50: #{wrapped_model_forward.1} parent=0 // pred_check
    _
  $region51: #{wrapped_model_forward.1} parent=0 // pred_check_branch
    %3220 = sbr.rel (0) target = $region53
  $region52: #{wrapped_model_forward.1} parent=0 // pred_region
    _
  $region53: #{wrapped_model_forward.1} parent=0 // pred_fallthru
    _
  // Predicated region
  $region54: #{wrapped_model_forward.1} parent=0 // pred_check
    _
  $region55: #{wrapped_model_forward.1} parent=0 // pred_check_branch
    %3222 = sbr.rel (0) target = $region57
  $region56: #{wrapped_model_forward.1} parent=0 // pred_region
    _
  $region57: #{wrapped_model_forward.1} parent=0 // pred_fallthru
    _

</llo_original>
